<compile_context>
chip_gen: v7x
topology: tpu7x:2x2x1
jax: 0.10.0
libtpu: 0.0.40
codegen_flags: <defaults>
</compile_context>

<pallas_src>
import numpy as np
import jax
import jax.numpy as jnp
from jax import lax
from jax.experimental import pallas as pl
from jax.experimental.pallas import tpu as pltpu


# ---------------------------------------------------------------------------
# Pallas kernel: full forward pass for one batch tile.
# ---------------------------------------------------------------------------
def cnn_kernel(xs_ref, w1p_ref, b1p_ref, w2_ref, b2p_ref, wf_ref, bf_ref, out_ref):
    f32, bf16 = jnp.float32, jnp.bfloat16
    bt = out_ref.shape[0]                                # batch tile (static)

    def mm(a, w):                                        # 2-D MXU matmul, f32 accumulate
        return jnp.dot(a, w, preferred_element_type=f32)

    # --- conv1 (5x5, 1->16): taps + H-row pairs fused into one K=168 matmul ------------
    # xs rows: 16 per image (12 valid + 4 zero-pad).  Output lanes:
    # [H-parity(2)=384][W-parity(2)=192][wp(12)][c(16)] -> both pool halves lane-aligned.
    a1 = mm(xs_ref[...], w1p_ref[...])                   # (16*bt, 768) f32, no bias yet

    # --- maxpool1 2x2 + bias + relu (pool first: max(relu(x+b)) == relu(max(x)+b)) ------
    th1 = jnp.maximum(a1[:, 0:384], a1[:, 384:768])      # pool-H via lane halves (16*bt, 384)
    p1 = jnp.maximum(th1[:, 0:192], th1[:, 192:384])     # pool-W via lane halves (16*bt, 192)
    p1 = jnp.maximum(p1 + b1p_ref[...], 0.0).astype(bf16)
    # NOTE: rows 12..15 of each image hold relu(b1) garbage from the zero-pad xs rows;
    # they are never read below (conv2 taps only touch rows ki..ki+7 <= 11).
    p1 = p1.reshape(bt, 16, 192)

    # --- conv2 (5x5, 16->32): 5 banded taps over pooled H; lanes [W-par(2)][wq(4)][o(32)]
    acc2 = mm(p1[:, 0:8, :].reshape(bt * 8, 192), w2_ref[0])
    for ki in range(1, 5):
        acc2 = acc2 + mm(p1[:, ki:ki + 8, :].reshape(bt * 8, 192), w2_ref[ki])

    # --- maxpool2 2x2 + bias + relu + fc1 (512 -> 10, padded to 128 output lanes) -------
    h2 = jnp.maximum(acc2[:, 0:128], acc2[:, 128:256])   # pool-W via lane halves (8*bt, 128)
    h2 = h2.reshape(bt, 8, 128)
    acc = None
    for h in range(4):
        r = jnp.maximum(h2[:, 2 * h, :], h2[:, 2 * h + 1, :])       # pool-H row pair
        m = jnp.maximum(r + b2p_ref[...], 0.0).astype(bf16)         # bias + relu, (bt, 128)
        t = mm(m, wf_ref[h])
        acc = t if acc is None else acc + t
    out_ref[...] = acc + bf_ref[...]                     # (bt, 128) f32, lane-dense store


# ---------------------------------------------------------------------------
# Weight re-arrangement (numpy glue, done once).
# ---------------------------------------------------------------------------
def build_kernel_params(W1, b1, W2, b2, Wfc, bfc):
    W1 = np.asarray(W1, np.float32); b1 = np.asarray(b1, np.float32)
    W2 = np.asarray(W2, np.float32); b2 = np.asarray(b2, np.float32)
    Wfc = np.asarray(Wfc, np.float32); bfc = np.asarray(bfc, np.float32)

    # conv1 fused-tap / H-pair weight, output lanes [H-par(2)][W-par(2)][wp(12)][c(16)]:
    # even/odd conv rows in lane halves -> pool1-H is a lane-half max; W-parity split ->
    # pool1-W is a lane-half max and the result is already compact for conv2.
    W1p = np.zeros((168, 768), np.float32)
    for wo in range(24):
        wp, w_par = wo // 2, wo % 2
        lane0 = w_par * 192 + wp * 16
        for kj in range(5):
            wi = wo + kj
            for ki in range(5):
                W1p[ki * 28 + wi, lane0:lane0 + 16] = W1[:, 0, ki, kj]                   # even row
                W1p[(ki + 1) * 28 + wi, 384 + lane0:384 + lane0 + 16] = W1[:, 0, ki, kj]  # odd row
    b1p = np.tile(b1, 12)[None, :]                         # (1, 192): bias added after pooling

    # conv2 banded tap weights, output lanes [W-par(2)][wq(4)][o(32)]: (5, 192, 256)
    W2b = np.zeros((5, 192, 256), np.float32)
    for ki in range(5):
        for x2 in range(8):
            wq, w_par = x2 // 2, x2 % 2
            col = w_par * 128 + wq * 32
            for kj in range(5):
                wp = x2 + kj
                W2b[ki, wp * 16:(wp + 1) * 16, col:col + 32] = W2[:, :, ki, kj].T
    b2p = np.tile(b2, 4)[None, :]                          # (1, 128): bias added after pooling

    # fc weights per pooled-H row, reading the compact [wq(4)][o(32)] pool2 layout,
    # PyTorch (c,h,w) flatten order folded in, output padded 10 -> 128 lanes.
    F = np.zeros((4, 128, 128), np.float32)
    for h in range(4):
        for w in range(4):
            for c in range(32):
                F[h, w * 32 + c, :10] = Wfc[:, c * 16 + h * 4 + w]
    bf = np.zeros((1, 128), np.float32)
    bf[0, :10] = bfc

    return dict(w1p=W1p, b1p=b1p, w2b=W2b, b2p=b2p, wf=F, bf=bf)


# ---------------------------------------------------------------------------
# Wrapper: H-pair im2row of the input (plain XLA), batch tiling, pallas_call.
# ---------------------------------------------------------------------------
def cnn_forward(x_nchw, params, b_tile=128):
    B = x_nchw.shape[0]

    # Distribute batch padding across grid steps (Bp ~= B) and force >= 2 steps for B >= 16
    # so the 'parallel' batch axis shards across both v7x TensorCores.  Default b_tile=128
    # keeps per-step VMEM well inside v7x's 64 MiB; sweep b_tile up to 256 on v5e/v6e.
    cap = max(8, (b_tile // 8) * 8)
    n_steps = -(-B // cap)
    if B >= 16:
        n_steps = max(n_steps, 2)
    bt = -(-B // n_steps)
    bt = max(8, -(-bt // 8) * 8)                           # 8-aligned output sublanes
    Bp = n_steps * bt

    # H-pair im2row: 12 rows/img, row r holds input rows 2r..2r+5 (6*28 = 168 cols);
    # padded to 16 rows/img so all rank-2 <-> rank-3 reshapes are sublane-aligned.
    ximg = x_nchw[:, 0, :, :].astype(jnp.bfloat16)                 # cast BEFORE the gather
    rows = 2 * jnp.arange(12)[:, None] + jnp.arange(6)[None, :]    # (12, 6)
    xs = ximg[:, rows, :].reshape(B, 12, 168)
    xs = jnp.pad(xs, ((0, Bp - B), (0, 4), (0, 0)))                # pad batch + to 16 rows/img
    xs2d = xs.reshape(Bp * 16, 168)

    mats = dict(params)
    for kname in ("w1p", "w2b", "wf"):
        mats[kname] = jnp.asarray(mats[kname], jnp.bfloat16)
    for kname in ("b1p", "b2p", "bf"):
        mats[kname] = jnp.asarray(mats[kname], jnp.float32)
    weights = [mats[kname] for kname in ("w1p", "b1p", "w2b", "b2p", "wf", "bf")]

    def const_spec(a):
        nd = a.ndim
        return pl.BlockSpec(a.shape, lambda b, _nd=nd: (0,) * _nd)

    flops_per_img = 2 * (16 * 168 * 768 + 5 * 8 * 192 * 256 + 4 * 128 * 128)
    bytes_accessed = int(xs2d.size * 2
                         + sum(w.size * w.dtype.itemsize for w in weights)
                         + Bp * 128 * 4)

    out = pl.pallas_call(
        cnn_kernel,
        out_shape=jax.ShapeDtypeStruct((Bp, 128), jnp.float32),
        grid=(n_steps,),
        in_specs=[pl.BlockSpec((bt * 16, 168), lambda b: (b, 0))]
                 + [const_spec(w) for w in weights],
        out_specs=pl.BlockSpec((bt, 128), lambda b: (b, 0)),
        compiler_params=pltpu.CompilerParams(
            dimension_semantics=("parallel",),
            vmem_limit_bytes=(48 if bt <= 128 else 96) * 1024 * 1024),
        cost_estimate=pl.CostEstimate(
            flops=Bp * flops_per_img, transcendentals=0, bytes_accessed=bytes_accessed),
    )(xs2d, *weights)
    return out[:B, :10]


# ---------------------------------------------------------------------------
# Pure-JAX reference (same semantics as the PyTorch module).
# ---------------------------------------------------------------------------
def reference_forward(x, W1, b1, W2, b2, Wfc, bfc):
    dn = ('NCHW', 'OIHW', 'NCHW')
    hi = lax.Precision.HIGHEST
    y = lax.conv_general_dilated(x, W1, (1, 1), 'VALID', dimension_numbers=dn,
                                 precision=hi) + b1[None, :, None, None]
    y = jnp.maximum(y, 0.0)
    y = lax.reduce_window(y, -jnp.inf, lax.max, (1, 1, 2, 2), (1, 1, 2, 2), 'VALID')
    y = lax.conv_general_dilated(y, W2, (1, 1), 'VALID', dimension_numbers=dn,
                                 precision=hi) + b2[None, :, None, None]
    y = jnp.maximum(y, 0.0)
    y = lax.reduce_window(y, -jnp.inf, lax.max, (1, 1, 2, 2), (1, 1, 2, 2), 'VALID')
    y = y.reshape(y.shape[0], -1)
    return jnp.dot(y, Wfc.T, precision=hi) + bfc[None, :]


if __name__ == "__main__":
    key = jax.random.PRNGKey(0)
    k = jax.random.split(key, 8)

    def u(kk, shape, fan_in):
        bound = 1.0 / np.sqrt(fan_in)
        return jax.random.uniform(kk, shape, jnp.float32, -bound, bound)

    # Deterministic, PyTorch-shaped parameters.
    W1 = u(k[1], (16, 1, 5, 5), 1 * 5 * 5);   b1 = u(k[2], (16,), 1 * 5 * 5)
    W2 = u(k[3], (32, 16, 5, 5), 16 * 5 * 5); b2 = u(k[4], (32,), 16 * 5 * 5)
    Wfc = u(k[5], (10, 512), 512);            bfc = u(k[6], (10,), 512)

    kparams = build_kernel_params(W1, b1, W2, b2, Wfc, bfc)

    # Small demo batch (single grid step, full-block path).
    B = 2
    x = jax.random.normal(k[0], (B, 1, 28, 28), jnp.float32)
    out = jax.block_until_ready(cnn_forward(x, kparams))
    assert out.shape == (B, 10)
    ref = reference_forward(x, W1, b1, W2, b2, Wfc, bfc)
    if not np.allclose(np.asarray(out), np.asarray(ref), atol=4e-2, rtol=4e-2):
        raise AssertionError("Pallas CNN output does not match JAX reference (B=2)")

    # Default tiling for B=20: forced 2-step 'parallel' grid (v7x megacore) + batch padding.
    Bb = 20
    xb = jax.random.normal(k[7], (Bb, 1, 28, 28), jnp.float32)
    outb = jax.block_until_ready(cnn_forward(xb, kparams))
    refb = reference_forward(xb, W1, b1, W2, b2, Wfc, bfc)
    if not np.allclose(np.asarray(outb), np.asarray(refb), atol=4e-2, rtol=4e-2):
        raise AssertionError("Pallas CNN output does not match JAX reference (B=20, default tile)")

    # Explicit small tile: 3-step grid.
    outc = jax.block_until_ready(cnn_forward(xb, kparams, b_tile=8))
    if not np.allclose(np.asarray(outc), np.asarray(refb), atol=4e-2, rtol=4e-2):
        raise AssertionError("Pallas CNN output does not match JAX reference (B=20, b_tile=8)")

    print("KERNEL_OK")
</pallas_src>

<mosaic_0001>
module attributes {stable_mosaic.version = 11 : i64} {
  func.func @cnn_kernel(%arg0: i32, %arg1: memref<128x168xbf16, #tpu.memory_space<vmem>>, %arg2: memref<168x768xbf16, #tpu.memory_space<vmem>>, %arg3: memref<1x192xf32, #tpu.memory_space<vmem>>, %arg4: memref<5x192x256xbf16, #tpu.memory_space<vmem>>, %arg5: memref<1x128xf32, #tpu.memory_space<vmem>>, %arg6: memref<4x128x128xbf16, #tpu.memory_space<vmem>>, %arg7: memref<1x128xf32, #tpu.memory_space<vmem>>, %arg8: memref<8x128xf32, #tpu.memory_space<vmem>>) attributes {dimension_semantics = [#tpu.dimension_semantics<parallel>], iteration_bounds = array<i64: 1>, scalar_prefetch = 0 : i64, scratch_operands = 0 : i64, tpu.core_type = #tpu.core_type<tc>, window_params = [{transform_indices = @transform_0, window_bounds = array<i64: 128, 168>}, {pipeline_mode = #tpu.pipeline_mode<synchronous>, transform_indices = @transform_1, window_bounds = array<i64: 168, 768>}, {pipeline_mode = #tpu.pipeline_mode<synchronous>, transform_indices = @transform_2, window_bounds = array<i64: 1, 192>}, {pipeline_mode = #tpu.pipeline_mode<synchronous>, transform_indices = @transform_3, window_bounds = array<i64: 5, 192, 256>}, {pipeline_mode = #tpu.pipeline_mode<synchronous>, transform_indices = @transform_4, window_bounds = array<i64: 1, 128>}, {pipeline_mode = #tpu.pipeline_mode<synchronous>, transform_indices = @transform_5, window_bounds = array<i64: 4, 128, 128>}, {pipeline_mode = #tpu.pipeline_mode<synchronous>, transform_indices = @transform_6, window_bounds = array<i64: 1, 128>}, {transform_indices = @transform_7, window_bounds = array<i64: 8, 128>}]} {
    %c0 = arith.constant 0 : index
    %c0_0 = arith.constant 0 : index
    %0 = vector.load %arg1[%c0, %c0_0] : memref<128x168xbf16, #tpu.memory_space<vmem>>, vector<128x168xbf16>
    %c0_1 = arith.constant 0 : index
    %c0_2 = arith.constant 0 : index
    %1 = vector.load %arg2[%c0_1, %c0_2] : memref<168x768xbf16, #tpu.memory_space<vmem>>, vector<168x768xbf16>
    %cst = arith.constant dense<0.000000e+00> : vector<128x768xf32>
    %2 = tpu.matmul %0, %1, %cst {dimension_numbers = #tpu.dot_dimension_numbers<[1], [0], [0], [1], [0, 0, 1, 1], [], []>} : vector<128x168xbf16>, vector<168x768xbf16>, vector<128x768xf32> -> vector<128x768xf32>
    %3 = vector.extract_strided_slice %2 {offsets = [0, 0], sizes = [128, 384], strides = [1, 1]} : vector<128x768xf32> to vector<128x384xf32>
    %4 = vector.extract_strided_slice %2 {offsets = [0, 384], sizes = [128, 384], strides = [1, 1]} : vector<128x768xf32> to vector<128x384xf32>
    %5 = arith.maximumf %3, %4 : vector<128x384xf32>
    %6 = vector.extract_strided_slice %5 {offsets = [0, 0], sizes = [128, 192], strides = [1, 1]} : vector<128x384xf32> to vector<128x192xf32>
    %7 = vector.extract_strided_slice %5 {offsets = [0, 192], sizes = [128, 192], strides = [1, 1]} : vector<128x384xf32> to vector<128x192xf32>
    %8 = arith.maximumf %6, %7 : vector<128x192xf32>
    %c0_3 = arith.constant 0 : index
    %c0_4 = arith.constant 0 : index
    %9 = vector.load %arg3[%c0_3, %c0_4] : memref<1x192xf32, #tpu.memory_space<vmem>>, vector<1x192xf32>
    %10 = vector.broadcast %9 : vector<1x192xf32> to vector<128x192xf32>
    %11 = arith.addf %8, %10 : vector<128x192xf32>
    %cst_5 = arith.constant 0.000000e+00 : f32
    %12 = vector.broadcast %cst_5 : f32 to vector<128x192xf32>
    %13 = arith.maximumf %11, %12 : vector<128x192xf32>
    %14 = arith.truncf %13 : vector<128x192xf32> to vector<128x192xbf16>
    %15 = vector.shape_cast %14 : vector<128x192xbf16> to vector<8x16x192xbf16>
    %16 = vector.extract_strided_slice %15 {offsets = [0, 0, 0], sizes = [8, 8, 192], strides = [1, 1, 1]} : vector<8x16x192xbf16> to vector<8x8x192xbf16>
    %17 = vector.shape_cast %16 : vector<8x8x192xbf16> to vector<64x192xbf16>
    %c0_6 = arith.constant 0 : index
    %c0_7 = arith.constant 0 : index
    %c0_8 = arith.constant 0 : index
    %18 = vector.load %arg4[%c0_6, %c0_7, %c0_8] : memref<5x192x256xbf16, #tpu.memory_space<vmem>>, vector<1x192x256xbf16>
    %19 = vector.shape_cast %18 : vector<1x192x256xbf16> to vector<192x256xbf16>
    %cst_9 = arith.constant dense<0.000000e+00> : vector<64x256xf32>
    %20 = tpu.matmul %17, %19, %cst_9 {dimension_numbers = #tpu.dot_dimension_numbers<[1], [0], [0], [1], [0, 0, 1, 1], [], []>} : vector<64x192xbf16>, vector<192x256xbf16>, vector<64x256xf32> -> vector<64x256xf32>
    %21 = vector.extract_strided_slice %15 {offsets = [0, 1, 0], sizes = [8, 8, 192], strides = [1, 1, 1]} : vector<8x16x192xbf16> to vector<8x8x192xbf16>
    %22 = vector.shape_cast %21 : vector<8x8x192xbf16> to vector<64x192xbf16>
    %c1 = arith.constant 1 : index
    %c0_10 = arith.constant 0 : index
    %c0_11 = arith.constant 0 : index
    %23 = vector.load %arg4[%c1, %c0_10, %c0_11] : memref<5x192x256xbf16, #tpu.memory_space<vmem>>, vector<1x192x256xbf16>
    %24 = vector.shape_cast %23 : vector<1x192x256xbf16> to vector<192x256xbf16>
    %cst_12 = arith.constant dense<0.000000e+00> : vector<64x256xf32>
    %25 = tpu.matmul %22, %24, %cst_12 {dimension_numbers = #tpu.dot_dimension_numbers<[1], [0], [0], [1], [0, 0, 1, 1], [], []>} : vector<64x192xbf16>, vector<192x256xbf16>, vector<64x256xf32> -> vector<64x256xf32>
    %26 = arith.addf %20, %25 : vector<64x256xf32>
    %27 = vector.extract_strided_slice %15 {offsets = [0, 2, 0], sizes = [8, 8, 192], strides = [1, 1, 1]} : vector<8x16x192xbf16> to vector<8x8x192xbf16>
    %28 = vector.shape_cast %27 : vector<8x8x192xbf16> to vector<64x192xbf16>
    %c2 = arith.constant 2 : index
    %c0_13 = arith.constant 0 : index
    %c0_14 = arith.constant 0 : index
    %29 = vector.load %arg4[%c2, %c0_13, %c0_14] : memref<5x192x256xbf16, #tpu.memory_space<vmem>>, vector<1x192x256xbf16>
    %30 = vector.shape_cast %29 : vector<1x192x256xbf16> to vector<192x256xbf16>
    %cst_15 = arith.constant dense<0.000000e+00> : vector<64x256xf32>
    %31 = tpu.matmul %28, %30, %cst_15 {dimension_numbers = #tpu.dot_dimension_numbers<[1], [0], [0], [1], [0, 0, 1, 1], [], []>} : vector<64x192xbf16>, vector<192x256xbf16>, vector<64x256xf32> -> vector<64x256xf32>
    %32 = arith.addf %26, %31 : vector<64x256xf32>
    %33 = vector.extract_strided_slice %15 {offsets = [0, 3, 0], sizes = [8, 8, 192], strides = [1, 1, 1]} : vector<8x16x192xbf16> to vector<8x8x192xbf16>
    %34 = vector.shape_cast %33 : vector<8x8x192xbf16> to vector<64x192xbf16>
    %c3 = arith.constant 3 : index
    %c0_16 = arith.constant 0 : index
    %c0_17 = arith.constant 0 : index
    %35 = vector.load %arg4[%c3, %c0_16, %c0_17] : memref<5x192x256xbf16, #tpu.memory_space<vmem>>, vector<1x192x256xbf16>
    %36 = vector.shape_cast %35 : vector<1x192x256xbf16> to vector<192x256xbf16>
    %cst_18 = arith.constant dense<0.000000e+00> : vector<64x256xf32>
    %37 = tpu.matmul %34, %36, %cst_18 {dimension_numbers = #tpu.dot_dimension_numbers<[1], [0], [0], [1], [0, 0, 1, 1], [], []>} : vector<64x192xbf16>, vector<192x256xbf16>, vector<64x256xf32> -> vector<64x256xf32>
    %38 = arith.addf %32, %37 : vector<64x256xf32>
    %39 = vector.extract_strided_slice %15 {offsets = [0, 4, 0], sizes = [8, 8, 192], strides = [1, 1, 1]} : vector<8x16x192xbf16> to vector<8x8x192xbf16>
    %40 = vector.shape_cast %39 : vector<8x8x192xbf16> to vector<64x192xbf16>
    %c4 = arith.constant 4 : index
    %c0_19 = arith.constant 0 : index
    %c0_20 = arith.constant 0 : index
    %41 = vector.load %arg4[%c4, %c0_19, %c0_20] : memref<5x192x256xbf16, #tpu.memory_space<vmem>>, vector<1x192x256xbf16>
    %42 = vector.shape_cast %41 : vector<1x192x256xbf16> to vector<192x256xbf16>
    %cst_21 = arith.constant dense<0.000000e+00> : vector<64x256xf32>
    %43 = tpu.matmul %40, %42, %cst_21 {dimension_numbers = #tpu.dot_dimension_numbers<[1], [0], [0], [1], [0, 0, 1, 1], [], []>} : vector<64x192xbf16>, vector<192x256xbf16>, vector<64x256xf32> -> vector<64x256xf32>
    %44 = arith.addf %38, %43 : vector<64x256xf32>
    %45 = vector.extract_strided_slice %44 {offsets = [0, 0], sizes = [64, 128], strides = [1, 1]} : vector<64x256xf32> to vector<64x128xf32>
    %46 = vector.extract_strided_slice %44 {offsets = [0, 128], sizes = [64, 128], strides = [1, 1]} : vector<64x256xf32> to vector<64x128xf32>
    %47 = arith.maximumf %45, %46 : vector<64x128xf32>
    %48 = vector.shape_cast %47 : vector<64x128xf32> to vector<8x8x128xf32>
    %49 = vector.extract_strided_slice %48 {offsets = [0, 0, 0], sizes = [8, 1, 128], strides = [1, 1, 1]} : vector<8x8x128xf32> to vector<8x1x128xf32>
    %50 = vector.shape_cast %49 : vector<8x1x128xf32> to vector<8x128xf32>
    %51 = vector.extract_strided_slice %48 {offsets = [0, 1, 0], sizes = [8, 1, 128], strides = [1, 1, 1]} : vector<8x8x128xf32> to vector<8x1x128xf32>
    %52 = vector.shape_cast %51 : vector<8x1x128xf32> to vector<8x128xf32>
    %53 = arith.maximumf %50, %52 : vector<8x128xf32>
    %c0_22 = arith.constant 0 : index
    %c0_23 = arith.constant 0 : index
    %54 = vector.load %arg5[%c0_22, %c0_23] : memref<1x128xf32, #tpu.memory_space<vmem>>, vector<1x128xf32>
    %55 = vector.broadcast %54 : vector<1x128xf32> to vector<8x128xf32>
    %56 = arith.addf %53, %55 : vector<8x128xf32>
    %cst_24 = arith.constant 0.000000e+00 : f32
    %57 = vector.broadcast %cst_24 : f32 to vector<8x128xf32>
    %58 = arith.maximumf %56, %57 : vector<8x128xf32>
    %59 = arith.truncf %58 : vector<8x128xf32> to vector<8x128xbf16>
    %c0_25 = arith.constant 0 : index
    %c0_26 = arith.constant 0 : index
    %c0_27 = arith.constant 0 : index
    %60 = vector.load %arg6[%c0_25, %c0_26, %c0_27] : memref<4x128x128xbf16, #tpu.memory_space<vmem>>, vector<1x128x128xbf16>
    %61 = vector.shape_cast %60 : vector<1x128x128xbf16> to vector<128x128xbf16>
    %cst_28 = arith.constant dense<0.000000e+00> : vector<8x128xf32>
    %62 = tpu.matmul %59, %61, %cst_28 {dimension_numbers = #tpu.dot_dimension_numbers<[1], [0], [0], [1], [0, 0, 1, 1], [], []>} : vector<8x128xbf16>, vector<128x128xbf16>, vector<8x128xf32> -> vector<8x128xf32>
    %63 = vector.extract_strided_slice %48 {offsets = [0, 2, 0], sizes = [8, 1, 128], strides = [1, 1, 1]} : vector<8x8x128xf32> to vector<8x1x128xf32>
    %64 = vector.shape_cast %63 : vector<8x1x128xf32> to vector<8x128xf32>
    %65 = vector.extract_strided_slice %48 {offsets = [0, 3, 0], sizes = [8, 1, 128], strides = [1, 1, 1]} : vector<8x8x128xf32> to vector<8x1x128xf32>
    %66 = vector.shape_cast %65 : vector<8x1x128xf32> to vector<8x128xf32>
    %67 = arith.maximumf %64, %66 : vector<8x128xf32>
    %c0_29 = arith.constant 0 : index
    %c0_30 = arith.constant 0 : index
    %68 = vector.load %arg5[%c0_29, %c0_30] : memref<1x128xf32, #tpu.memory_space<vmem>>, vector<1x128xf32>
    %69 = vector.broadcast %68 : vector<1x128xf32> to vector<8x128xf32>
    %70 = arith.addf %67, %69 : vector<8x128xf32>
    %cst_31 = arith.constant 0.000000e+00 : f32
    %71 = vector.broadcast %cst_31 : f32 to vector<8x128xf32>
    %72 = arith.maximumf %70, %71 : vector<8x128xf32>
    %73 = arith.truncf %72 : vector<8x128xf32> to vector<8x128xbf16>
    %c1_32 = arith.constant 1 : index
    %c0_33 = arith.constant 0 : index
    %c0_34 = arith.constant 0 : index
    %74 = vector.load %arg6[%c1_32, %c0_33, %c0_34] : memref<4x128x128xbf16, #tpu.memory_space<vmem>>, vector<1x128x128xbf16>
    %75 = vector.shape_cast %74 : vector<1x128x128xbf16> to vector<128x128xbf16>
    %cst_35 = arith.constant dense<0.000000e+00> : vector<8x128xf32>
    %76 = tpu.matmul %73, %75, %cst_35 {dimension_numbers = #tpu.dot_dimension_numbers<[1], [0], [0], [1], [0, 0, 1, 1], [], []>} : vector<8x128xbf16>, vector<128x128xbf16>, vector<8x128xf32> -> vector<8x128xf32>
    %77 = arith.addf %62, %76 : vector<8x128xf32>
    %78 = vector.extract_strided_slice %48 {offsets = [0, 4, 0], sizes = [8, 1, 128], strides = [1, 1, 1]} : vector<8x8x128xf32> to vector<8x1x128xf32>
    %79 = vector.shape_cast %78 : vector<8x1x128xf32> to vector<8x128xf32>
    %80 = vector.extract_strided_slice %48 {offsets = [0, 5, 0], sizes = [8, 1, 128], strides = [1, 1, 1]} : vector<8x8x128xf32> to vector<8x1x128xf32>
    %81 = vector.shape_cast %80 : vector<8x1x128xf32> to vector<8x128xf32>
    %82 = arith.maximumf %79, %81 : vector<8x128xf32>
    %c0_36 = arith.constant 0 : index
    %c0_37 = arith.constant 0 : index
    %83 = vector.load %arg5[%c0_36, %c0_37] : memref<1x128xf32, #tpu.memory_space<vmem>>, vector<1x128xf32>
    %84 = vector.broadcast %83 : vector<1x128xf32> to vector<8x128xf32>
    %85 = arith.addf %82, %84 : vector<8x128xf32>
    %cst_38 = arith.constant 0.000000e+00 : f32
    %86 = vector.broadcast %cst_38 : f32 to vector<8x128xf32>
    %87 = arith.maximumf %85, %86 : vector<8x128xf32>
    %88 = arith.truncf %87 : vector<8x128xf32> to vector<8x128xbf16>
    %c2_39 = arith.constant 2 : index
    %c0_40 = arith.constant 0 : index
    %c0_41 = arith.constant 0 : index
    %89 = vector.load %arg6[%c2_39, %c0_40, %c0_41] : memref<4x128x128xbf16, #tpu.memory_space<vmem>>, vector<1x128x128xbf16>
    %90 = vector.shape_cast %89 : vector<1x128x128xbf16> to vector<128x128xbf16>
    %cst_42 = arith.constant dense<0.000000e+00> : vector<8x128xf32>
    %91 = tpu.matmul %88, %90, %cst_42 {dimension_numbers = #tpu.dot_dimension_numbers<[1], [0], [0], [1], [0, 0, 1, 1], [], []>} : vector<8x128xbf16>, vector<128x128xbf16>, vector<8x128xf32> -> vector<8x128xf32>
    %92 = arith.addf %77, %91 : vector<8x128xf32>
    %93 = vector.extract_strided_slice %48 {offsets = [0, 6, 0], sizes = [8, 1, 128], strides = [1, 1, 1]} : vector<8x8x128xf32> to vector<8x1x128xf32>
    %94 = vector.shape_cast %93 : vector<8x1x128xf32> to vector<8x128xf32>
    %95 = vector.extract_strided_slice %48 {offsets = [0, 7, 0], sizes = [8, 1, 128], strides = [1, 1, 1]} : vector<8x8x128xf32> to vector<8x1x128xf32>
    %96 = vector.shape_cast %95 : vector<8x1x128xf32> to vector<8x128xf32>
    %97 = arith.maximumf %94, %96 : vector<8x128xf32>
    %c0_43 = arith.constant 0 : index
    %c0_44 = arith.constant 0 : index
    %98 = vector.load %arg5[%c0_43, %c0_44] : memref<1x128xf32, #tpu.memory_space<vmem>>, vector<1x128xf32>
    %99 = vector.broadcast %98 : vector<1x128xf32> to vector<8x128xf32>
    %100 = arith.addf %97, %99 : vector<8x128xf32>
    %cst_45 = arith.constant 0.000000e+00 : f32
    %101 = vector.broadcast %cst_45 : f32 to vector<8x128xf32>
    %102 = arith.maximumf %100, %101 : vector<8x128xf32>
    %103 = arith.truncf %102 : vector<8x128xf32> to vector<8x128xbf16>
    %c3_46 = arith.constant 3 : index
    %c0_47 = arith.constant 0 : index
    %c0_48 = arith.constant 0 : index
    %104 = vector.load %arg6[%c3_46, %c0_47, %c0_48] : memref<4x128x128xbf16, #tpu.memory_space<vmem>>, vector<1x128x128xbf16>
    %105 = vector.shape_cast %104 : vector<1x128x128xbf16> to vector<128x128xbf16>
    %cst_49 = arith.constant dense<0.000000e+00> : vector<8x128xf32>
    %106 = tpu.matmul %103, %105, %cst_49 {dimension_numbers = #tpu.dot_dimension_numbers<[1], [0], [0], [1], [0, 0, 1, 1], [], []>} : vector<8x128xbf16>, vector<128x128xbf16>, vector<8x128xf32> -> vector<8x128xf32>
    %107 = arith.addf %92, %106 : vector<8x128xf32>
    %c0_50 = arith.constant 0 : index
    %c0_51 = arith.constant 0 : index
    %108 = vector.load %arg7[%c0_50, %c0_51] : memref<1x128xf32, #tpu.memory_space<vmem>>, vector<1x128xf32>
    %109 = vector.broadcast %108 : vector<1x128xf32> to vector<8x128xf32>
    %110 = arith.addf %107, %109 : vector<8x128xf32>
    %c0_52 = arith.constant 0 : index
    %c0_53 = arith.constant 0 : index
    %111 = vector.load %arg8[%c0_52, %c0_53] : memref<8x128xf32, #tpu.memory_space<vmem>>, vector<8x128xf32>
    tpu.vector_store %arg8[%c0_52, %c0_53], %110 {strides = array<i32>} : memref<8x128xf32, #tpu.memory_space<vmem>>, vector<8x128xf32>,
    return
  }
  func.func @transform_0(%arg0: i32) -> (i32, i32) {
    %c0_i32 = arith.constant 0 : i32
    %c0_i32_0 = arith.constant 0 : i32
    return %arg0, %c0_i32 : i32, i32
  }
  func.func @transform_1(%arg0: i32) -> (i32, i32) {
    %c0_i32 = arith.constant 0 : i32
    %c0_i32_0 = arith.constant 0 : i32
    %c0_i32_1 = arith.constant 0 : i32
    return %c0_i32, %c0_i32_0 : i32, i32
  }
  func.func @transform_2(%arg0: i32) -> (i32, i32) {
    %c0_i32 = arith.constant 0 : i32
    %c0_i32_0 = arith.constant 0 : i32
    %c0_i32_1 = arith.constant 0 : i32
    return %c0_i32, %c0_i32_0 : i32, i32
  }
  func.func @transform_3(%arg0: i32) -> (i32, i32, i32) {
    %c0_i32 = arith.constant 0 : i32
    %c0_i32_0 = arith.constant 0 : i32
    %c0_i32_1 = arith.constant 0 : i32
    %c0_i32_2 = arith.constant 0 : i32
    return %c0_i32, %c0_i32_0, %c0_i32_1 : i32, i32, i32
  }
  func.func @transform_4(%arg0: i32) -> (i32, i32) {
    %c0_i32 = arith.constant 0 : i32
    %c0_i32_0 = arith.constant 0 : i32
    %c0_i32_1 = arith.constant 0 : i32
    return %c0_i32, %c0_i32_0 : i32, i32
  }
  func.func @transform_5(%arg0: i32) -> (i32, i32, i32) {
    %c0_i32 = arith.constant 0 : i32
    %c0_i32_0 = arith.constant 0 : i32
    %c0_i32_1 = arith.constant 0 : i32
    %c0_i32_2 = arith.constant 0 : i32
    return %c0_i32, %c0_i32_0, %c0_i32_1 : i32, i32, i32
  }
  func.func @transform_6(%arg0: i32) -> (i32, i32) {
    %c0_i32 = arith.constant 0 : i32
    %c0_i32_0 = arith.constant 0 : i32
    %c0_i32_1 = arith.constant 0 : i32
    return %c0_i32, %c0_i32_0 : i32, i32
  }
  func.func @transform_7(%arg0: i32) -> (i32, i32) {
    %c0_i32 = arith.constant 0 : i32
    %c0_i32_0 = arith.constant 0 : i32
    return %arg0, %c0_i32 : i32, i32
  }
}

</mosaic_0001>

<llo_original>
// kernel: tpu_custom_call.1
$region0: #{tpu_custom_call.1}
  #allocation0 [shape = 'u32[]', space=smem, size = 0x4, offset = 0x4, fixed_abs, tag = 'smem constant byte address 0x4 - core index']
  #allocation1 [shape = 'u32[144,128]{1,0:T(1,128)}', space=vmem, size = 0x12000, scoped, tag = 'internal scratch']
  %s0 = inlined_call_operand.vmem [shape: bf16[128,168], index: 0, kind: input, shape index: {}]
  %s1 = inlined_call_operand.hbm [shape: bf16[168,768], index: 1, kind: input, shape index: {}]
  %s2 = inlined_call_operand.vmem [shape: f32[1,192], index: 2, kind: input, shape index: {}]
  %s3 = inlined_call_operand.hbm [shape: bf16[5,192,256], index: 3, kind: input, shape index: {}]
  %s4 = inlined_call_operand.vmem [shape: f32[1,128], index: 4, kind: input, shape index: {}]
  %s5 = inlined_call_operand.hbm [shape: bf16[4,128,128], index: 5, kind: input, shape index: {}]
  %s6 = inlined_call_operand.vmem [shape: f32[1,128], index: 6, kind: input, shape index: {}]
  %s7 = inlined_call_operand.hbm [shape: f32[8,128], index: 7, kind: output, shape index: {}]
  %s8 = sld [smem:[#allocation0]]
  $region50: #{tpu_custom_call.1} parent=0
    _
  %s10 = ssub.s32 1, %s8
  %s11 = scalar_select 0, %s10, %s8
  $region1: #{tpu_custom_call.1} parent=0
    #allocation2 [shape = 'u8[258048]{0}', space=vmem, size = 0x3f000, scoped, tag = 'input window, operand 1, single buffered']
    #allocation3 [shape = 's32[1]{0}', space=sflag, size = 0x4, scoped, tag = 'scoped memory for tpu_custom_call.1']
    #allocation4 [shape = 's32[1]{0}', space=sflag, size = 0x4, scoped, tag = 'scoped memory for tpu_custom_call.1']
    #allocation5 [shape = 'u8[491520]{0}', space=vmem, size = 0x78000, scoped, tag = 'input window, operand 3, single buffered']
    #allocation6 [shape = 's32[1]{0}', space=sflag, size = 0x4, scoped, tag = 'scoped memory for tpu_custom_call.1']
    #allocation7 [shape = 'u8[131072]{0}', space=vmem, size = 0x20000, scoped, tag = 'input window, operand 5, single buffered']
    #allocation8 [shape = 'u8[4096]{0}', space=vmem, size = 0x1000, scoped, tag = 'output window, operand 0, single buffered']
    %12 = vsyncpa [#allocation3], 0
    %13 = vsyncpa [#allocation6], 0
    %14 = vsyncpa [#allocation4], 0
    // Predicated region
    $region2: #{tpu_custom_call.1} parent=1 // pred_check
      _
    $region3: #{tpu_custom_call.1} parent=1 // pred_check_branch
      %16 = sbr.rel (0) target = $region5
    $region4: #{tpu_custom_call.1} parent=1 // pred_region
      _
    $region5: #{tpu_custom_call.1} parent=1 // pred_fallthru
      _
    // Predicated region
    $region6: #{tpu_custom_call.1} parent=1 // pred_check
      _
    $region7: #{tpu_custom_call.1} parent=1 // pred_check_branch
      %18 = sbr.rel (0) target = $region9
    $region8: #{tpu_custom_call.1} parent=1 // pred_region
      %s20 = ssub.s32 8064, 8064
      %21 = vsyncadd [#allocation3], %s20
      %s22 = sshll.u32 [#allocation2], 4
      %s23 = int_to_ptr.vmem [resolvable:$true] %s22
      %28 = dma.hbm_to_vmem [thread:$0]  %s1, 8064, %s23, [#allocation3], 384, 384, 24
    $region9: #{tpu_custom_call.1} parent=1 // pred_fallthru
      _
    // Predicated region
    $region10: #{tpu_custom_call.1} parent=1 // pred_check
      _
    $region11: #{tpu_custom_call.1} parent=1 // pred_check_branch
      %30 = sbr.rel (0) target = $region13
    $region12: #{tpu_custom_call.1} parent=1 // pred_region
      _
    $region13: #{tpu_custom_call.1} parent=1 // pred_fallthru
      _
    // Predicated region
    $region14: #{tpu_custom_call.1} parent=1 // pred_check
      _
    $region15: #{tpu_custom_call.1} parent=1 // pred_check_branch
      %32 = sbr.rel (0) target = $region17
    $region16: #{tpu_custom_call.1} parent=1 // pred_region
      %s34 = ssub.s32 15360, 15360
      %35 = vsyncadd [#allocation6], %s34
      %s36 = sshll.u32 [#allocation5], 4
      %s37 = int_to_ptr.vmem [resolvable:$true] %s36
      %42 = dma.hbm_to_vmem [thread:$0]  %s3, 15360, %s37, [#allocation6], 128, 128, 8
    $region17: #{tpu_custom_call.1} parent=1 // pred_fallthru
      _
    // Predicated region
    $region18: #{tpu_custom_call.1} parent=1 // pred_check
      _
    $region19: #{tpu_custom_call.1} parent=1 // pred_check_branch
      %44 = sbr.rel (0) target = $region21
    $region20: #{tpu_custom_call.1} parent=1 // pred_region
      _
    $region21: #{tpu_custom_call.1} parent=1 // pred_fallthru
      _
    // Predicated region
    $region22: #{tpu_custom_call.1} parent=1 // pred_check
      _
    $region23: #{tpu_custom_call.1} parent=1 // pred_check_branch
      %46 = sbr.rel (0) target = $region25
    $region24: #{tpu_custom_call.1} parent=1 // pred_region
      %s48 = ssub.s32 4096, 4096
      %49 = vsyncadd [#allocation6], %s48
      %s50 = sshll.u32 [#allocation7], 4
      %s51 = int_to_ptr.vmem [resolvable:$true] %s50
      %56 = dma.hbm_to_vmem [thread:$0]  %s5, 4096, %s51, [#allocation6], 64, 64, 4
    $region25: #{tpu_custom_call.1} parent=1 // pred_fallthru
      _
    // Predicated region
    $region26: #{tpu_custom_call.1} parent=1 // pred_check
      _
    $region27: #{tpu_custom_call.1} parent=1 // pred_check_branch
      %58 = sbr.rel (0) target = $region29
    $region28: #{tpu_custom_call.1} parent=1 // pred_region
      _
    $region29: #{tpu_custom_call.1} parent=1 // pred_fallthru
      _
    // Predicated region
    $region30: #{tpu_custom_call.1} parent=1 // pred_check
      _
    $region31: #{tpu_custom_call.1} parent=1 // pred_check_branch
      %60 = sbr.rel (0) target = $region33
    $region32: #{tpu_custom_call.1} parent=1 // pred_region
      %61 = dma.done [#allocation3], 8064
    $region33: #{tpu_custom_call.1} parent=1 // pred_fallthru
      _
    // Predicated region
    $region34: #{tpu_custom_call.1} parent=1 // pred_check
      _
    $region35: #{tpu_custom_call.1} parent=1 // pred_check_branch
      %63 = sbr.rel (0) target = $region37
    $region36: #{tpu_custom_call.1} parent=1 // pred_region
      %64 = dma.done [#allocation6], 15360
    $region37: #{tpu_custom_call.1} parent=1 // pred_fallthru
      _
    // Predicated region
    $region38: #{tpu_custom_call.1} parent=1 // pred_check
      _
    $region39: #{tpu_custom_call.1} parent=1 // pred_check_branch
      %66 = sbr.rel (0) target = $region41
    $region40: #{tpu_custom_call.1} parent=1 // pred_region
      %67 = dma.done [#allocation6], 4096
    $region41: #{tpu_custom_call.1} parent=1 // pred_fallthru
      _
    %v69 = vld [vmem:[%s0] sm:$0xff]
    %v70 = vld [vmem:[%s0 + $0x8] sm:$0xff]
    %v71 = vld [vmem:[%s0 + $0x10] sm:$0xff]
    %v72 = vld [vmem:[%s0 + $0x18] sm:$0xff]
    %v73 = vld [vmem:[%s0 + $0x20] sm:$0xff]
    %v74 = vld [vmem:[%s0 + $0x28] sm:$0xff]
    %v75 = vld [vmem:[%s0 + $0x30] sm:$0xff]
    %v76 = vld [vmem:[%s0 + $0x38] sm:$0xff]
    %v77 = vld [vmem:[%s0 + $0x40] sm:$0xff]
    %v78 = vld [vmem:[%s0 + $0x48] sm:$0xff]
    %v79 = vld [vmem:[%s0 + $0x50] sm:$0xff]
    %v80 = vld [vmem:[%s0 + $0x58] sm:$0xff]
    %v81 = vld [vmem:[%s0 + $0x60] sm:$0xff]
    %v82 = vld [vmem:[%s0 + $0x68] sm:$0xff]
    %v83 = vld [vmem:[%s0 + $0x70] sm:$0xff]
    %v84 = vld [vmem:[%s0 + $0x78] sm:$0xff]
    %v85 = vld [vmem:[#allocation2] sm:$0xff]
    %v86 = vld [vmem:[#allocation2 + $0x8] sm:$0xff]
    %v87 = vld [vmem:[#allocation2 + $0x10] sm:$0xff]
    %v88 = vld [vmem:[#allocation2 + $0x18] sm:$0xff]
    %v89 = vld [vmem:[#allocation2 + $0x20] sm:$0xff]
    %v90 = vld [vmem:[#allocation2 + $0x28] sm:$0xff]
    %v91 = vld [vmem:[#allocation2 + $0x30] sm:$0xff]
    %v92 = vld [vmem:[#allocation2 + $0x38] sm:$0xff]
    %v93 = vld [vmem:[#allocation2 + $0x40] sm:$0xff]
    %v94 = vld [vmem:[#allocation2 + $0x48] sm:$0xff]
    %v95 = vld [vmem:[#allocation2 + $0x50] sm:$0xff]
    %v96 = vld [vmem:[#allocation2 + $0x58] sm:$0xff]
    %v97 = vld [vmem:[#allocation2 + $0x60] sm:$0xff]
    %v98 = vld [vmem:[#allocation2 + $0x68] sm:$0xff]
    %v99 = vld [vmem:[#allocation2 + $0x70] sm:$0xff]
    %v100 = vld [vmem:[#allocation2 + $0x78] sm:$0xff]
    %v101 = vld [vmem:[#allocation2 + $0x80] sm:$0xff]
    %v102 = vld [vmem:[#allocation2 + $0x88] sm:$0xff]
    %v103 = vld [vmem:[#allocation2 + $0x90] sm:$0xff]
    %v104 = vld [vmem:[#allocation2 + $0x98] sm:$0xff]
    %v105 = vld [vmem:[#allocation2 + $0xa0] sm:$0xff]
    %v106 = vld [vmem:[#allocation2 + $0xa8] sm:$0xff]
    %v107 = vld [vmem:[#allocation2 + $0xb0] sm:$0xff]
    %v108 = vld [vmem:[#allocation2 + $0xb8] sm:$0xff]
    %v109 = vld [vmem:[#allocation2 + $0xc0] sm:$0xff]
    %v110 = vld [vmem:[#allocation2 + $0xc8] sm:$0xff]
    %v111 = vld [vmem:[#allocation2 + $0xd0] sm:$0xff]
    %v112 = vld [vmem:[#allocation2 + $0xd8] sm:$0xff]
    %v113 = vld [vmem:[#allocation2 + $0xe0] sm:$0xff]
    %v114 = vld [vmem:[#allocation2 + $0xe8] sm:$0xff]
    %v115 = vld [vmem:[#allocation2 + $0xf0] sm:$0xff]
    %v116 = vld [vmem:[#allocation2 + $0xf8] sm:$0xff]
    %v117 = vld [vmem:[#allocation2 + $0x100] sm:$0xff]
    %v118 = vld [vmem:[#allocation2 + $0x108] sm:$0xff]
    %v119 = vld [vmem:[#allocation2 + $0x110] sm:$0xff]
    %v120 = vld [vmem:[#allocation2 + $0x118] sm:$0xff]
    %v121 = vld [vmem:[#allocation2 + $0x120] sm:$0xff]
    %v122 = vld [vmem:[#allocation2 + $0x128] sm:$0xff]
    %v123 = vld [vmem:[#allocation2 + $0x130] sm:$0xff]
    %v124 = vld [vmem:[#allocation2 + $0x138] sm:$0xff]
    %v125 = vld [vmem:[#allocation2 + $0x140] sm:$0xff]
    %v126 = vld [vmem:[#allocation2 + $0x148] sm:$0xff]
    %v127 = vld [vmem:[#allocation2 + $0x150] sm:$0xff]
    %v128 = vld [vmem:[#allocation2 + $0x158] sm:$0xff]
    %v129 = vld [vmem:[#allocation2 + $0x160] sm:$0xff]
    %v130 = vld [vmem:[#allocation2 + $0x168] sm:$0xff]
    %v131 = vld [vmem:[#allocation2 + $0x170] sm:$0xff]
    %v132 = vld [vmem:[#allocation2 + $0x178] sm:$0xff]
    %v133 = vld [vmem:[#allocation2 + $0x180] sm:$0xff]
    %v134 = vld [vmem:[#allocation2 + $0x188] sm:$0xff]
    %v135 = vld [vmem:[#allocation2 + $0x190] sm:$0xff]
    %v136 = vld [vmem:[#allocation2 + $0x198] sm:$0xff]
    %v137 = vld [vmem:[#allocation2 + $0x1a0] sm:$0xff]
    %v138 = vld [vmem:[#allocation2 + $0x1a8] sm:$0xff]
    %v139 = vld [vmem:[#allocation2 + $0x1b0] sm:$0xff]
    %v140 = vld [vmem:[#allocation2 + $0x1b8] sm:$0xff]
    %v141 = vld [vmem:[#allocation2 + $0x1c0] sm:$0xff]
    %v142 = vld [vmem:[#allocation2 + $0x1c8] sm:$0xff]
    %v143 = vld [vmem:[#allocation2 + $0x1d0] sm:$0xff]
    %v144 = vld [vmem:[#allocation2 + $0x1d8] sm:$0xff]
    %v145 = vld [vmem:[#allocation2 + $0x1e0] sm:$0xff]
    %v146 = vld [vmem:[#allocation2 + $0x1e8] sm:$0xff]
    %v147 = vld [vmem:[#allocation2 + $0x1f0] sm:$0xff]
    %v164 = vunpack.c.l.b16 %v69
    %v165 = vunpack.c.h.b16 %v69
    %v166 = vunpack.c.l.b16 %v70
    %v167 = vunpack.c.h.b16 %v70
    %v168 = vunpack.c.l.b16 %v71
    %v169 = vunpack.c.h.b16 %v71
    %v170 = vunpack.c.l.b16 %v72
    %v171 = vunpack.c.h.b16 %v72
    %v172 = vunpack.c.l.b16 %v73
    %v173 = vunpack.c.h.b16 %v73
    %v174 = vunpack.c.l.b16 %v74
    %v175 = vunpack.c.h.b16 %v74
    %v176 = vunpack.c.l.b16 %v75
    %v177 = vunpack.c.h.b16 %v75
    %v178 = vunpack.c.l.b16 %v76
    %v179 = vunpack.c.h.b16 %v76
    %v180 = vunpack.c.l.b16 %v77
    %v181 = vunpack.c.h.b16 %v77
    %v182 = vunpack.c.l.b16 %v78
    %v183 = vunpack.c.h.b16 %v78
    %v184 = vunpack.c.l.b16 %v79
    %v185 = vunpack.c.h.b16 %v79
    %v186 = vunpack.c.l.b16 %v80
    %v187 = vunpack.c.h.b16 %v80
    %v188 = vunpack.c.l.b16 %v81
    %v189 = vunpack.c.h.b16 %v81
    %v190 = vunpack.c.l.b16 %v82
    %v191 = vunpack.c.h.b16 %v82
    %v192 = vunpack.c.l.b16 %v83
    %v193 = vunpack.c.h.b16 %v83
    %v194 = vunpack.c.l.b16 %v84
    %v195 = vunpack.c.h.b16 %v84
    %v196 = vpack.c.b16 %v166, %v164
    %v197 = vpack.c.b16 %v167, %v165
    %v198 = vpack.c.b16 %v170, %v168
    %v199 = vpack.c.b16 %v171, %v169
    %v200 = vpack.c.b16 %v174, %v172
    %v201 = vpack.c.b16 %v175, %v173
    %v202 = vpack.c.b16 %v178, %v176
    %v203 = vpack.c.b16 %v179, %v177
    %v204 = vpack.c.b16 %v182, %v180
    %v205 = vpack.c.b16 %v183, %v181
    %v206 = vpack.c.b16 %v186, %v184
    %v207 = vpack.c.b16 %v187, %v185
    %v208 = vpack.c.b16 %v190, %v188
    %v209 = vpack.c.b16 %v191, %v189
    %v210 = vpack.c.b16 %v194, %v192
    %v211 = vpack.c.b16 %v195, %v193
    %v283 = vunpack.c.l.b16 %v85
    %v284 = vunpack.c.h.b16 %v85
    %v285 = vunpack.c.l.b16 %v86
    %v286 = vunpack.c.h.b16 %v86
    %v287 = vunpack.c.l.b16 %v87
    %v288 = vunpack.c.h.b16 %v87
    %v289 = vunpack.c.l.b16 %v88
    %v290 = vunpack.c.h.b16 %v88
    %v291 = vunpack.c.l.b16 %v89
    %v292 = vunpack.c.h.b16 %v89
    %v293 = vunpack.c.l.b16 %v90
    %v294 = vunpack.c.h.b16 %v90
    %v295 = vunpack.c.l.b16 %v91
    %v296 = vunpack.c.h.b16 %v91
    %v297 = vunpack.c.l.b16 %v92
    %v298 = vunpack.c.h.b16 %v92
    %v299 = vunpack.c.l.b16 %v93
    %v300 = vunpack.c.h.b16 %v93
    %v301 = vunpack.c.l.b16 %v94
    %v302 = vunpack.c.h.b16 %v94
    %v303 = vunpack.c.l.b16 %v95
    %v304 = vunpack.c.h.b16 %v95
    %v305 = vunpack.c.l.b16 %v96
    %v306 = vunpack.c.h.b16 %v96
    %v307 = vunpack.c.l.b16 %v97
    %v308 = vunpack.c.h.b16 %v97
    %v309 = vunpack.c.l.b16 %v98
    %v310 = vunpack.c.h.b16 %v98
    %v311 = vunpack.c.l.b16 %v99
    %v312 = vunpack.c.h.b16 %v99
    %v313 = vunpack.c.l.b16 %v100
    %v314 = vunpack.c.h.b16 %v100
    %v315 = vunpack.c.l.b16 %v101
    %v316 = vunpack.c.h.b16 %v101
    %v317 = vunpack.c.l.b16 %v102
    %v318 = vunpack.c.h.b16 %v102
    %v319 = vunpack.c.l.b16 %v103
    %v320 = vunpack.c.h.b16 %v103
    %v321 = vunpack.c.l.b16 %v104
    %v322 = vunpack.c.h.b16 %v104
    %v323 = vunpack.c.l.b16 %v105
    %v324 = vunpack.c.h.b16 %v105
    %v325 = vunpack.c.l.b16 %v106
    %v326 = vunpack.c.h.b16 %v106
    %v327 = vunpack.c.l.b16 %v107
    %v328 = vunpack.c.h.b16 %v107
    %v329 = vunpack.c.l.b16 %v108
    %v330 = vunpack.c.h.b16 %v108
    %v331 = vunpack.c.l.b16 %v109
    %v332 = vunpack.c.h.b16 %v109
    %v333 = vunpack.c.l.b16 %v110
    %v334 = vunpack.c.h.b16 %v110
    %v335 = vunpack.c.l.b16 %v111
    %v336 = vunpack.c.h.b16 %v111
    %v337 = vunpack.c.l.b16 %v112
    %v338 = vunpack.c.h.b16 %v112
    %v339 = vunpack.c.l.b16 %v113
    %v340 = vunpack.c.h.b16 %v113
    %v341 = vunpack.c.l.b16 %v114
    %v342 = vunpack.c.h.b16 %v114
    %v343 = vunpack.c.l.b16 %v115
    %v344 = vunpack.c.h.b16 %v115
    %v345 = vunpack.c.l.b16 %v116
    %v346 = vunpack.c.h.b16 %v116
    %v347 = vunpack.c.l.b16 %v117
    %v348 = vunpack.c.h.b16 %v117
    %v349 = vunpack.c.l.b16 %v118
    %v350 = vunpack.c.h.b16 %v118
    %v351 = vunpack.c.l.b16 %v119
    %v352 = vunpack.c.h.b16 %v119
    %v353 = vunpack.c.l.b16 %v120
    %v354 = vunpack.c.h.b16 %v120
    %v355 = vunpack.c.l.b16 %v121
    %v356 = vunpack.c.h.b16 %v121
    %v357 = vunpack.c.l.b16 %v122
    %v358 = vunpack.c.h.b16 %v122
    %v359 = vunpack.c.l.b16 %v123
    %v360 = vunpack.c.h.b16 %v123
    %v361 = vunpack.c.l.b16 %v124
    %v362 = vunpack.c.h.b16 %v124
    %v363 = vunpack.c.l.b16 %v125
    %v364 = vunpack.c.h.b16 %v125
    %v365 = vunpack.c.l.b16 %v126
    %v366 = vunpack.c.h.b16 %v126
    %v367 = vunpack.c.l.b16 %v127
    %v368 = vunpack.c.h.b16 %v127
    %v369 = vunpack.c.l.b16 %v128
    %v370 = vunpack.c.h.b16 %v128
    %v371 = vunpack.c.l.b16 %v129
    %v372 = vunpack.c.h.b16 %v129
    %v373 = vunpack.c.l.b16 %v130
    %v374 = vunpack.c.h.b16 %v130
    %v375 = vunpack.c.l.b16 %v131
    %v376 = vunpack.c.h.b16 %v131
    %v377 = vunpack.c.l.b16 %v132
    %v378 = vunpack.c.h.b16 %v132
    %v379 = vunpack.c.l.b16 %v133
    %v380 = vunpack.c.h.b16 %v133
    %v381 = vunpack.c.l.b16 %v134
    %v382 = vunpack.c.h.b16 %v134
    %v383 = vunpack.c.l.b16 %v135
    %v384 = vunpack.c.h.b16 %v135
    %v385 = vunpack.c.l.b16 %v136
    %v386 = vunpack.c.h.b16 %v136
    %v387 = vunpack.c.l.b16 %v137
    %v388 = vunpack.c.h.b16 %v137
    %v389 = vunpack.c.l.b16 %v138
    %v390 = vunpack.c.h.b16 %v138
    %v391 = vunpack.c.l.b16 %v139
    %v392 = vunpack.c.h.b16 %v139
    %v393 = vunpack.c.l.b16 %v140
    %v394 = vunpack.c.h.b16 %v140
    %v395 = vunpack.c.l.b16 %v141
    %v396 = vunpack.c.h.b16 %v141
    %v397 = vunpack.c.l.b16 %v142
    %v398 = vunpack.c.h.b16 %v142
    %v399 = vunpack.c.l.b16 %v143
    %v400 = vunpack.c.h.b16 %v143
    %v401 = vunpack.c.l.b16 %v144
    %v402 = vunpack.c.h.b16 %v144
    %v403 = vunpack.c.l.b16 %v145
    %v404 = vunpack.c.h.b16 %v145
    %v405 = vunpack.c.l.b16 %v146
    %v406 = vunpack.c.h.b16 %v146
    %v407 = vunpack.c.l.b16 %v147
    %v408 = vunpack.c.h.b16 %v147
    %v409 = vpack.c.b16 %v289, %v283
    %v410 = vpack.c.b16 %v290, %v284
    %v411 = vpack.c.b16 %v291, %v285
    %v412 = vpack.c.b16 %v292, %v286
    %v413 = vpack.c.b16 %v293, %v287
    %v414 = vpack.c.b16 %v294, %v288
    %v415 = vpack.c.b16 %v301, %v295
    %v416 = vpack.c.b16 %v302, %v296
    %v417 = vpack.c.b16 %v303, %v297
    %v418 = vpack.c.b16 %v304, %v298
    %v419 = vpack.c.b16 %v305, %v299
    %v420 = vpack.c.b16 %v306, %v300
    %v421 = vpack.c.b16 %v313, %v307
    %v422 = vpack.c.b16 %v314, %v308
    %v423 = vpack.c.b16 %v315, %v309
    %v424 = vpack.c.b16 %v316, %v310
    %v425 = vpack.c.b16 %v317, %v311
    %v426 = vpack.c.b16 %v318, %v312
    %v427 = vpack.c.b16 %v325, %v319
    %v428 = vpack.c.b16 %v326, %v320
    %v429 = vpack.c.b16 %v327, %v321
    %v430 = vpack.c.b16 %v328, %v322
    %v431 = vpack.c.b16 %v329, %v323
    %v432 = vpack.c.b16 %v330, %v324
    %v433 = vpack.c.b16 %v337, %v331
    %v434 = vpack.c.b16 %v338, %v332
    %v435 = vpack.c.b16 %v339, %v333
    %v436 = vpack.c.b16 %v340, %v334
    %v437 = vpack.c.b16 %v341, %v335
    %v438 = vpack.c.b16 %v342, %v336
    %v439 = vpack.c.b16 %v349, %v343
    %v440 = vpack.c.b16 %v350, %v344
    %v441 = vpack.c.b16 %v351, %v345
    %v442 = vpack.c.b16 %v352, %v346
    %v443 = vpack.c.b16 %v353, %v347
    %v444 = vpack.c.b16 %v354, %v348
    %v445 = vpack.c.b16 %v361, %v355
    %v446 = vpack.c.b16 %v362, %v356
    %v447 = vpack.c.b16 %v363, %v357
    %v448 = vpack.c.b16 %v364, %v358
    %v449 = vpack.c.b16 %v365, %v359
    %v450 = vpack.c.b16 %v366, %v360
    %v451 = vpack.c.b16 %v373, %v367
    %v452 = vpack.c.b16 %v374, %v368
    %v453 = vpack.c.b16 %v375, %v369
    %v454 = vpack.c.b16 %v376, %v370
    %v455 = vpack.c.b16 %v377, %v371
    %v456 = vpack.c.b16 %v378, %v372
    %v457 = vpack.c.b16 %v385, %v379
    %v458 = vpack.c.b16 %v386, %v380
    %v459 = vpack.c.b16 %v387, %v381
    %v460 = vpack.c.b16 %v388, %v382
    %v461 = vpack.c.b16 %v389, %v383
    %v462 = vpack.c.b16 %v390, %v384
    %v463 = vpack.c.b16 %v397, %v391
    %v464 = vpack.c.b16 %v398, %v392
    %v465 = vpack.c.b16 %v399, %v393
    %v466 = vpack.c.b16 %v400, %v394
    %v467 = vpack.c.b16 %v401, %v395
    %v468 = vpack.c.b16 %v402, %v396
    %v469 = vpack.c.b16 %v403, %v403
    %v470 = vpack.c.b16 %v404, %v404
    %v471 = vpack.c.b16 %v405, %v405
    %v472 = vpack.c.b16 %v406, %v406
    %v473 = vpack.c.b16 %v407, %v407
    %v474 = vpack.c.b16 %v408, %v408
    %vm535 = vcmask 326656
    %v537 = vsel %vm535, %v197, 0
    %v540 = vsel %vm535, %v199, 0
    %v543 = vsel %vm535, %v201, 0
    %v546 = vsel %vm535, %v203, 0
    %v549 = vsel %vm535, %v205, 0
    %v552 = vsel %vm535, %v207, 0
    %v555 = vsel %vm535, %v209, 0
    %v558 = vsel %vm535, %v211, 0
    %vm560 = vcmask 1043456
    %v562 = vsel %vm560, %v469, 0
    %v565 = vsel %vm560, %v470, 0
    %v568 = vsel %vm560, %v471, 0
    %v571 = vsel %vm560, %v472, 0
    %v574 = vsel %vm560, %v473, 0
    %v577 = vsel %vm560, %v474, 0
    %579 = vmatprep.subr.bf16.mxu0 %v410
    %580 = vmatpush1.bf16.msra.mxu0 %v409
    %581 = vmatprep.subr.bf16.mxu0 %v416
    %582 = vmatpush1.bf16.msra.mxu0 %v415
    %583 = vmatprep.subr.bf16.mxu0 %v422
    %584 = vmatpush1.bf16.msra.mxu0 %v421
    %585 = vmatprep.subr.bf16.mxu0 %v428
    %586 = vmatpush1.bf16.msra.mxu0 %v427
    %587 = vmatprep.subr.bf16.mxu0 %v434
    %588 = vmatpush1.bf16.msra.mxu0 %v433
    %589 = vmatprep.subr.bf16.mxu0 %v440
    %590 = vmatpush1.bf16.msra.mxu0 %v439
    %591 = vmatprep.subr.bf16.mxu0 %v446
    %592 = vmatpush1.bf16.msra.mxu0 %v445
    %593 = vmatprep.subr.bf16.mxu0 %v452
    %594 = vmatpush1.bf16.msra.mxu0 %v451
    %595 = vmatprep.subr.bf16.mxu0 %v458
    %596 = vmatpush1.bf16.msra.mxu0 %v457
    %597 = vmatprep.subr.bf16.mxu0 %v464
    %598 = vmatpush1.bf16.msra.mxu0 %v463
    %599 = vmatprep.subr.bf16.mxu0 %v565
    %600 = vmatpush1.bf16.msra.mxu0 %v562
    %601 = vmatprep.subr.bf16.mxu0 0
    %602 = vmatpush1.bf16.msra.mxu0 0
    %603 = vmatprep.subr.bf16.mxu0 0
    %604 = vmatpush1.bf16.msra.mxu0 0
    %605 = vmatprep.subr.bf16.mxu0 0
    %606 = vmatpush1.bf16.msra.mxu0 0
    %607 = vmatprep.subr.bf16.mxu0 0
    %608 = vmatpush1.bf16.msra.mxu0 0
    %609 = vmatprep.subr.bf16.mxu0 0
    %610 = vmatpush1.bf16.msra.mxu0 0
    %611 = vmatprep.mubr.bf16.mxu0 %v537
    %612 = vmatmul.mubr.bf16.gmra.mrb[0].mxu0 %v196
    %v613 = vpop.f32.mrb[0].mxu0
    %v614 = vadd.f32 0.0, %v613
    %v615 = vpop.f32.mrb[0].mxu0
    %v616 = vadd.f32 0.0, %v615
    %v617 = vpop.f32.mrb[0].mxu0
    %v618 = vadd.f32 0.0, %v617
    %v619 = vpop.f32.mrb[0].mxu0
    %v620 = vadd.f32 0.0, %v619
    %621 = vmatprep.mubr.bf16.mxu0 %v540
    %622 = vmatmul.mubr.bf16.gmra.mrb[0].mxu0 %v198
    %v623 = vpop.f32.mrb[0].mxu0
    %v624 = vadd.f32 0.0, %v623
    %v625 = vpop.f32.mrb[0].mxu0
    %v626 = vadd.f32 0.0, %v625
    %v627 = vpop.f32.mrb[0].mxu0
    %v628 = vadd.f32 0.0, %v627
    %v629 = vpop.f32.mrb[0].mxu0
    %v630 = vadd.f32 0.0, %v629
    %631 = vmatprep.mubr.bf16.mxu0 %v543
    %632 = vmatmul.mubr.bf16.gmra.mrb[0].mxu0 %v200
    %v633 = vpop.f32.mrb[0].mxu0
    %v634 = vadd.f32 0.0, %v633
    %v635 = vpop.f32.mrb[0].mxu0
    %v636 = vadd.f32 0.0, %v635
    %v637 = vpop.f32.mrb[0].mxu0
    %v638 = vadd.f32 0.0, %v637
    %v639 = vpop.f32.mrb[0].mxu0
    %v640 = vadd.f32 0.0, %v639
    %641 = vmatprep.mubr.bf16.mxu0 %v546
    %642 = vmatmul.mubr.bf16.gmra.mrb[0].mxu0 %v202
    %v643 = vpop.f32.mrb[0].mxu0
    %v644 = vadd.f32 0.0, %v643
    %v645 = vpop.f32.mrb[0].mxu0
    %v646 = vadd.f32 0.0, %v645
    %v647 = vpop.f32.mrb[0].mxu0
    %v648 = vadd.f32 0.0, %v647
    %v649 = vpop.f32.mrb[0].mxu0
    %v650 = vadd.f32 0.0, %v649
    %651 = vmatprep.mubr.bf16.mxu0 %v549
    %652 = vmatmul.mubr.bf16.gmra.mrb[0].mxu0 %v204
    %v653 = vpop.f32.mrb[0].mxu0
    %v654 = vadd.f32 0.0, %v653
    %v655 = vpop.f32.mrb[0].mxu0
    %v656 = vadd.f32 0.0, %v655
    %v657 = vpop.f32.mrb[0].mxu0
    %v658 = vadd.f32 0.0, %v657
    %v659 = vpop.f32.mrb[0].mxu0
    %v660 = vadd.f32 0.0, %v659
    %661 = vmatprep.mubr.bf16.mxu0 %v552
    %662 = vmatmul.mubr.bf16.gmra.mrb[0].mxu0 %v206
    %v663 = vpop.f32.mrb[0].mxu0
    %v664 = vadd.f32 0.0, %v663
    %v665 = vpop.f32.mrb[0].mxu0
    %v666 = vadd.f32 0.0, %v665
    %v667 = vpop.f32.mrb[0].mxu0
    %v668 = vadd.f32 0.0, %v667
    %v669 = vpop.f32.mrb[0].mxu0
    %v670 = vadd.f32 0.0, %v669
    %671 = vmatprep.mubr.bf16.mxu0 %v555
    %672 = vmatmul.mubr.bf16.gmra.mrb[0].mxu0 %v208
    %v673 = vpop.f32.mrb[0].mxu0
    %v674 = vadd.f32 0.0, %v673
    %v675 = vpop.f32.mrb[0].mxu0
    %v676 = vadd.f32 0.0, %v675
    %v677 = vpop.f32.mrb[0].mxu0
    %v678 = vadd.f32 0.0, %v677
    %v679 = vpop.f32.mrb[0].mxu0
    %v680 = vadd.f32 0.0, %v679
    %681 = vmatprep.mubr.bf16.mxu0 %v558
    %682 = vmatmul.mubr.bf16.gmra.mrb[0].mxu0 %v210
    %v683 = vpop.f32.mrb[0].mxu0
    %v684 = vadd.f32 0.0, %v683
    %v685 = vpop.f32.mrb[0].mxu0
    %v686 = vadd.f32 0.0, %v685
    %v687 = vpop.f32.mrb[0].mxu0
    %v688 = vadd.f32 0.0, %v687
    %v689 = vpop.f32.mrb[0].mxu0
    %v690 = vadd.f32 0.0, %v689
    %691 = vdwg.mxu0
    %692 = vmatprep.subr.bf16.mxu0 %v412
    %693 = vmatpush1.bf16.msra.mxu0 %v411
    %694 = vmatprep.subr.bf16.mxu0 %v418
    %695 = vmatpush1.bf16.msra.mxu0 %v417
    %696 = vmatprep.subr.bf16.mxu0 %v424
    %697 = vmatpush1.bf16.msra.mxu0 %v423
    %698 = vmatprep.subr.bf16.mxu0 %v430
    %699 = vmatpush1.bf16.msra.mxu0 %v429
    %700 = vmatprep.subr.bf16.mxu0 %v436
    %701 = vmatpush1.bf16.msra.mxu0 %v435
    %702 = vmatprep.subr.bf16.mxu0 %v442
    %703 = vmatpush1.bf16.msra.mxu0 %v441
    %704 = vmatprep.subr.bf16.mxu0 %v448
    %705 = vmatpush1.bf16.msra.mxu0 %v447
    %706 = vmatprep.subr.bf16.mxu0 %v454
    %707 = vmatpush1.bf16.msra.mxu0 %v453
    %708 = vmatprep.subr.bf16.mxu0 %v460
    %709 = vmatpush1.bf16.msra.mxu0 %v459
    %710 = vmatprep.subr.bf16.mxu0 %v466
    %711 = vmatpush1.bf16.msra.mxu0 %v465
    %712 = vmatprep.subr.bf16.mxu0 %v571
    %713 = vmatpush1.bf16.msra.mxu0 %v568
    %714 = vmatprep.subr.bf16.mxu0 0
    %715 = vmatpush1.bf16.msra.mxu0 0
    %716 = vmatprep.subr.bf16.mxu0 0
    %717 = vmatpush1.bf16.msra.mxu0 0
    %718 = vmatprep.subr.bf16.mxu0 0
    %719 = vmatpush1.bf16.msra.mxu0 0
    %720 = vmatprep.subr.bf16.mxu0 0
    %721 = vmatpush1.bf16.msra.mxu0 0
    %722 = vmatprep.subr.bf16.mxu0 0
    %723 = vmatpush1.bf16.msra.mxu0 0
    %724 = vmatprep.mubr.bf16.mxu0 %v537
    %725 = vmatmul.mubr.bf16.gmra.mrb[0].mxu0 %v196
    %v726 = vpop.f32.mrb[0].mxu0
    %v727 = vadd.f32 0.0, %v726
    %v728 = vpop.f32.mrb[0].mxu0
    %v729 = vadd.f32 0.0, %v728
    %v730 = vpop.f32.mrb[0].mxu0
    %v731 = vadd.f32 0.0, %v730
    %v732 = vpop.f32.mrb[0].mxu0
    %v733 = vadd.f32 0.0, %v732
    %734 = vmatprep.mubr.bf16.mxu0 %v540
    %735 = vmatmul.mubr.bf16.gmra.mrb[0].mxu0 %v198
    %v736 = vpop.f32.mrb[0].mxu0
    %v737 = vadd.f32 0.0, %v736
    %v738 = vpop.f32.mrb[0].mxu0
    %v739 = vadd.f32 0.0, %v738
    %v740 = vpop.f32.mrb[0].mxu0
    %v741 = vadd.f32 0.0, %v740
    %v742 = vpop.f32.mrb[0].mxu0
    %v743 = vadd.f32 0.0, %v742
    %744 = vmatprep.mubr.bf16.mxu0 %v543
    %745 = vmatmul.mubr.bf16.gmra.mrb[0].mxu0 %v200
    %v746 = vpop.f32.mrb[0].mxu0
    %v747 = vadd.f32 0.0, %v746
    %v748 = vpop.f32.mrb[0].mxu0
    %v749 = vadd.f32 0.0, %v748
    %v750 = vpop.f32.mrb[0].mxu0
    %v751 = vadd.f32 0.0, %v750
    %v752 = vpop.f32.mrb[0].mxu0
    %v753 = vadd.f32 0.0, %v752
    %754 = vmatprep.mubr.bf16.mxu0 %v546
    %755 = vmatmul.mubr.bf16.gmra.mrb[0].mxu0 %v202
    %v756 = vpop.f32.mrb[0].mxu0
    %v757 = vadd.f32 0.0, %v756
    %v758 = vpop.f32.mrb[0].mxu0
    %v759 = vadd.f32 0.0, %v758
    %v760 = vpop.f32.mrb[0].mxu0
    %v761 = vadd.f32 0.0, %v760
    %v762 = vpop.f32.mrb[0].mxu0
    %v763 = vadd.f32 0.0, %v762
    %764 = vmatprep.mubr.bf16.mxu0 %v549
    %765 = vmatmul.mubr.bf16.gmra.mrb[0].mxu0 %v204
    %v766 = vpop.f32.mrb[0].mxu0
    %v767 = vadd.f32 0.0, %v766
    %v768 = vpop.f32.mrb[0].mxu0
    %v769 = vadd.f32 0.0, %v768
    %v770 = vpop.f32.mrb[0].mxu0
    %v771 = vadd.f32 0.0, %v770
    %v772 = vpop.f32.mrb[0].mxu0
    %v773 = vadd.f32 0.0, %v772
    %774 = vmatprep.mubr.bf16.mxu0 %v552
    %775 = vmatmul.mubr.bf16.gmra.mrb[0].mxu0 %v206
    %v776 = vpop.f32.mrb[0].mxu0
    %v777 = vadd.f32 0.0, %v776
    %v778 = vpop.f32.mrb[0].mxu0
    %v779 = vadd.f32 0.0, %v778
    %v780 = vpop.f32.mrb[0].mxu0
    %v781 = vadd.f32 0.0, %v780
    %v782 = vpop.f32.mrb[0].mxu0
    %v783 = vadd.f32 0.0, %v782
    %784 = vmatprep.mubr.bf16.mxu0 %v555
    %785 = vmatmul.mubr.bf16.gmra.mrb[0].mxu0 %v208
    %v786 = vpop.f32.mrb[0].mxu0
    %v787 = vadd.f32 0.0, %v786
    %v788 = vpop.f32.mrb[0].mxu0
    %v789 = vadd.f32 0.0, %v788
    %v790 = vpop.f32.mrb[0].mxu0
    %v791 = vadd.f32 0.0, %v790
    %v792 = vpop.f32.mrb[0].mxu0
    %v793 = vadd.f32 0.0, %v792
    %794 = vmatprep.mubr.bf16.mxu0 %v558
    %795 = vmatmul.mubr.bf16.gmra.mrb[0].mxu0 %v210
    %v796 = vpop.f32.mrb[0].mxu0
    %v797 = vadd.f32 0.0, %v796
    %v798 = vpop.f32.mrb[0].mxu0
    %v799 = vadd.f32 0.0, %v798
    %v800 = vpop.f32.mrb[0].mxu0
    %v801 = vadd.f32 0.0, %v800
    %v802 = vpop.f32.mrb[0].mxu0
    %v803 = vadd.f32 0.0, %v802
    %804 = vdwg.mxu0
    %805 = vmatprep.subr.bf16.mxu0 %v414
    %806 = vmatpush1.bf16.msra.mxu0 %v413
    %807 = vmatprep.subr.bf16.mxu0 %v420
    %808 = vmatpush1.bf16.msra.mxu0 %v419
    %809 = vmatprep.subr.bf16.mxu0 %v426
    %810 = vmatpush1.bf16.msra.mxu0 %v425
    %811 = vmatprep.subr.bf16.mxu0 %v432
    %812 = vmatpush1.bf16.msra.mxu0 %v431
    %813 = vmatprep.subr.bf16.mxu0 %v438
    %814 = vmatpush1.bf16.msra.mxu0 %v437
    %815 = vmatprep.subr.bf16.mxu0 %v444
    %816 = vmatpush1.bf16.msra.mxu0 %v443
    %817 = vmatprep.subr.bf16.mxu0 %v450
    %818 = vmatpush1.bf16.msra.mxu0 %v449
    %819 = vmatprep.subr.bf16.mxu0 %v456
    %820 = vmatpush1.bf16.msra.mxu0 %v455
    %821 = vmatprep.subr.bf16.mxu0 %v462
    %822 = vmatpush1.bf16.msra.mxu0 %v461
    %823 = vmatprep.subr.bf16.mxu0 %v468
    %824 = vmatpush1.bf16.msra.mxu0 %v467
    %825 = vmatprep.subr.bf16.mxu0 %v577
    %826 = vmatpush1.bf16.msra.mxu0 %v574
    %827 = vmatprep.subr.bf16.mxu0 0
    %828 = vmatpush1.bf16.msra.mxu0 0
    %829 = vmatprep.subr.bf16.mxu0 0
    %830 = vmatpush1.bf16.msra.mxu0 0
    %831 = vmatprep.subr.bf16.mxu0 0
    %832 = vmatpush1.bf16.msra.mxu0 0
    %833 = vmatprep.subr.bf16.mxu0 0
    %834 = vmatpush1.bf16.msra.mxu0 0
    %835 = vmatprep.subr.bf16.mxu0 0
    %836 = vmatpush1.bf16.msra.mxu0 0
    %837 = vmatprep.mubr.bf16.mxu0 %v537
    %838 = vmatmul.mubr.bf16.gmra.mrb[0].mxu0 %v196
    %v839 = vpop.f32.mrb[0].mxu0
    %v840 = vadd.f32 0.0, %v839
    %v841 = vpop.f32.mrb[0].mxu0
    %v842 = vadd.f32 0.0, %v841
    %v843 = vpop.f32.mrb[0].mxu0
    %v844 = vadd.f32 0.0, %v843
    %v845 = vpop.f32.mrb[0].mxu0
    %v846 = vadd.f32 0.0, %v845
    %847 = vmatprep.mubr.bf16.mxu0 %v540
    %848 = vmatmul.mubr.bf16.gmra.mrb[0].mxu0 %v198
    %v849 = vpop.f32.mrb[0].mxu0
    %v850 = vadd.f32 0.0, %v849
    %v851 = vpop.f32.mrb[0].mxu0
    %v852 = vadd.f32 0.0, %v851
    %v853 = vpop.f32.mrb[0].mxu0
    %v854 = vadd.f32 0.0, %v853
    %v855 = vpop.f32.mrb[0].mxu0
    %v856 = vadd.f32 0.0, %v855
    %857 = vmatprep.mubr.bf16.mxu0 %v543
    %858 = vmatmul.mubr.bf16.gmra.mrb[0].mxu0 %v200
    %v859 = vpop.f32.mrb[0].mxu0
    %v860 = vadd.f32 0.0, %v859
    %v861 = vpop.f32.mrb[0].mxu0
    %v862 = vadd.f32 0.0, %v861
    %v863 = vpop.f32.mrb[0].mxu0
    %v864 = vadd.f32 0.0, %v863
    %v865 = vpop.f32.mrb[0].mxu0
    %v866 = vadd.f32 0.0, %v865
    %867 = vmatprep.mubr.bf16.mxu0 %v546
    %868 = vmatmul.mubr.bf16.gmra.mrb[0].mxu0 %v202
    %v869 = vpop.f32.mrb[0].mxu0
    %v870 = vadd.f32 0.0, %v869
    %v871 = vpop.f32.mrb[0].mxu0
    %v872 = vadd.f32 0.0, %v871
    %v873 = vpop.f32.mrb[0].mxu0
    %v874 = vadd.f32 0.0, %v873
    %v875 = vpop.f32.mrb[0].mxu0
    %v876 = vadd.f32 0.0, %v875
    %877 = vmatprep.mubr.bf16.mxu0 %v549
    %878 = vmatmul.mubr.bf16.gmra.mrb[0].mxu0 %v204
    %v879 = vpop.f32.mrb[0].mxu0
    %v880 = vadd.f32 0.0, %v879
    %v881 = vpop.f32.mrb[0].mxu0
    %v882 = vadd.f32 0.0, %v881
    %v883 = vpop.f32.mrb[0].mxu0
    %v884 = vadd.f32 0.0, %v883
    %v885 = vpop.f32.mrb[0].mxu0
    %v886 = vadd.f32 0.0, %v885
    %887 = vmatprep.mubr.bf16.mxu0 %v552
    %888 = vmatmul.mubr.bf16.gmra.mrb[0].mxu0 %v206
    %v889 = vpop.f32.mrb[0].mxu0
    %v890 = vadd.f32 0.0, %v889
    %v891 = vpop.f32.mrb[0].mxu0
    %v892 = vadd.f32 0.0, %v891
    %v893 = vpop.f32.mrb[0].mxu0
    %v894 = vadd.f32 0.0, %v893
    %v895 = vpop.f32.mrb[0].mxu0
    %v896 = vadd.f32 0.0, %v895
    %897 = vmatprep.mubr.bf16.mxu0 %v555
    %898 = vmatmul.mubr.bf16.gmra.mrb[0].mxu0 %v208
    %v899 = vpop.f32.mrb[0].mxu0
    %v900 = vadd.f32 0.0, %v899
    %v901 = vpop.f32.mrb[0].mxu0
    %v902 = vadd.f32 0.0, %v901
    %v903 = vpop.f32.mrb[0].mxu0
    %v904 = vadd.f32 0.0, %v903
    %v905 = vpop.f32.mrb[0].mxu0
    %v906 = vadd.f32 0.0, %v905
    %907 = vmatprep.mubr.bf16.mxu0 %v558
    %908 = vmatmul.mubr.bf16.gmra.mrb[0].mxu0 %v210
    %v909 = vpop.f32.mrb[0].mxu0
    %v910 = vadd.f32 0.0, %v909
    %v911 = vpop.f32.mrb[0].mxu0
    %v912 = vadd.f32 0.0, %v911
    %v913 = vpop.f32.mrb[0].mxu0
    %v914 = vadd.f32 0.0, %v913
    %v915 = vpop.f32.mrb[0].mxu0
    %v916 = vadd.f32 0.0, %v915
    %917 = vdwg.mxu0
    %v918 = vmax.f32 %v614, %v729
    %v919 = vmax.f32 %v616, %v840
    %v920 = vmax.f32 %v727, %v842
    %v921 = vmax.f32 %v618, %v733
    %v922 = vmax.f32 %v620, %v844
    %v923 = vmax.f32 %v731, %v846
    %v924 = vmax.f32 %v624, %v739
    %v925 = vmax.f32 %v626, %v850
    %v926 = vmax.f32 %v737, %v852
    %v927 = vmax.f32 %v628, %v743
    %v928 = vmax.f32 %v630, %v854
    %v929 = vmax.f32 %v741, %v856
    %v930 = vmax.f32 %v634, %v749
    %v931 = vmax.f32 %v636, %v860
    %v932 = vmax.f32 %v747, %v862
    %v933 = vmax.f32 %v638, %v753
    %v934 = vmax.f32 %v640, %v864
    %v935 = vmax.f32 %v751, %v866
    %v936 = vmax.f32 %v644, %v759
    %v937 = vmax.f32 %v646, %v870
    %v938 = vmax.f32 %v757, %v872
    %v939 = vmax.f32 %v648, %v763
    %v940 = vmax.f32 %v650, %v874
    %v941 = vmax.f32 %v761, %v876
    %v942 = vmax.f32 %v654, %v769
    %v943 = vmax.f32 %v656, %v880
    %v944 = vmax.f32 %v767, %v882
    %v945 = vmax.f32 %v658, %v773
    %v946 = vmax.f32 %v660, %v884
    %v947 = vmax.f32 %v771, %v886
    %v948 = vmax.f32 %v664, %v779
    %v949 = vmax.f32 %v666, %v890
    %v950 = vmax.f32 %v777, %v892
    %v951 = vmax.f32 %v668, %v783
    %v952 = vmax.f32 %v670, %v894
    %v953 = vmax.f32 %v781, %v896
    %v954 = vmax.f32 %v674, %v789
    %v955 = vmax.f32 %v676, %v900
    %v956 = vmax.f32 %v787, %v902
    %v957 = vmax.f32 %v678, %v793
    %v958 = vmax.f32 %v680, %v904
    %v959 = vmax.f32 %v791, %v906
    %v960 = vmax.f32 %v684, %v799
    %v961 = vmax.f32 %v686, %v910
    %v962 = vmax.f32 %v797, %v912
    %v963 = vmax.f32 %v688, %v803
    %v964 = vmax.f32 %v690, %v914
    %v965 = vmax.f32 %v801, %v916
    %998 = vrot.lane.b32.xlu0 %v919, 64
    %v999 = vpop.permute.xlu0 %998
    %1000 = vrot.lane.b32.xlu0 %v920, 64
    %v1001 = vpop.permute.xlu0 %1000
    %1002 = vrot.lane.b32.xlu0 %v922, 64
    %v1003 = vpop.permute.xlu0 %1002
    %1004 = vrot.lane.b32.xlu0 %v923, 64
    %v1005 = vpop.permute.xlu0 %1004
    %1006 = vrot.lane.b32.xlu0 %v925, 64
    %v1007 = vpop.permute.xlu0 %1006
    %1008 = vrot.lane.b32.xlu0 %v926, 64
    %v1009 = vpop.permute.xlu0 %1008
    %1010 = vrot.lane.b32.xlu0 %v928, 64
    %v1011 = vpop.permute.xlu0 %1010
    %1012 = vrot.lane.b32.xlu0 %v929, 64
    %v1013 = vpop.permute.xlu0 %1012
    %1014 = vrot.lane.b32.xlu0 %v931, 64
    %v1015 = vpop.permute.xlu0 %1014
    %1016 = vrot.lane.b32.xlu0 %v932, 64
    %v1017 = vpop.permute.xlu0 %1016
    %1018 = vrot.lane.b32.xlu0 %v934, 64
    %v1019 = vpop.permute.xlu0 %1018
    %1020 = vrot.lane.b32.xlu0 %v935, 64
    %v1021 = vpop.permute.xlu0 %1020
    %1022 = vrot.lane.b32.xlu0 %v937, 64
    %v1023 = vpop.permute.xlu0 %1022
    %1024 = vrot.lane.b32.xlu0 %v938, 64
    %v1025 = vpop.permute.xlu0 %1024
    %1026 = vrot.lane.b32.xlu0 %v940, 64
    %v1027 = vpop.permute.xlu0 %1026
    %1028 = vrot.lane.b32.xlu0 %v941, 64
    %v1029 = vpop.permute.xlu0 %1028
    %1030 = vrot.lane.b32.xlu0 %v943, 64
    %v1031 = vpop.permute.xlu0 %1030
    %1032 = vrot.lane.b32.xlu0 %v944, 64
    %v1033 = vpop.permute.xlu0 %1032
    %1034 = vrot.lane.b32.xlu0 %v946, 64
    %v1035 = vpop.permute.xlu0 %1034
    %1036 = vrot.lane.b32.xlu0 %v947, 64
    %v1037 = vpop.permute.xlu0 %1036
    %1038 = vrot.lane.b32.xlu0 %v949, 64
    %v1039 = vpop.permute.xlu0 %1038
    %1040 = vrot.lane.b32.xlu0 %v950, 64
    %v1041 = vpop.permute.xlu0 %1040
    %1042 = vrot.lane.b32.xlu0 %v952, 64
    %v1043 = vpop.permute.xlu0 %1042
    %1044 = vrot.lane.b32.xlu0 %v953, 64
    %v1045 = vpop.permute.xlu0 %1044
    %1046 = vrot.lane.b32.xlu0 %v955, 64
    %v1047 = vpop.permute.xlu0 %1046
    %1048 = vrot.lane.b32.xlu0 %v956, 64
    %v1049 = vpop.permute.xlu0 %1048
    %1050 = vrot.lane.b32.xlu0 %v958, 64
    %v1051 = vpop.permute.xlu0 %1050
    %1052 = vrot.lane.b32.xlu0 %v959, 64
    %v1053 = vpop.permute.xlu0 %1052
    %1054 = vrot.lane.b32.xlu0 %v961, 64
    %v1055 = vpop.permute.xlu0 %1054
    %1056 = vrot.lane.b32.xlu0 %v962, 64
    %v1057 = vpop.permute.xlu0 %1056
    %1058 = vrot.lane.b32.xlu0 %v964, 64
    %v1059 = vpop.permute.xlu0 %1058
    %1060 = vrot.lane.b32.xlu0 %v965, 64
    %v1061 = vpop.permute.xlu0 %1060
    %vm1062 = vcmask 523264
    %v1063 = vsel %vm1062, %v999, %v1001
    %v1064 = vsel %vm1062, %v1003, %v1005
    %v1065 = vsel %vm1062, %v1007, %v1009
    %v1066 = vsel %vm1062, %v1011, %v1013
    %v1067 = vsel %vm1062, %v1015, %v1017
    %v1068 = vsel %vm1062, %v1019, %v1021
    %v1069 = vsel %vm1062, %v1023, %v1025
    %v1070 = vsel %vm1062, %v1027, %v1029
    %v1071 = vsel %vm1062, %v1031, %v1033
    %v1072 = vsel %vm1062, %v1035, %v1037
    %v1073 = vsel %vm1062, %v1039, %v1041
    %v1074 = vsel %vm1062, %v1043, %v1045
    %v1075 = vsel %vm1062, %v1047, %v1049
    %v1076 = vsel %vm1062, %v1051, %v1053
    %v1077 = vsel %vm1062, %v1055, %v1057
    %v1078 = vsel %vm1062, %v1059, %v1061
    %v1111 = vmax.f32 %v918, %v1063
    %v1112 = vmax.f32 %v919, %v1001
    %v1113 = vmax.f32 %v921, %v1064
    %v1114 = vmax.f32 %v922, %v1005
    %v1115 = vmax.f32 %v924, %v1065
    %v1116 = vmax.f32 %v925, %v1009
    %v1117 = vmax.f32 %v927, %v1066
    %v1118 = vmax.f32 %v928, %v1013
    %v1119 = vmax.f32 %v930, %v1067
    %v1120 = vmax.f32 %v931, %v1017
    %v1121 = vmax.f32 %v933, %v1068
    %v1122 = vmax.f32 %v934, %v1021
    %v1123 = vmax.f32 %v936, %v1069
    %v1124 = vmax.f32 %v937, %v1025
    %v1125 = vmax.f32 %v939, %v1070
    %v1126 = vmax.f32 %v940, %v1029
    %v1127 = vmax.f32 %v942, %v1071
    %v1128 = vmax.f32 %v943, %v1033
    %v1129 = vmax.f32 %v945, %v1072
    %v1130 = vmax.f32 %v946, %v1037
    %v1131 = vmax.f32 %v948, %v1073
    %v1132 = vmax.f32 %v949, %v1041
    %v1133 = vmax.f32 %v951, %v1074
    %v1134 = vmax.f32 %v952, %v1045
    %v1135 = vmax.f32 %v954, %v1075
    %v1136 = vmax.f32 %v955, %v1049
    %v1137 = vmax.f32 %v957, %v1076
    %v1138 = vmax.f32 %v958, %v1053
    %v1139 = vmax.f32 %v960, %v1077
    %v1140 = vmax.f32 %v961, %v1057
    %v1141 = vmax.f32 %v963, %v1078
    %v1142 = vmax.f32 %v964, %v1061
    %v1143 = vld [vmem:[%s2] sm:$0x3]
    %v1145 = vlaneseq
    %v1146 = vshrl.u32 %v1145, 7
    %v1147 = vsub.s32 0, %v1146
    %v1148 = vrot.slane %v1143, %v1147
    %v1149 = vlaneseq
    %v1150 = vshrl.u32 %v1149, 7
    %v1151 = vsub.s32 1, %v1150
    %v1152 = vrot.slane %v1143, %v1151
    %v1155 = vadd.f32 %v1111, %v1148
    %v1156 = vadd.f32 %v1112, %v1152
    %v1157 = vadd.f32 %v1113, %v1148
    %v1158 = vadd.f32 %v1114, %v1152
    %v1159 = vadd.f32 %v1115, %v1148
    %v1160 = vadd.f32 %v1116, %v1152
    %v1161 = vadd.f32 %v1117, %v1148
    %v1162 = vadd.f32 %v1118, %v1152
    %v1163 = vadd.f32 %v1119, %v1148
    %v1164 = vadd.f32 %v1120, %v1152
    %v1165 = vadd.f32 %v1121, %v1148
    %v1166 = vadd.f32 %v1122, %v1152
    %v1167 = vadd.f32 %v1123, %v1148
    %v1168 = vadd.f32 %v1124, %v1152
    %v1169 = vadd.f32 %v1125, %v1148
    %v1170 = vadd.f32 %v1126, %v1152
    %v1171 = vadd.f32 %v1127, %v1148
    %v1172 = vadd.f32 %v1128, %v1152
    %v1173 = vadd.f32 %v1129, %v1148
    %v1174 = vadd.f32 %v1130, %v1152
    %v1175 = vadd.f32 %v1131, %v1148
    %v1176 = vadd.f32 %v1132, %v1152
    %v1177 = vadd.f32 %v1133, %v1148
    %v1178 = vadd.f32 %v1134, %v1152
    %v1179 = vadd.f32 %v1135, %v1148
    %v1180 = vadd.f32 %v1136, %v1152
    %v1181 = vadd.f32 %v1137, %v1148
    %v1182 = vadd.f32 %v1138, %v1152
    %v1183 = vadd.f32 %v1139, %v1148
    %v1184 = vadd.f32 %v1140, %v1152
    %v1185 = vadd.f32 %v1141, %v1148
    %v1186 = vadd.f32 %v1142, %v1152
    %v1187 = vmax.f32 %v1155, 0.0
    %v1188 = vmax.f32 %v1156, 0.0
    %v1189 = vmax.f32 %v1157, 0.0
    %v1190 = vmax.f32 %v1158, 0.0
    %v1191 = vmax.f32 %v1159, 0.0
    %v1192 = vmax.f32 %v1160, 0.0
    %v1193 = vmax.f32 %v1161, 0.0
    %v1194 = vmax.f32 %v1162, 0.0
    %v1195 = vmax.f32 %v1163, 0.0
    %v1196 = vmax.f32 %v1164, 0.0
    %v1197 = vmax.f32 %v1165, 0.0
    %v1198 = vmax.f32 %v1166, 0.0
    %v1199 = vmax.f32 %v1167, 0.0
    %v1200 = vmax.f32 %v1168, 0.0
    %v1201 = vmax.f32 %v1169, 0.0
    %v1202 = vmax.f32 %v1170, 0.0
    %v1203 = vmax.f32 %v1171, 0.0
    %v1204 = vmax.f32 %v1172, 0.0
    %v1205 = vmax.f32 %v1173, 0.0
    %v1206 = vmax.f32 %v1174, 0.0
    %v1207 = vmax.f32 %v1175, 0.0
    %v1208 = vmax.f32 %v1176, 0.0
    %v1209 = vmax.f32 %v1177, 0.0
    %v1210 = vmax.f32 %v1178, 0.0
    %v1211 = vmax.f32 %v1179, 0.0
    %v1212 = vmax.f32 %v1180, 0.0
    %v1213 = vmax.f32 %v1181, 0.0
    %v1214 = vmax.f32 %v1182, 0.0
    %v1215 = vmax.f32 %v1183, 0.0
    %v1216 = vmax.f32 %v1184, 0.0
    %v1217 = vmax.f32 %v1185, 0.0
    %v1218 = vmax.f32 %v1186, 0.0
    %v1219 = vpack.c.bf16 %v1189, %v1187
    %v1220 = vpack.c.bf16 %v1190, %v1188
    %v1221 = vpack.c.bf16 %v1193, %v1191
    %v1222 = vpack.c.bf16 %v1194, %v1192
    %v1223 = vpack.c.bf16 %v1197, %v1195
    %v1224 = vpack.c.bf16 %v1198, %v1196
    %v1225 = vpack.c.bf16 %v1201, %v1199
    %v1226 = vpack.c.bf16 %v1202, %v1200
    %v1227 = vpack.c.bf16 %v1205, %v1203
    %v1228 = vpack.c.bf16 %v1206, %v1204
    %v1229 = vpack.c.bf16 %v1209, %v1207
    %v1230 = vpack.c.bf16 %v1210, %v1208
    %v1231 = vpack.c.bf16 %v1213, %v1211
    %v1232 = vpack.c.bf16 %v1214, %v1212
    %v1233 = vpack.c.bf16 %v1217, %v1215
    %v1234 = vpack.c.bf16 %v1218, %v1216
    %v1251 = vunpack.c.l.b16 %v1219
    %v1252 = vunpack.c.l.b16 %v1220
    %v1253 = vunpack.c.l.b16 %v1221
    %v1254 = vunpack.c.l.b16 %v1222
    %v1255 = vunpack.c.l.b16 %v1223
    %v1256 = vunpack.c.l.b16 %v1224
    %v1257 = vunpack.c.l.b16 %v1225
    %v1258 = vunpack.c.l.b16 %v1226
    %v1259 = vunpack.c.l.b16 %v1227
    %v1260 = vunpack.c.l.b16 %v1228
    %v1261 = vunpack.c.l.b16 %v1229
    %v1262 = vunpack.c.l.b16 %v1230
    %v1263 = vunpack.c.l.b16 %v1231
    %v1264 = vunpack.c.l.b16 %v1232
    %v1265 = vunpack.c.l.b16 %v1233
    %v1266 = vunpack.c.l.b16 %v1234
    %v1267 = vld [vmem:[#allocation5] sm:$0xff]
    %v1268 = vld [vmem:[#allocation5 + $0x8] sm:$0xff]
    %v1269 = vld [vmem:[#allocation5 + $0x10] sm:$0xff]
    %v1270 = vld [vmem:[#allocation5 + $0x18] sm:$0xff]
    %v1271 = vld [vmem:[#allocation5 + $0x20] sm:$0xff]
    %v1272 = vld [vmem:[#allocation5 + $0x28] sm:$0xff]
    %v1273 = vld [vmem:[#allocation5 + $0x30] sm:$0xff]
    %v1274 = vld [vmem:[#allocation5 + $0x38] sm:$0xff]
    %v1275 = vld [vmem:[#allocation5 + $0x40] sm:$0xff]
    %v1276 = vld [vmem:[#allocation5 + $0x48] sm:$0xff]
    %v1277 = vld [vmem:[#allocation5 + $0x50] sm:$0xff]
    %v1278 = vld [vmem:[#allocation5 + $0x58] sm:$0xff]
    %v1279 = vld [vmem:[#allocation5 + $0x60] sm:$0xff]
    %v1280 = vld [vmem:[#allocation5 + $0x68] sm:$0xff]
    %v1281 = vld [vmem:[#allocation5 + $0x70] sm:$0xff]
    %v1282 = vld [vmem:[#allocation5 + $0x78] sm:$0xff]
    %v1283 = vld [vmem:[#allocation5 + $0x80] sm:$0xff]
    %v1284 = vld [vmem:[#allocation5 + $0x88] sm:$0xff]
    %v1285 = vld [vmem:[#allocation5 + $0x90] sm:$0xff]
    %v1286 = vld [vmem:[#allocation5 + $0x98] sm:$0xff]
    %v1287 = vld [vmem:[#allocation5 + $0xa0] sm:$0xff]
    %v1288 = vld [vmem:[#allocation5 + $0xa8] sm:$0xff]
    %v1289 = vld [vmem:[#allocation5 + $0xb0] sm:$0xff]
    %v1290 = vld [vmem:[#allocation5 + $0xb8] sm:$0xff]
    %v1291 = vunpack.c.h.b16 %v1219
    %v1292 = vunpack.c.h.b16 %v1220
    %v1293 = vunpack.c.h.b16 %v1221
    %v1294 = vunpack.c.h.b16 %v1222
    %v1295 = vunpack.c.h.b16 %v1223
    %v1296 = vunpack.c.h.b16 %v1224
    %v1297 = vunpack.c.h.b16 %v1225
    %v1298 = vunpack.c.h.b16 %v1226
    %v1299 = vunpack.c.h.b16 %v1227
    %v1300 = vunpack.c.h.b16 %v1228
    %v1301 = vunpack.c.h.b16 %v1229
    %v1302 = vunpack.c.h.b16 %v1230
    %v1303 = vunpack.c.h.b16 %v1231
    %v1304 = vunpack.c.h.b16 %v1232
    %v1305 = vunpack.c.h.b16 %v1233
    %v1306 = vunpack.c.h.b16 %v1234
    %v1307 = vpack.c.b16 %v1252, %v1251
    %v1308 = vpack.c.b16 %v1292, %v1291
    %v1309 = vpack.c.b16 %v1254, %v1253
    %v1310 = vpack.c.b16 %v1294, %v1293
    %v1311 = vpack.c.b16 %v1256, %v1255
    %v1312 = vpack.c.b16 %v1296, %v1295
    %v1313 = vpack.c.b16 %v1258, %v1257
    %v1314 = vpack.c.b16 %v1298, %v1297
    %v1315 = vpack.c.b16 %v1260, %v1259
    %v1316 = vpack.c.b16 %v1300, %v1299
    %v1317 = vpack.c.b16 %v1262, %v1261
    %v1318 = vpack.c.b16 %v1302, %v1301
    %v1319 = vpack.c.b16 %v1264, %v1263
    %v1320 = vpack.c.b16 %v1304, %v1303
    %v1321 = vpack.c.b16 %v1266, %v1265
    %v1322 = vpack.c.b16 %v1306, %v1305
    %vm1323 = vsmask.f32 3328
    %vm1324 = vsmask.f32 7440
    %vm1325 = vmor %vm1323, %vm1324
    %v1327 = vshrl.u32 %v1307, 16
    %v1329 = vrot.slane %v1327, 4
    %v1330 = vshll.u32 %v1307, 16
    %v1332 = vrot.slane %v1330, 5
    %v1333 = vor.u32 %v1329, %v1332
    %v1334 = vrot.slane %v1333, 4
    %v1336 = vshll.u32 %v1308, 16
    %v1338 = vrot.slane %v1336, 5
    %v1339 = vsel %vm1325, %v1334, %v1338
    %v1341 = vshrl.u32 %v1309, 16
    %v1343 = vrot.slane %v1341, 4
    %v1344 = vshll.u32 %v1309, 16
    %v1346 = vrot.slane %v1344, 5
    %v1347 = vor.u32 %v1343, %v1346
    %v1348 = vrot.slane %v1347, 4
    %v1350 = vshll.u32 %v1310, 16
    %v1352 = vrot.slane %v1350, 5
    %v1353 = vsel %vm1325, %v1348, %v1352
    %v1355 = vshrl.u32 %v1311, 16
    %v1357 = vrot.slane %v1355, 4
    %v1358 = vshll.u32 %v1311, 16
    %v1360 = vrot.slane %v1358, 5
    %v1361 = vor.u32 %v1357, %v1360
    %v1362 = vrot.slane %v1361, 4
    %v1364 = vshll.u32 %v1312, 16
    %v1366 = vrot.slane %v1364, 5
    %v1367 = vsel %vm1325, %v1362, %v1366
    %v1369 = vshrl.u32 %v1313, 16
    %v1371 = vrot.slane %v1369, 4
    %v1372 = vshll.u32 %v1313, 16
    %v1374 = vrot.slane %v1372, 5
    %v1375 = vor.u32 %v1371, %v1374
    %v1376 = vrot.slane %v1375, 4
    %v1378 = vshll.u32 %v1314, 16
    %v1380 = vrot.slane %v1378, 5
    %v1381 = vsel %vm1325, %v1376, %v1380
    %v1383 = vshrl.u32 %v1315, 16
    %v1385 = vrot.slane %v1383, 4
    %v1386 = vshll.u32 %v1315, 16
    %v1388 = vrot.slane %v1386, 5
    %v1389 = vor.u32 %v1385, %v1388
    %v1390 = vrot.slane %v1389, 4
    %v1392 = vshll.u32 %v1316, 16
    %v1394 = vrot.slane %v1392, 5
    %v1395 = vsel %vm1325, %v1390, %v1394
    %v1397 = vshrl.u32 %v1317, 16
    %v1399 = vrot.slane %v1397, 4
    %v1400 = vshll.u32 %v1317, 16
    %v1402 = vrot.slane %v1400, 5
    %v1403 = vor.u32 %v1399, %v1402
    %v1404 = vrot.slane %v1403, 4
    %v1406 = vshll.u32 %v1318, 16
    %v1408 = vrot.slane %v1406, 5
    %v1409 = vsel %vm1325, %v1404, %v1408
    %v1411 = vshrl.u32 %v1319, 16
    %v1413 = vrot.slane %v1411, 4
    %v1414 = vshll.u32 %v1319, 16
    %v1416 = vrot.slane %v1414, 5
    %v1417 = vor.u32 %v1413, %v1416
    %v1418 = vrot.slane %v1417, 4
    %v1420 = vshll.u32 %v1320, 16
    %v1422 = vrot.slane %v1420, 5
    %v1423 = vsel %vm1325, %v1418, %v1422
    %v1425 = vshrl.u32 %v1321, 16
    %v1427 = vrot.slane %v1425, 4
    %v1428 = vshll.u32 %v1321, 16
    %v1430 = vrot.slane %v1428, 5
    %v1431 = vor.u32 %v1427, %v1430
    %v1432 = vrot.slane %v1431, 4
    %v1434 = vshll.u32 %v1322, 16
    %v1436 = vrot.slane %v1434, 5
    %v1437 = vsel %vm1325, %v1432, %v1436
    %s1438 = scalar_lea.vmem [#allocation5], 192
    %v1439 = vld [vmem:[%s1438] sm:$0xff]
    %v1440 = vld [vmem:[%s1438 + $0x8] sm:$0xff]
    %v1441 = vld [vmem:[%s1438 + $0x10] sm:$0xff]
    %v1442 = vld [vmem:[%s1438 + $0x18] sm:$0xff]
    %v1443 = vld [vmem:[%s1438 + $0x20] sm:$0xff]
    %v1444 = vld [vmem:[%s1438 + $0x28] sm:$0xff]
    %v1445 = vld [vmem:[%s1438 + $0x30] sm:$0xff]
    %v1446 = vld [vmem:[%s1438 + $0x38] sm:$0xff]
    %v1447 = vld [vmem:[%s1438 + $0x40] sm:$0xff]
    %v1448 = vld [vmem:[%s1438 + $0x48] sm:$0xff]
    %v1449 = vld [vmem:[%s1438 + $0x50] sm:$0xff]
    %v1450 = vld [vmem:[%s1438 + $0x58] sm:$0xff]
    %v1451 = vld [vmem:[%s1438 + $0x60] sm:$0xff]
    %v1452 = vld [vmem:[%s1438 + $0x68] sm:$0xff]
    %v1453 = vld [vmem:[%s1438 + $0x70] sm:$0xff]
    %v1454 = vld [vmem:[%s1438 + $0x78] sm:$0xff]
    %v1455 = vld [vmem:[%s1438 + $0x80] sm:$0xff]
    %v1456 = vld [vmem:[%s1438 + $0x88] sm:$0xff]
    %v1457 = vld [vmem:[%s1438 + $0x90] sm:$0xff]
    %v1458 = vld [vmem:[%s1438 + $0x98] sm:$0xff]
    %v1459 = vld [vmem:[%s1438 + $0xa0] sm:$0xff]
    %v1460 = vld [vmem:[%s1438 + $0xa8] sm:$0xff]
    %v1461 = vld [vmem:[%s1438 + $0xb0] sm:$0xff]
    %v1462 = vld [vmem:[%s1438 + $0xb8] sm:$0xff]
    %v1463 = vunpack.c.l.b16 %v1339
    %v1464 = vunpack.c.h.b16 %v1339
    %v1465 = vunpack.c.l.b16 %v1353
    %v1466 = vunpack.c.h.b16 %v1353
    %v1467 = vunpack.c.l.b16 %v1367
    %v1468 = vunpack.c.h.b16 %v1367
    %v1469 = vunpack.c.l.b16 %v1381
    %v1470 = vunpack.c.h.b16 %v1381
    %v1471 = vunpack.c.l.b16 %v1395
    %v1472 = vunpack.c.h.b16 %v1395
    %v1473 = vunpack.c.l.b16 %v1409
    %v1474 = vunpack.c.h.b16 %v1409
    %v1475 = vunpack.c.l.b16 %v1423
    %v1476 = vunpack.c.h.b16 %v1423
    %v1477 = vunpack.c.l.b16 %v1437
    %v1478 = vunpack.c.h.b16 %v1437
    %v1479 = vpack.c.b16 %v1465, %v1463
    %v1480 = vpack.c.b16 %v1466, %v1464
    %v1481 = vpack.c.b16 %v1469, %v1467
    %v1482 = vpack.c.b16 %v1470, %v1468
    %v1483 = vpack.c.b16 %v1473, %v1471
    %v1484 = vpack.c.b16 %v1474, %v1472
    %v1485 = vpack.c.b16 %v1477, %v1475
    %v1486 = vpack.c.b16 %v1478, %v1476
    %v1515 = vunpack.c.l.b16 %v1439
    %v1516 = vunpack.c.h.b16 %v1439
    %v1517 = vunpack.c.l.b16 %v1440
    %v1518 = vunpack.c.h.b16 %v1440
    %v1519 = vunpack.c.l.b16 %v1441
    %v1520 = vunpack.c.h.b16 %v1441
    %v1521 = vunpack.c.l.b16 %v1442
    %v1522 = vunpack.c.h.b16 %v1442
    %v1523 = vunpack.c.l.b16 %v1443
    %v1524 = vunpack.c.h.b16 %v1443
    %v1525 = vunpack.c.l.b16 %v1444
    %v1526 = vunpack.c.h.b16 %v1444
    %v1527 = vunpack.c.l.b16 %v1445
    %v1528 = vunpack.c.h.b16 %v1445
    %v1529 = vunpack.c.l.b16 %v1446
    %v1530 = vunpack.c.h.b16 %v1446
    %v1531 = vunpack.c.l.b16 %v1447
    %v1532 = vunpack.c.h.b16 %v1447
    %v1533 = vunpack.c.l.b16 %v1448
    %v1534 = vunpack.c.h.b16 %v1448
    %v1535 = vunpack.c.l.b16 %v1449
    %v1536 = vunpack.c.h.b16 %v1449
    %v1537 = vunpack.c.l.b16 %v1450
    %v1538 = vunpack.c.h.b16 %v1450
    %v1539 = vunpack.c.l.b16 %v1451
    %v1540 = vunpack.c.h.b16 %v1451
    %v1541 = vunpack.c.l.b16 %v1452
    %v1542 = vunpack.c.h.b16 %v1452
    %v1543 = vunpack.c.l.b16 %v1453
    %v1544 = vunpack.c.h.b16 %v1453
    %v1545 = vunpack.c.l.b16 %v1454
    %v1546 = vunpack.c.h.b16 %v1454
    %v1547 = vunpack.c.l.b16 %v1455
    %v1548 = vunpack.c.h.b16 %v1455
    %v1549 = vunpack.c.l.b16 %v1456
    %v1550 = vunpack.c.h.b16 %v1456
    %v1551 = vunpack.c.l.b16 %v1457
    %v1552 = vunpack.c.h.b16 %v1457
    %v1553 = vunpack.c.l.b16 %v1458
    %v1554 = vunpack.c.h.b16 %v1458
    %v1555 = vunpack.c.l.b16 %v1459
    %v1556 = vunpack.c.h.b16 %v1459
    %v1557 = vunpack.c.l.b16 %v1460
    %v1558 = vunpack.c.h.b16 %v1460
    %v1559 = vunpack.c.l.b16 %v1461
    %v1560 = vunpack.c.h.b16 %v1461
    %v1561 = vunpack.c.l.b16 %v1462
    %v1562 = vunpack.c.h.b16 %v1462
    %v1563 = vpack.c.b16 %v1517, %v1515
    %v1564 = vpack.c.b16 %v1518, %v1516
    %v1565 = vpack.c.b16 %v1521, %v1519
    %v1566 = vpack.c.b16 %v1522, %v1520
    %v1567 = vpack.c.b16 %v1525, %v1523
    %v1568 = vpack.c.b16 %v1526, %v1524
    %v1569 = vpack.c.b16 %v1529, %v1527
    %v1570 = vpack.c.b16 %v1530, %v1528
    %v1571 = vpack.c.b16 %v1533, %v1531
    %v1572 = vpack.c.b16 %v1534, %v1532
    %v1573 = vpack.c.b16 %v1537, %v1535
    %v1574 = vpack.c.b16 %v1538, %v1536
    %v1575 = vpack.c.b16 %v1541, %v1539
    %v1576 = vpack.c.b16 %v1542, %v1540
    %v1577 = vpack.c.b16 %v1545, %v1543
    %v1578 = vpack.c.b16 %v1546, %v1544
    %v1579 = vpack.c.b16 %v1549, %v1547
    %v1580 = vpack.c.b16 %v1550, %v1548
    %v1581 = vpack.c.b16 %v1553, %v1551
    %v1582 = vpack.c.b16 %v1554, %v1552
    %v1583 = vpack.c.b16 %v1557, %v1555
    %v1584 = vpack.c.b16 %v1558, %v1556
    %v1585 = vpack.c.b16 %v1561, %v1559
    %v1586 = vpack.c.b16 %v1562, %v1560
    %v1612 = vsel %vm1062, %v1480, 0
    %v1615 = vsel %vm1062, %v1482, 0
    %v1618 = vsel %vm1062, %v1484, 0
    %v1621 = vsel %vm1062, %v1486, 0
    %1623 = vmatprep.subr.bf16.mxu0 %v1564
    %1624 = vmatpush1.bf16.msra.mxu0 %v1563
    %1625 = vmatprep.subr.bf16.mxu0 %v1566
    %1626 = vmatpush1.bf16.msra.mxu0 %v1565
    %1627 = vmatprep.subr.bf16.mxu0 %v1568
    %1628 = vmatpush1.bf16.msra.mxu0 %v1567
    %1629 = vmatprep.subr.bf16.mxu0 %v1570
    %1630 = vmatpush1.bf16.msra.mxu0 %v1569
    %1631 = vmatprep.subr.bf16.mxu0 %v1572
    %1632 = vmatpush1.bf16.msra.mxu0 %v1571
    %1633 = vmatprep.subr.bf16.mxu0 %v1574
    %1634 = vmatpush1.bf16.msra.mxu0 %v1573
    %1635 = vmatprep.subr.bf16.mxu0 %v1576
    %1636 = vmatpush1.bf16.msra.mxu0 %v1575
    %1637 = vmatprep.subr.bf16.mxu0 %v1578
    %1638 = vmatpush1.bf16.msra.mxu0 %v1577
    %1639 = vmatprep.subr.bf16.mxu0 %v1580
    %1640 = vmatpush1.bf16.msra.mxu0 %v1579
    %1641 = vmatprep.subr.bf16.mxu0 %v1582
    %1642 = vmatpush1.bf16.msra.mxu0 %v1581
    %1643 = vmatprep.subr.bf16.mxu0 %v1584
    %1644 = vmatpush1.bf16.msra.mxu0 %v1583
    %1645 = vmatprep.subr.bf16.mxu0 %v1586
    %1646 = vmatpush1.bf16.msra.mxu0 %v1585
    %1647 = vmatprep.subr.bf16.mxu0 0
    %1648 = vmatpush1.bf16.msra.mxu0 0
    %1649 = vmatprep.subr.bf16.mxu0 0
    %1650 = vmatpush1.bf16.msra.mxu0 0
    %1651 = vmatprep.subr.bf16.mxu0 0
    %1652 = vmatpush1.bf16.msra.mxu0 0
    %1653 = vmatprep.subr.bf16.mxu0 0
    %1654 = vmatpush1.bf16.msra.mxu0 0
    %1655 = vmatprep.mubr.bf16.mxu0 %v1612
    %1656 = vmatmul.mubr.bf16.gmra.mrb[0].mxu0 %v1479
    %v1657 = vpop.f32.mrb[0].mxu0
    %v1658 = vadd.f32 0.0, %v1657
    %v1659 = vpop.f32.mrb[0].mxu0
    %v1660 = vadd.f32 0.0, %v1659
    %v1661 = vpop.f32.mrb[0].mxu0
    %v1662 = vadd.f32 0.0, %v1661
    %v1663 = vpop.f32.mrb[0].mxu0
    %v1664 = vadd.f32 0.0, %v1663
    %1665 = vmatprep.mubr.bf16.mxu0 %v1615
    %1666 = vmatmul.mubr.bf16.gmra.mrb[0].mxu0 %v1481
    %v1667 = vpop.f32.mrb[0].mxu0
    %v1668 = vadd.f32 0.0, %v1667
    %v1669 = vpop.f32.mrb[0].mxu0
    %v1670 = vadd.f32 0.0, %v1669
    %v1671 = vpop.f32.mrb[0].mxu0
    %v1672 = vadd.f32 0.0, %v1671
    %v1673 = vpop.f32.mrb[0].mxu0
    %v1674 = vadd.f32 0.0, %v1673
    %1675 = vmatprep.mubr.bf16.mxu0 %v1618
    %1676 = vmatmul.mubr.bf16.gmra.mrb[0].mxu0 %v1483
    %v1677 = vpop.f32.mrb[0].mxu0
    %v1678 = vadd.f32 0.0, %v1677
    %v1679 = vpop.f32.mrb[0].mxu0
    %v1680 = vadd.f32 0.0, %v1679
    %v1681 = vpop.f32.mrb[0].mxu0
    %v1682 = vadd.f32 0.0, %v1681
    %v1683 = vpop.f32.mrb[0].mxu0
    %v1684 = vadd.f32 0.0, %v1683
    %1685 = vmatprep.mubr.bf16.mxu0 %v1621
    %1686 = vmatmul.mubr.bf16.gmra.mrb[0].mxu0 %v1485
    %v1687 = vpop.f32.mrb[0].mxu0
    %v1688 = vadd.f32 0.0, %v1687
    %v1689 = vpop.f32.mrb[0].mxu0
    %v1690 = vadd.f32 0.0, %v1689
    %v1691 = vpop.f32.mrb[0].mxu0
    %v1692 = vadd.f32 0.0, %v1691
    %v1693 = vpop.f32.mrb[0].mxu0
    %v1694 = vadd.f32 0.0, %v1693
    %1695 = vdwg.mxu0
    %v1696 = vpack.c.b16 %v1253, %v1251
    %v1697 = vpack.c.b16 %v1254, %v1252
    %v1698 = vpack.c.b16 %v1257, %v1255
    %v1699 = vpack.c.b16 %v1258, %v1256
    %v1700 = vpack.c.b16 %v1261, %v1259
    %v1701 = vpack.c.b16 %v1262, %v1260
    %v1702 = vpack.c.b16 %v1265, %v1263
    %v1703 = vpack.c.b16 %v1266, %v1264
    %v1732 = vunpack.c.l.b16 %v1267
    %v1733 = vunpack.c.h.b16 %v1267
    %v1734 = vunpack.c.l.b16 %v1268
    %v1735 = vunpack.c.h.b16 %v1268
    %v1736 = vunpack.c.l.b16 %v1269
    %v1737 = vunpack.c.h.b16 %v1269
    %v1738 = vunpack.c.l.b16 %v1270
    %v1739 = vunpack.c.h.b16 %v1270
    %v1740 = vunpack.c.l.b16 %v1271
    %v1741 = vunpack.c.h.b16 %v1271
    %v1742 = vunpack.c.l.b16 %v1272
    %v1743 = vunpack.c.h.b16 %v1272
    %v1744 = vunpack.c.l.b16 %v1273
    %v1745 = vunpack.c.h.b16 %v1273
    %v1746 = vunpack.c.l.b16 %v1274
    %v1747 = vunpack.c.h.b16 %v1274
    %v1748 = vunpack.c.l.b16 %v1275
    %v1749 = vunpack.c.h.b16 %v1275
    %v1750 = vunpack.c.l.b16 %v1276
    %v1751 = vunpack.c.h.b16 %v1276
    %v1752 = vunpack.c.l.b16 %v1277
    %v1753 = vunpack.c.h.b16 %v1277
    %v1754 = vunpack.c.l.b16 %v1278
    %v1755 = vunpack.c.h.b16 %v1278
    %v1756 = vunpack.c.l.b16 %v1279
    %v1757 = vunpack.c.h.b16 %v1279
    %v1758 = vunpack.c.l.b16 %v1280
    %v1759 = vunpack.c.h.b16 %v1280
    %v1760 = vunpack.c.l.b16 %v1281
    %v1761 = vunpack.c.h.b16 %v1281
    %v1762 = vunpack.c.l.b16 %v1282
    %v1763 = vunpack.c.h.b16 %v1282
    %v1764 = vunpack.c.l.b16 %v1283
    %v1765 = vunpack.c.h.b16 %v1283
    %v1766 = vunpack.c.l.b16 %v1284
    %v1767 = vunpack.c.h.b16 %v1284
    %v1768 = vunpack.c.l.b16 %v1285
    %v1769 = vunpack.c.h.b16 %v1285
    %v1770 = vunpack.c.l.b16 %v1286
    %v1771 = vunpack.c.h.b16 %v1286
    %v1772 = vunpack.c.l.b16 %v1287
    %v1773 = vunpack.c.h.b16 %v1287
    %v1774 = vunpack.c.l.b16 %v1288
    %v1775 = vunpack.c.h.b16 %v1288
    %v1776 = vunpack.c.l.b16 %v1289
    %v1777 = vunpack.c.h.b16 %v1289
    %v1778 = vunpack.c.l.b16 %v1290
    %v1779 = vunpack.c.h.b16 %v1290
    %v1780 = vpack.c.b16 %v1734, %v1732
    %v1781 = vpack.c.b16 %v1735, %v1733
    %v1782 = vpack.c.b16 %v1738, %v1736
    %v1783 = vpack.c.b16 %v1739, %v1737
    %v1784 = vpack.c.b16 %v1742, %v1740
    %v1785 = vpack.c.b16 %v1743, %v1741
    %v1786 = vpack.c.b16 %v1746, %v1744
    %v1787 = vpack.c.b16 %v1747, %v1745
    %v1788 = vpack.c.b16 %v1750, %v1748
    %v1789 = vpack.c.b16 %v1751, %v1749
    %v1790 = vpack.c.b16 %v1754, %v1752
    %v1791 = vpack.c.b16 %v1755, %v1753
    %v1792 = vpack.c.b16 %v1758, %v1756
    %v1793 = vpack.c.b16 %v1759, %v1757
    %v1794 = vpack.c.b16 %v1762, %v1760
    %v1795 = vpack.c.b16 %v1763, %v1761
    %v1796 = vpack.c.b16 %v1766, %v1764
    %v1797 = vpack.c.b16 %v1767, %v1765
    %v1798 = vpack.c.b16 %v1770, %v1768
    %v1799 = vpack.c.b16 %v1771, %v1769
    %v1800 = vpack.c.b16 %v1774, %v1772
    %v1801 = vpack.c.b16 %v1775, %v1773
    %v1802 = vpack.c.b16 %v1778, %v1776
    %v1803 = vpack.c.b16 %v1779, %v1777
    %v1829 = vsel %vm1062, %v1697, 0
    %v1832 = vsel %vm1062, %v1699, 0
    %v1835 = vsel %vm1062, %v1701, 0
    %v1838 = vsel %vm1062, %v1703, 0
    %1840 = vmatprep.subr.bf16.mxu0 %v1781
    %1841 = vmatpush1.bf16.msra.mxu0 %v1780
    %1842 = vmatprep.subr.bf16.mxu0 %v1783
    %1843 = vmatpush1.bf16.msra.mxu0 %v1782
    %1844 = vmatprep.subr.bf16.mxu0 %v1785
    %1845 = vmatpush1.bf16.msra.mxu0 %v1784
    %1846 = vmatprep.subr.bf16.mxu0 %v1787
    %1847 = vmatpush1.bf16.msra.mxu0 %v1786
    %1848 = vmatprep.subr.bf16.mxu0 %v1789
    %1849 = vmatpush1.bf16.msra.mxu0 %v1788
    %1850 = vmatprep.subr.bf16.mxu0 %v1791
    %1851 = vmatpush1.bf16.msra.mxu0 %v1790
    %1852 = vmatprep.subr.bf16.mxu0 %v1793
    %1853 = vmatpush1.bf16.msra.mxu0 %v1792
    %1854 = vmatprep.subr.bf16.mxu0 %v1795
    %1855 = vmatpush1.bf16.msra.mxu0 %v1794
    %1856 = vmatprep.subr.bf16.mxu0 %v1797
    %1857 = vmatpush1.bf16.msra.mxu0 %v1796
    %1858 = vmatprep.subr.bf16.mxu0 %v1799
    %1859 = vmatpush1.bf16.msra.mxu0 %v1798
    %1860 = vmatprep.subr.bf16.mxu0 %v1801
    %1861 = vmatpush1.bf16.msra.mxu0 %v1800
    %1862 = vmatprep.subr.bf16.mxu0 %v1803
    %1863 = vmatpush1.bf16.msra.mxu0 %v1802
    %1864 = vmatprep.subr.bf16.mxu0 0
    %1865 = vmatpush1.bf16.msra.mxu0 0
    %1866 = vmatprep.subr.bf16.mxu0 0
    %1867 = vmatpush1.bf16.msra.mxu0 0
    %1868 = vmatprep.subr.bf16.mxu0 0
    %1869 = vmatpush1.bf16.msra.mxu0 0
    %1870 = vmatprep.subr.bf16.mxu0 0
    %1871 = vmatpush1.bf16.msra.mxu0 0
    %1872 = vmatprep.mubr.bf16.mxu0 %v1829
    %1873 = vmatmul.mubr.bf16.gmra.mrb[0].mxu0 %v1696
    %v1874 = vpop.f32.mrb[0].mxu0
    %v1875 = vadd.f32 %v1658, %v1874
    %v1876 = vpop.f32.mrb[0].mxu0
    %v1877 = vadd.f32 %v1660, %v1876
    %v1878 = vpop.f32.mrb[0].mxu0
    %v1879 = vadd.f32 %v1662, %v1878
    %v1880 = vpop.f32.mrb[0].mxu0
    %v1881 = vadd.f32 %v1664, %v1880
    %1882 = vmatprep.mubr.bf16.mxu0 %v1832
    %1883 = vmatmul.mubr.bf16.gmra.mrb[0].mxu0 %v1698
    %v1884 = vpop.f32.mrb[0].mxu0
    %v1885 = vadd.f32 %v1668, %v1884
    %v1886 = vpop.f32.mrb[0].mxu0
    %v1887 = vadd.f32 %v1670, %v1886
    %v1888 = vpop.f32.mrb[0].mxu0
    %v1889 = vadd.f32 %v1672, %v1888
    %v1890 = vpop.f32.mrb[0].mxu0
    %v1891 = vadd.f32 %v1674, %v1890
    %1892 = vmatprep.mubr.bf16.mxu0 %v1835
    %1893 = vmatmul.mubr.bf16.gmra.mrb[0].mxu0 %v1700
    %v1894 = vpop.f32.mrb[0].mxu0
    %v1895 = vadd.f32 %v1678, %v1894
    %v1896 = vpop.f32.mrb[0].mxu0
    %v1897 = vadd.f32 %v1680, %v1896
    %v1898 = vpop.f32.mrb[0].mxu0
    %v1899 = vadd.f32 %v1682, %v1898
    %v1900 = vpop.f32.mrb[0].mxu0
    %v1901 = vadd.f32 %v1684, %v1900
    %1902 = vmatprep.mubr.bf16.mxu0 %v1838
    %1903 = vmatmul.mubr.bf16.gmra.mrb[0].mxu0 %v1702
    %v1904 = vpop.f32.mrb[0].mxu0
    %v1905 = vadd.f32 %v1688, %v1904
    %v1906 = vpop.f32.mrb[0].mxu0
    %v1907 = vadd.f32 %v1690, %v1906
    %v1908 = vpop.f32.mrb[0].mxu0
    %v1909 = vadd.f32 %v1692, %v1908
    %v1910 = vpop.f32.mrb[0].mxu0
    %v1911 = vadd.f32 %v1694, %v1910
    %1912 = vdwg.mxu0
    %vm1913 = vcmask 1042432
    %vm1914 = vcmask 1046532
    %vm1915 = vmor %vm1913, %vm1914
    %v1916 = vrot.slane %v1307, 5
    %v1917 = vrot.slane %v1916, 4
    %v1918 = vrot.slane %v1308, 5
    %v1919 = vsel %vm1915, %v1917, %v1918
    %v1920 = vrot.slane %v1309, 5
    %v1921 = vrot.slane %v1920, 4
    %v1922 = vrot.slane %v1310, 5
    %v1923 = vsel %vm1915, %v1921, %v1922
    %v1924 = vrot.slane %v1311, 5
    %v1925 = vrot.slane %v1924, 4
    %v1926 = vrot.slane %v1312, 5
    %v1927 = vsel %vm1915, %v1925, %v1926
    %v1928 = vrot.slane %v1313, 5
    %v1929 = vrot.slane %v1928, 4
    %v1930 = vrot.slane %v1314, 5
    %v1931 = vsel %vm1915, %v1929, %v1930
    %v1932 = vrot.slane %v1315, 5
    %v1933 = vrot.slane %v1932, 4
    %v1934 = vrot.slane %v1316, 5
    %v1935 = vsel %vm1915, %v1933, %v1934
    %v1936 = vrot.slane %v1317, 5
    %v1937 = vrot.slane %v1936, 4
    %v1938 = vrot.slane %v1318, 5
    %v1939 = vsel %vm1915, %v1937, %v1938
    %v1940 = vrot.slane %v1319, 5
    %v1941 = vrot.slane %v1940, 4
    %v1942 = vrot.slane %v1320, 5
    %v1943 = vsel %vm1915, %v1941, %v1942
    %v1944 = vrot.slane %v1321, 5
    %v1945 = vrot.slane %v1944, 4
    %v1946 = vrot.slane %v1322, 5
    %v1947 = vsel %vm1915, %v1945, %v1946
    %s1948 = scalar_lea.vmem [#allocation5], 384
    %v1949 = vld [vmem:[%s1948] sm:$0xff]
    %v1950 = vld [vmem:[%s1948 + $0x8] sm:$0xff]
    %v1951 = vld [vmem:[%s1948 + $0x10] sm:$0xff]
    %v1952 = vld [vmem:[%s1948 + $0x18] sm:$0xff]
    %v1953 = vld [vmem:[%s1948 + $0x20] sm:$0xff]
    %v1954 = vld [vmem:[%s1948 + $0x28] sm:$0xff]
    %v1955 = vld [vmem:[%s1948 + $0x30] sm:$0xff]
    %v1956 = vld [vmem:[%s1948 + $0x38] sm:$0xff]
    %v1957 = vld [vmem:[%s1948 + $0x40] sm:$0xff]
    %v1958 = vld [vmem:[%s1948 + $0x48] sm:$0xff]
    %v1959 = vld [vmem:[%s1948 + $0x50] sm:$0xff]
    %v1960 = vld [vmem:[%s1948 + $0x58] sm:$0xff]
    %v1961 = vld [vmem:[%s1948 + $0x60] sm:$0xff]
    %v1962 = vld [vmem:[%s1948 + $0x68] sm:$0xff]
    %v1963 = vld [vmem:[%s1948 + $0x70] sm:$0xff]
    %v1964 = vld [vmem:[%s1948 + $0x78] sm:$0xff]
    %v1965 = vld [vmem:[%s1948 + $0x80] sm:$0xff]
    %v1966 = vld [vmem:[%s1948 + $0x88] sm:$0xff]
    %v1967 = vld [vmem:[%s1948 + $0x90] sm:$0xff]
    %v1968 = vld [vmem:[%s1948 + $0x98] sm:$0xff]
    %v1969 = vld [vmem:[%s1948 + $0xa0] sm:$0xff]
    %v1970 = vld [vmem:[%s1948 + $0xa8] sm:$0xff]
    %v1971 = vld [vmem:[%s1948 + $0xb0] sm:$0xff]
    %v1972 = vld [vmem:[%s1948 + $0xb8] sm:$0xff]
    %v1973 = vunpack.c.l.b16 %v1919
    %v1974 = vunpack.c.h.b16 %v1919
    %v1975 = vunpack.c.l.b16 %v1923
    %v1976 = vunpack.c.h.b16 %v1923
    %v1977 = vunpack.c.l.b16 %v1927
    %v1978 = vunpack.c.h.b16 %v1927
    %v1979 = vunpack.c.l.b16 %v1931
    %v1980 = vunpack.c.h.b16 %v1931
    %v1981 = vunpack.c.l.b16 %v1935
    %v1982 = vunpack.c.h.b16 %v1935
    %v1983 = vunpack.c.l.b16 %v1939
    %v1984 = vunpack.c.h.b16 %v1939
    %v1985 = vunpack.c.l.b16 %v1943
    %v1986 = vunpack.c.h.b16 %v1943
    %v1987 = vunpack.c.l.b16 %v1947
    %v1988 = vunpack.c.h.b16 %v1947
    %v1989 = vpack.c.b16 %v1975, %v1973
    %v1990 = vpack.c.b16 %v1976, %v1974
    %v1991 = vpack.c.b16 %v1979, %v1977
    %v1992 = vpack.c.b16 %v1980, %v1978
    %v1993 = vpack.c.b16 %v1983, %v1981
    %v1994 = vpack.c.b16 %v1984, %v1982
    %v1995 = vpack.c.b16 %v1987, %v1985
    %v1996 = vpack.c.b16 %v1988, %v1986
    %v2025 = vunpack.c.l.b16 %v1949
    %v2026 = vunpack.c.h.b16 %v1949
    %v2027 = vunpack.c.l.b16 %v1950
    %v2028 = vunpack.c.h.b16 %v1950
    %v2029 = vunpack.c.l.b16 %v1951
    %v2030 = vunpack.c.h.b16 %v1951
    %v2031 = vunpack.c.l.b16 %v1952
    %v2032 = vunpack.c.h.b16 %v1952
    %v2033 = vunpack.c.l.b16 %v1953
    %v2034 = vunpack.c.h.b16 %v1953
    %v2035 = vunpack.c.l.b16 %v1954
    %v2036 = vunpack.c.h.b16 %v1954
    %v2037 = vunpack.c.l.b16 %v1955
    %v2038 = vunpack.c.h.b16 %v1955
    %v2039 = vunpack.c.l.b16 %v1956
    %v2040 = vunpack.c.h.b16 %v1956
    %v2041 = vunpack.c.l.b16 %v1957
    %v2042 = vunpack.c.h.b16 %v1957
    %v2043 = vunpack.c.l.b16 %v1958
    %v2044 = vunpack.c.h.b16 %v1958
    %v2045 = vunpack.c.l.b16 %v1959
    %v2046 = vunpack.c.h.b16 %v1959
    %v2047 = vunpack.c.l.b16 %v1960
    %v2048 = vunpack.c.h.b16 %v1960
    %v2049 = vunpack.c.l.b16 %v1961
    %v2050 = vunpack.c.h.b16 %v1961
    %v2051 = vunpack.c.l.b16 %v1962
    %v2052 = vunpack.c.h.b16 %v1962
    %v2053 = vunpack.c.l.b16 %v1963
    %v2054 = vunpack.c.h.b16 %v1963
    %v2055 = vunpack.c.l.b16 %v1964
    %v2056 = vunpack.c.h.b16 %v1964
    %v2057 = vunpack.c.l.b16 %v1965
    %v2058 = vunpack.c.h.b16 %v1965
    %v2059 = vunpack.c.l.b16 %v1966
    %v2060 = vunpack.c.h.b16 %v1966
    %v2061 = vunpack.c.l.b16 %v1967
    %v2062 = vunpack.c.h.b16 %v1967
    %v2063 = vunpack.c.l.b16 %v1968
    %v2064 = vunpack.c.h.b16 %v1968
    %v2065 = vunpack.c.l.b16 %v1969
    %v2066 = vunpack.c.h.b16 %v1969
    %v2067 = vunpack.c.l.b16 %v1970
    %v2068 = vunpack.c.h.b16 %v1970
    %v2069 = vunpack.c.l.b16 %v1971
    %v2070 = vunpack.c.h.b16 %v1971
    %v2071 = vunpack.c.l.b16 %v1972
    %v2072 = vunpack.c.h.b16 %v1972
    %v2073 = vpack.c.b16 %v2027, %v2025
    %v2074 = vpack.c.b16 %v2028, %v2026
    %v2075 = vpack.c.b16 %v2031, %v2029
    %v2076 = vpack.c.b16 %v2032, %v2030
    %v2077 = vpack.c.b16 %v2035, %v2033
    %v2078 = vpack.c.b16 %v2036, %v2034
    %v2079 = vpack.c.b16 %v2039, %v2037
    %v2080 = vpack.c.b16 %v2040, %v2038
    %v2081 = vpack.c.b16 %v2043, %v2041
    %v2082 = vpack.c.b16 %v2044, %v2042
    %v2083 = vpack.c.b16 %v2047, %v2045
    %v2084 = vpack.c.b16 %v2048, %v2046
    %v2085 = vpack.c.b16 %v2051, %v2049
    %v2086 = vpack.c.b16 %v2052, %v2050
    %v2087 = vpack.c.b16 %v2055, %v2053
    %v2088 = vpack.c.b16 %v2056, %v2054
    %v2089 = vpack.c.b16 %v2059, %v2057
    %v2090 = vpack.c.b16 %v2060, %v2058
    %v2091 = vpack.c.b16 %v2063, %v2061
    %v2092 = vpack.c.b16 %v2064, %v2062
    %v2093 = vpack.c.b16 %v2067, %v2065
    %v2094 = vpack.c.b16 %v2068, %v2066
    %v2095 = vpack.c.b16 %v2071, %v2069
    %v2096 = vpack.c.b16 %v2072, %v2070
    %v2122 = vsel %vm1062, %v1990, 0
    %v2125 = vsel %vm1062, %v1992, 0
    %v2128 = vsel %vm1062, %v1994, 0
    %v2131 = vsel %vm1062, %v1996, 0
    %2133 = vmatprep.subr.bf16.mxu0 %v2074
    %2134 = vmatpush1.bf16.msra.mxu0 %v2073
    %2135 = vmatprep.subr.bf16.mxu0 %v2076
    %2136 = vmatpush1.bf16.msra.mxu0 %v2075
    %2137 = vmatprep.subr.bf16.mxu0 %v2078
    %2138 = vmatpush1.bf16.msra.mxu0 %v2077
    %2139 = vmatprep.subr.bf16.mxu0 %v2080
    %2140 = vmatpush1.bf16.msra.mxu0 %v2079
    %2141 = vmatprep.subr.bf16.mxu0 %v2082
    %2142 = vmatpush1.bf16.msra.mxu0 %v2081
    %2143 = vmatprep.subr.bf16.mxu0 %v2084
    %2144 = vmatpush1.bf16.msra.mxu0 %v2083
    %2145 = vmatprep.subr.bf16.mxu0 %v2086
    %2146 = vmatpush1.bf16.msra.mxu0 %v2085
    %2147 = vmatprep.subr.bf16.mxu0 %v2088
    %2148 = vmatpush1.bf16.msra.mxu0 %v2087
    %2149 = vmatprep.subr.bf16.mxu0 %v2090
    %2150 = vmatpush1.bf16.msra.mxu0 %v2089
    %2151 = vmatprep.subr.bf16.mxu0 %v2092
    %2152 = vmatpush1.bf16.msra.mxu0 %v2091
    %2153 = vmatprep.subr.bf16.mxu0 %v2094
    %2154 = vmatpush1.bf16.msra.mxu0 %v2093
    %2155 = vmatprep.subr.bf16.mxu0 %v2096
    %2156 = vmatpush1.bf16.msra.mxu0 %v2095
    %2157 = vmatprep.subr.bf16.mxu0 0
    %2158 = vmatpush1.bf16.msra.mxu0 0
    %2159 = vmatprep.subr.bf16.mxu0 0
    %2160 = vmatpush1.bf16.msra.mxu0 0
    %2161 = vmatprep.subr.bf16.mxu0 0
    %2162 = vmatpush1.bf16.msra.mxu0 0
    %2163 = vmatprep.subr.bf16.mxu0 0
    %2164 = vmatpush1.bf16.msra.mxu0 0
    %2165 = vmatprep.mubr.bf16.mxu0 %v2122
    %2166 = vmatmul.mubr.bf16.gmra.mrb[0].mxu0 %v1989
    %v2167 = vpop.f32.mrb[0].mxu0
    %v2168 = vadd.f32 0.0, %v2167
    %v2169 = vpop.f32.mrb[0].mxu0
    %v2170 = vadd.f32 0.0, %v2169
    %v2171 = vpop.f32.mrb[0].mxu0
    %v2172 = vadd.f32 0.0, %v2171
    %v2173 = vpop.f32.mrb[0].mxu0
    %v2174 = vadd.f32 0.0, %v2173
    %2175 = vmatprep.mubr.bf16.mxu0 %v2125
    %2176 = vmatmul.mubr.bf16.gmra.mrb[0].mxu0 %v1991
    %v2177 = vpop.f32.mrb[0].mxu0
    %v2178 = vadd.f32 0.0, %v2177
    %v2179 = vpop.f32.mrb[0].mxu0
    %v2180 = vadd.f32 0.0, %v2179
    %v2181 = vpop.f32.mrb[0].mxu0
    %v2182 = vadd.f32 0.0, %v2181
    %v2183 = vpop.f32.mrb[0].mxu0
    %v2184 = vadd.f32 0.0, %v2183
    %2185 = vmatprep.mubr.bf16.mxu0 %v2128
    %2186 = vmatmul.mubr.bf16.gmra.mrb[0].mxu0 %v1993
    %v2187 = vpop.f32.mrb[0].mxu0
    %v2188 = vadd.f32 0.0, %v2187
    %v2189 = vpop.f32.mrb[0].mxu0
    %v2190 = vadd.f32 0.0, %v2189
    %v2191 = vpop.f32.mrb[0].mxu0
    %v2192 = vadd.f32 0.0, %v2191
    %v2193 = vpop.f32.mrb[0].mxu0
    %v2194 = vadd.f32 0.0, %v2193
    %2195 = vmatprep.mubr.bf16.mxu0 %v2131
    %2196 = vmatmul.mubr.bf16.gmra.mrb[0].mxu0 %v1995
    %v2197 = vpop.f32.mrb[0].mxu0
    %v2198 = vadd.f32 0.0, %v2197
    %v2199 = vpop.f32.mrb[0].mxu0
    %v2200 = vadd.f32 0.0, %v2199
    %v2201 = vpop.f32.mrb[0].mxu0
    %v2202 = vadd.f32 0.0, %v2201
    %v2203 = vpop.f32.mrb[0].mxu0
    %v2204 = vadd.f32 0.0, %v2203
    %2205 = vdwg.mxu0
    %v2206 = vadd.f32 %v1875, %v2168
    %v2207 = vadd.f32 %v1877, %v2170
    %v2208 = vadd.f32 %v1879, %v2172
    %v2209 = vadd.f32 %v1881, %v2174
    %v2210 = vadd.f32 %v1885, %v2178
    %v2211 = vadd.f32 %v1887, %v2180
    %v2212 = vadd.f32 %v1889, %v2182
    %v2213 = vadd.f32 %v1891, %v2184
    %v2214 = vadd.f32 %v1895, %v2188
    %v2215 = vadd.f32 %v1897, %v2190
    %v2216 = vadd.f32 %v1899, %v2192
    %v2217 = vadd.f32 %v1901, %v2194
    %v2218 = vadd.f32 %v1905, %v2198
    %v2219 = vadd.f32 %v1907, %v2200
    %v2220 = vadd.f32 %v1909, %v2202
    %v2221 = vadd.f32 %v1911, %v2204
    %vm2222 = vsmask.f32 2304
    %vm2223 = vsmask.f32 6416
    %vm2224 = vmor %vm2222, %vm2223
    %v2225 = vrot.slane %v1327, 5
    %v2226 = vrot.slane %v1330, 6
    %v2227 = vor.u32 %v2225, %v2226
    %v2228 = vrot.slane %v2227, 4
    %v2229 = vshrl.u32 %v1308, 16
    %v2231 = vrot.slane %v2229, 5
    %v2232 = vrot.slane %v1336, 6
    %v2233 = vor.u32 %v2231, %v2232
    %v2234 = vsel %vm2224, %v2228, %v2233
    %v2235 = vrot.slane %v1341, 5
    %v2236 = vrot.slane %v1344, 6
    %v2237 = vor.u32 %v2235, %v2236
    %v2238 = vrot.slane %v2237, 4
    %v2239 = vshrl.u32 %v1310, 16
    %v2241 = vrot.slane %v2239, 5
    %v2242 = vrot.slane %v1350, 6
    %v2243 = vor.u32 %v2241, %v2242
    %v2244 = vsel %vm2224, %v2238, %v2243
    %v2245 = vrot.slane %v1355, 5
    %v2246 = vrot.slane %v1358, 6
    %v2247 = vor.u32 %v2245, %v2246
    %v2248 = vrot.slane %v2247, 4
    %v2249 = vshrl.u32 %v1312, 16
    %v2251 = vrot.slane %v2249, 5
    %v2252 = vrot.slane %v1364, 6
    %v2253 = vor.u32 %v2251, %v2252
    %v2254 = vsel %vm2224, %v2248, %v2253
    %v2255 = vrot.slane %v1369, 5
    %v2256 = vrot.slane %v1372, 6
    %v2257 = vor.u32 %v2255, %v2256
    %v2258 = vrot.slane %v2257, 4
    %v2259 = vshrl.u32 %v1314, 16
    %v2261 = vrot.slane %v2259, 5
    %v2262 = vrot.slane %v1378, 6
    %v2263 = vor.u32 %v2261, %v2262
    %v2264 = vsel %vm2224, %v2258, %v2263
    %v2265 = vrot.slane %v1383, 5
    %v2266 = vrot.slane %v1386, 6
    %v2267 = vor.u32 %v2265, %v2266
    %v2268 = vrot.slane %v2267, 4
    %v2269 = vshrl.u32 %v1316, 16
    %v2271 = vrot.slane %v2269, 5
    %v2272 = vrot.slane %v1392, 6
    %v2273 = vor.u32 %v2271, %v2272
    %v2274 = vsel %vm2224, %v2268, %v2273
    %v2275 = vrot.slane %v1397, 5
    %v2276 = vrot.slane %v1400, 6
    %v2277 = vor.u32 %v2275, %v2276
    %v2278 = vrot.slane %v2277, 4
    %v2279 = vshrl.u32 %v1318, 16
    %v2281 = vrot.slane %v2279, 5
    %v2282 = vrot.slane %v1406, 6
    %v2283 = vor.u32 %v2281, %v2282
    %v2284 = vsel %vm2224, %v2278, %v2283
    %v2285 = vrot.slane %v1411, 5
    %v2286 = vrot.slane %v1414, 6
    %v2287 = vor.u32 %v2285, %v2286
    %v2288 = vrot.slane %v2287, 4
    %v2289 = vshrl.u32 %v1320, 16
    %v2291 = vrot.slane %v2289, 5
    %v2292 = vrot.slane %v1420, 6
    %v2293 = vor.u32 %v2291, %v2292
    %v2294 = vsel %vm2224, %v2288, %v2293
    %v2295 = vrot.slane %v1425, 5
    %v2296 = vrot.slane %v1428, 6
    %v2297 = vor.u32 %v2295, %v2296
    %v2298 = vrot.slane %v2297, 4
    %v2299 = vshrl.u32 %v1322, 16
    %v2301 = vrot.slane %v2299, 5
    %v2302 = vrot.slane %v1434, 6
    %v2303 = vor.u32 %v2301, %v2302
    %v2304 = vsel %vm2224, %v2298, %v2303
    %s2305 = scalar_lea.vmem [#allocation5], 576
    %v2306 = vld [vmem:[%s2305] sm:$0xff]
    %v2307 = vld [vmem:[%s2305 + $0x8] sm:$0xff]
    %v2308 = vld [vmem:[%s2305 + $0x10] sm:$0xff]
    %v2309 = vld [vmem:[%s2305 + $0x18] sm:$0xff]
    %v2310 = vld [vmem:[%s2305 + $0x20] sm:$0xff]
    %v2311 = vld [vmem:[%s2305 + $0x28] sm:$0xff]
    %v2312 = vld [vmem:[%s2305 + $0x30] sm:$0xff]
    %v2313 = vld [vmem:[%s2305 + $0x38] sm:$0xff]
    %v2314 = vld [vmem:[%s2305 + $0x40] sm:$0xff]
    %v2315 = vld [vmem:[%s2305 + $0x48] sm:$0xff]
    %v2316 = vld [vmem:[%s2305 + $0x50] sm:$0xff]
    %v2317 = vld [vmem:[%s2305 + $0x58] sm:$0xff]
    %v2318 = vld [vmem:[%s2305 + $0x60] sm:$0xff]
    %v2319 = vld [vmem:[%s2305 + $0x68] sm:$0xff]
    %v2320 = vld [vmem:[%s2305 + $0x70] sm:$0xff]
    %v2321 = vld [vmem:[%s2305 + $0x78] sm:$0xff]
    %v2322 = vld [vmem:[%s2305 + $0x80] sm:$0xff]
    %v2323 = vld [vmem:[%s2305 + $0x88] sm:$0xff]
    %v2324 = vld [vmem:[%s2305 + $0x90] sm:$0xff]
    %v2325 = vld [vmem:[%s2305 + $0x98] sm:$0xff]
    %v2326 = vld [vmem:[%s2305 + $0xa0] sm:$0xff]
    %v2327 = vld [vmem:[%s2305 + $0xa8] sm:$0xff]
    %v2328 = vld [vmem:[%s2305 + $0xb0] sm:$0xff]
    %v2329 = vld [vmem:[%s2305 + $0xb8] sm:$0xff]
    %v2330 = vunpack.c.l.b16 %v2234
    %v2331 = vunpack.c.h.b16 %v2234
    %v2332 = vunpack.c.l.b16 %v2244
    %v2333 = vunpack.c.h.b16 %v2244
    %v2334 = vunpack.c.l.b16 %v2254
    %v2335 = vunpack.c.h.b16 %v2254
    %v2336 = vunpack.c.l.b16 %v2264
    %v2337 = vunpack.c.h.b16 %v2264
    %v2338 = vunpack.c.l.b16 %v2274
    %v2339 = vunpack.c.h.b16 %v2274
    %v2340 = vunpack.c.l.b16 %v2284
    %v2341 = vunpack.c.h.b16 %v2284
    %v2342 = vunpack.c.l.b16 %v2294
    %v2343 = vunpack.c.h.b16 %v2294
    %v2344 = vunpack.c.l.b16 %v2304
    %v2345 = vunpack.c.h.b16 %v2304
    %v2346 = vpack.c.b16 %v2332, %v2330
    %v2347 = vpack.c.b16 %v2333, %v2331
    %v2348 = vpack.c.b16 %v2336, %v2334
    %v2349 = vpack.c.b16 %v2337, %v2335
    %v2350 = vpack.c.b16 %v2340, %v2338
    %v2351 = vpack.c.b16 %v2341, %v2339
    %v2352 = vpack.c.b16 %v2344, %v2342
    %v2353 = vpack.c.b16 %v2345, %v2343
    %v2382 = vunpack.c.l.b16 %v2306
    %v2383 = vunpack.c.h.b16 %v2306
    %v2384 = vunpack.c.l.b16 %v2307
    %v2385 = vunpack.c.h.b16 %v2307
    %v2386 = vunpack.c.l.b16 %v2308
    %v2387 = vunpack.c.h.b16 %v2308
    %v2388 = vunpack.c.l.b16 %v2309
    %v2389 = vunpack.c.h.b16 %v2309
    %v2390 = vunpack.c.l.b16 %v2310
    %v2391 = vunpack.c.h.b16 %v2310
    %v2392 = vunpack.c.l.b16 %v2311
    %v2393 = vunpack.c.h.b16 %v2311
    %v2394 = vunpack.c.l.b16 %v2312
    %v2395 = vunpack.c.h.b16 %v2312
    %v2396 = vunpack.c.l.b16 %v2313
    %v2397 = vunpack.c.h.b16 %v2313
    %v2398 = vunpack.c.l.b16 %v2314
    %v2399 = vunpack.c.h.b16 %v2314
    %v2400 = vunpack.c.l.b16 %v2315
    %v2401 = vunpack.c.h.b16 %v2315
    %v2402 = vunpack.c.l.b16 %v2316
    %v2403 = vunpack.c.h.b16 %v2316
    %v2404 = vunpack.c.l.b16 %v2317
    %v2405 = vunpack.c.h.b16 %v2317
    %v2406 = vunpack.c.l.b16 %v2318
    %v2407 = vunpack.c.h.b16 %v2318
    %v2408 = vunpack.c.l.b16 %v2319
    %v2409 = vunpack.c.h.b16 %v2319
    %v2410 = vunpack.c.l.b16 %v2320
    %v2411 = vunpack.c.h.b16 %v2320
    %v2412 = vunpack.c.l.b16 %v2321
    %v2413 = vunpack.c.h.b16 %v2321
    %v2414 = vunpack.c.l.b16 %v2322
    %v2415 = vunpack.c.h.b16 %v2322
    %v2416 = vunpack.c.l.b16 %v2323
    %v2417 = vunpack.c.h.b16 %v2323
    %v2418 = vunpack.c.l.b16 %v2324
    %v2419 = vunpack.c.h.b16 %v2324
    %v2420 = vunpack.c.l.b16 %v2325
    %v2421 = vunpack.c.h.b16 %v2325
    %v2422 = vunpack.c.l.b16 %v2326
    %v2423 = vunpack.c.h.b16 %v2326
    %v2424 = vunpack.c.l.b16 %v2327
    %v2425 = vunpack.c.h.b16 %v2327
    %v2426 = vunpack.c.l.b16 %v2328
    %v2427 = vunpack.c.h.b16 %v2328
    %v2428 = vunpack.c.l.b16 %v2329
    %v2429 = vunpack.c.h.b16 %v2329
    %v2430 = vpack.c.b16 %v2384, %v2382
    %v2431 = vpack.c.b16 %v2385, %v2383
    %v2432 = vpack.c.b16 %v2388, %v2386
    %v2433 = vpack.c.b16 %v2389, %v2387
    %v2434 = vpack.c.b16 %v2392, %v2390
    %v2435 = vpack.c.b16 %v2393, %v2391
    %v2436 = vpack.c.b16 %v2396, %v2394
    %v2437 = vpack.c.b16 %v2397, %v2395
    %v2438 = vpack.c.b16 %v2400, %v2398
    %v2439 = vpack.c.b16 %v2401, %v2399
    %v2440 = vpack.c.b16 %v2404, %v2402
    %v2441 = vpack.c.b16 %v2405, %v2403
    %v2442 = vpack.c.b16 %v2408, %v2406
    %v2443 = vpack.c.b16 %v2409, %v2407
    %v2444 = vpack.c.b16 %v2412, %v2410
    %v2445 = vpack.c.b16 %v2413, %v2411
    %v2446 = vpack.c.b16 %v2416, %v2414
    %v2447 = vpack.c.b16 %v2417, %v2415
    %v2448 = vpack.c.b16 %v2420, %v2418
    %v2449 = vpack.c.b16 %v2421, %v2419
    %v2450 = vpack.c.b16 %v2424, %v2422
    %v2451 = vpack.c.b16 %v2425, %v2423
    %v2452 = vpack.c.b16 %v2428, %v2426
    %v2453 = vpack.c.b16 %v2429, %v2427
    %v2479 = vsel %vm1062, %v2347, 0
    %v2482 = vsel %vm1062, %v2349, 0
    %v2485 = vsel %vm1062, %v2351, 0
    %v2488 = vsel %vm1062, %v2353, 0
    %2490 = vmatprep.subr.bf16.mxu0 %v2431
    %2491 = vmatpush1.bf16.msra.mxu0 %v2430
    %2492 = vmatprep.subr.bf16.mxu0 %v2433
    %2493 = vmatpush1.bf16.msra.mxu0 %v2432
    %2494 = vmatprep.subr.bf16.mxu0 %v2435
    %2495 = vmatpush1.bf16.msra.mxu0 %v2434
    %2496 = vmatprep.subr.bf16.mxu0 %v2437
    %2497 = vmatpush1.bf16.msra.mxu0 %v2436
    %2498 = vmatprep.subr.bf16.mxu0 %v2439
    %2499 = vmatpush1.bf16.msra.mxu0 %v2438
    %2500 = vmatprep.subr.bf16.mxu0 %v2441
    %2501 = vmatpush1.bf16.msra.mxu0 %v2440
    %2502 = vmatprep.subr.bf16.mxu0 %v2443
    %2503 = vmatpush1.bf16.msra.mxu0 %v2442
    %2504 = vmatprep.subr.bf16.mxu0 %v2445
    %2505 = vmatpush1.bf16.msra.mxu0 %v2444
    %2506 = vmatprep.subr.bf16.mxu0 %v2447
    %2507 = vmatpush1.bf16.msra.mxu0 %v2446
    %2508 = vmatprep.subr.bf16.mxu0 %v2449
    %2509 = vmatpush1.bf16.msra.mxu0 %v2448
    %2510 = vmatprep.subr.bf16.mxu0 %v2451
    %2511 = vmatpush1.bf16.msra.mxu0 %v2450
    %2512 = vmatprep.subr.bf16.mxu0 %v2453
    %2513 = vmatpush1.bf16.msra.mxu0 %v2452
    %2514 = vmatprep.subr.bf16.mxu0 0
    %2515 = vmatpush1.bf16.msra.mxu0 0
    %2516 = vmatprep.subr.bf16.mxu0 0
    %2517 = vmatpush1.bf16.msra.mxu0 0
    %2518 = vmatprep.subr.bf16.mxu0 0
    %2519 = vmatpush1.bf16.msra.mxu0 0
    %2520 = vmatprep.subr.bf16.mxu0 0
    %2521 = vmatpush1.bf16.msra.mxu0 0
    %2522 = vmatprep.mubr.bf16.mxu0 %v2479
    %2523 = vmatmul.mubr.bf16.gmra.mrb[0].mxu0 %v2346
    %v2524 = vpop.f32.mrb[0].mxu0
    %v2525 = vadd.f32 0.0, %v2524
    %v2526 = vpop.f32.mrb[0].mxu0
    %v2527 = vadd.f32 0.0, %v2526
    %v2528 = vpop.f32.mrb[0].mxu0
    %v2529 = vadd.f32 0.0, %v2528
    %v2530 = vpop.f32.mrb[0].mxu0
    %v2531 = vadd.f32 0.0, %v2530
    %2532 = vmatprep.mubr.bf16.mxu0 %v2482
    %2533 = vmatmul.mubr.bf16.gmra.mrb[0].mxu0 %v2348
    %v2534 = vpop.f32.mrb[0].mxu0
    %v2535 = vadd.f32 0.0, %v2534
    %v2536 = vpop.f32.mrb[0].mxu0
    %v2537 = vadd.f32 0.0, %v2536
    %v2538 = vpop.f32.mrb[0].mxu0
    %v2539 = vadd.f32 0.0, %v2538
    %v2540 = vpop.f32.mrb[0].mxu0
    %v2541 = vadd.f32 0.0, %v2540
    %2542 = vmatprep.mubr.bf16.mxu0 %v2485
    %2543 = vmatmul.mubr.bf16.gmra.mrb[0].mxu0 %v2350
    %v2544 = vpop.f32.mrb[0].mxu0
    %v2545 = vadd.f32 0.0, %v2544
    %v2546 = vpop.f32.mrb[0].mxu0
    %v2547 = vadd.f32 0.0, %v2546
    %v2548 = vpop.f32.mrb[0].mxu0
    %v2549 = vadd.f32 0.0, %v2548
    %v2550 = vpop.f32.mrb[0].mxu0
    %v2551 = vadd.f32 0.0, %v2550
    %2552 = vmatprep.mubr.bf16.mxu0 %v2488
    %2553 = vmatmul.mubr.bf16.gmra.mrb[0].mxu0 %v2352
    %v2554 = vpop.f32.mrb[0].mxu0
    %v2555 = vadd.f32 0.0, %v2554
    %v2556 = vpop.f32.mrb[0].mxu0
    %v2557 = vadd.f32 0.0, %v2556
    %v2558 = vpop.f32.mrb[0].mxu0
    %v2559 = vadd.f32 0.0, %v2558
    %v2560 = vpop.f32.mrb[0].mxu0
    %v2561 = vadd.f32 0.0, %v2560
    %2562 = vdwg.mxu0
    %v2563 = vadd.f32 %v2206, %v2525
    %v2564 = vadd.f32 %v2207, %v2527
    %v2565 = vadd.f32 %v2208, %v2529
    %v2566 = vadd.f32 %v2209, %v2531
    %v2567 = vadd.f32 %v2210, %v2535
    %v2568 = vadd.f32 %v2211, %v2537
    %v2569 = vadd.f32 %v2212, %v2539
    %v2570 = vadd.f32 %v2213, %v2541
    %v2571 = vadd.f32 %v2214, %v2545
    %v2572 = vadd.f32 %v2215, %v2547
    %v2573 = vadd.f32 %v2216, %v2549
    %v2574 = vadd.f32 %v2217, %v2551
    %v2575 = vadd.f32 %v2218, %v2555
    %v2576 = vadd.f32 %v2219, %v2557
    %v2577 = vadd.f32 %v2220, %v2559
    %v2578 = vadd.f32 %v2221, %v2561
    %vm2579 = vcmask 1041408
    %vm2580 = vcmask 1045508
    %vm2581 = vmor %vm2579, %vm2580
    %v2582 = vrot.slane %v1307, 6
    %v2583 = vrot.slane %v2582, 4
    %v2584 = vrot.slane %v1308, 6
    %v2585 = vsel %vm2581, %v2583, %v2584
    %v2586 = vrot.slane %v1309, 6
    %v2587 = vrot.slane %v2586, 4
    %v2588 = vrot.slane %v1310, 6
    %v2589 = vsel %vm2581, %v2587, %v2588
    %v2590 = vrot.slane %v1311, 6
    %v2591 = vrot.slane %v2590, 4
    %v2592 = vrot.slane %v1312, 6
    %v2593 = vsel %vm2581, %v2591, %v2592
    %v2594 = vrot.slane %v1313, 6
    %v2595 = vrot.slane %v2594, 4
    %v2596 = vrot.slane %v1314, 6
    %v2597 = vsel %vm2581, %v2595, %v2596
    %v2598 = vrot.slane %v1315, 6
    %v2599 = vrot.slane %v2598, 4
    %v2600 = vrot.slane %v1316, 6
    %v2601 = vsel %vm2581, %v2599, %v2600
    %v2602 = vrot.slane %v1317, 6
    %v2603 = vrot.slane %v2602, 4
    %v2604 = vrot.slane %v1318, 6
    %v2605 = vsel %vm2581, %v2603, %v2604
    %v2606 = vrot.slane %v1319, 6
    %v2607 = vrot.slane %v2606, 4
    %v2608 = vrot.slane %v1320, 6
    %v2609 = vsel %vm2581, %v2607, %v2608
    %v2610 = vrot.slane %v1321, 6
    %v2611 = vrot.slane %v2610, 4
    %v2612 = vrot.slane %v1322, 6
    %v2613 = vsel %vm2581, %v2611, %v2612
    %s2614 = scalar_lea.vmem [#allocation5], 768
    %v2615 = vld [vmem:[%s2614] sm:$0xff]
    %v2616 = vld [vmem:[%s2614 + $0x8] sm:$0xff]
    %v2617 = vld [vmem:[%s2614 + $0x10] sm:$0xff]
    %v2618 = vld [vmem:[%s2614 + $0x18] sm:$0xff]
    %v2619 = vld [vmem:[%s2614 + $0x20] sm:$0xff]
    %v2620 = vld [vmem:[%s2614 + $0x28] sm:$0xff]
    %v2621 = vld [vmem:[%s2614 + $0x30] sm:$0xff]
    %v2622 = vld [vmem:[%s2614 + $0x38] sm:$0xff]
    %v2623 = vld [vmem:[%s2614 + $0x40] sm:$0xff]
    %v2624 = vld [vmem:[%s2614 + $0x48] sm:$0xff]
    %v2625 = vld [vmem:[%s2614 + $0x50] sm:$0xff]
    %v2626 = vld [vmem:[%s2614 + $0x58] sm:$0xff]
    %v2627 = vld [vmem:[%s2614 + $0x60] sm:$0xff]
    %v2628 = vld [vmem:[%s2614 + $0x68] sm:$0xff]
    %v2629 = vld [vmem:[%s2614 + $0x70] sm:$0xff]
    %v2630 = vld [vmem:[%s2614 + $0x78] sm:$0xff]
    %v2631 = vld [vmem:[%s2614 + $0x80] sm:$0xff]
    %v2632 = vld [vmem:[%s2614 + $0x88] sm:$0xff]
    %v2633 = vld [vmem:[%s2614 + $0x90] sm:$0xff]
    %v2634 = vld [vmem:[%s2614 + $0x98] sm:$0xff]
    %v2635 = vld [vmem:[%s2614 + $0xa0] sm:$0xff]
    %v2636 = vld [vmem:[%s2614 + $0xa8] sm:$0xff]
    %v2637 = vld [vmem:[%s2614 + $0xb0] sm:$0xff]
    %v2638 = vld [vmem:[%s2614 + $0xb8] sm:$0xff]
    %v2639 = vunpack.c.l.b16 %v2585
    %v2640 = vunpack.c.h.b16 %v2585
    %v2641 = vunpack.c.l.b16 %v2589
    %v2642 = vunpack.c.h.b16 %v2589
    %v2643 = vunpack.c.l.b16 %v2593
    %v2644 = vunpack.c.h.b16 %v2593
    %v2645 = vunpack.c.l.b16 %v2597
    %v2646 = vunpack.c.h.b16 %v2597
    %v2647 = vunpack.c.l.b16 %v2601
    %v2648 = vunpack.c.h.b16 %v2601
    %v2649 = vunpack.c.l.b16 %v2605
    %v2650 = vunpack.c.h.b16 %v2605
    %v2651 = vunpack.c.l.b16 %v2609
    %v2652 = vunpack.c.h.b16 %v2609
    %v2653 = vunpack.c.l.b16 %v2613
    %v2654 = vunpack.c.h.b16 %v2613
    %v2655 = vpack.c.b16 %v2641, %v2639
    %v2656 = vpack.c.b16 %v2642, %v2640
    %v2657 = vpack.c.b16 %v2645, %v2643
    %v2658 = vpack.c.b16 %v2646, %v2644
    %v2659 = vpack.c.b16 %v2649, %v2647
    %v2660 = vpack.c.b16 %v2650, %v2648
    %v2661 = vpack.c.b16 %v2653, %v2651
    %v2662 = vpack.c.b16 %v2654, %v2652
    %v2691 = vunpack.c.l.b16 %v2615
    %v2692 = vunpack.c.h.b16 %v2615
    %v2693 = vunpack.c.l.b16 %v2616
    %v2694 = vunpack.c.h.b16 %v2616
    %v2695 = vunpack.c.l.b16 %v2617
    %v2696 = vunpack.c.h.b16 %v2617
    %v2697 = vunpack.c.l.b16 %v2618
    %v2698 = vunpack.c.h.b16 %v2618
    %v2699 = vunpack.c.l.b16 %v2619
    %v2700 = vunpack.c.h.b16 %v2619
    %v2701 = vunpack.c.l.b16 %v2620
    %v2702 = vunpack.c.h.b16 %v2620
    %v2703 = vunpack.c.l.b16 %v2621
    %v2704 = vunpack.c.h.b16 %v2621
    %v2705 = vunpack.c.l.b16 %v2622
    %v2706 = vunpack.c.h.b16 %v2622
    %v2707 = vunpack.c.l.b16 %v2623
    %v2708 = vunpack.c.h.b16 %v2623
    %v2709 = vunpack.c.l.b16 %v2624
    %v2710 = vunpack.c.h.b16 %v2624
    %v2711 = vunpack.c.l.b16 %v2625
    %v2712 = vunpack.c.h.b16 %v2625
    %v2713 = vunpack.c.l.b16 %v2626
    %v2714 = vunpack.c.h.b16 %v2626
    %v2715 = vunpack.c.l.b16 %v2627
    %v2716 = vunpack.c.h.b16 %v2627
    %v2717 = vunpack.c.l.b16 %v2628
    %v2718 = vunpack.c.h.b16 %v2628
    %v2719 = vunpack.c.l.b16 %v2629
    %v2720 = vunpack.c.h.b16 %v2629
    %v2721 = vunpack.c.l.b16 %v2630
    %v2722 = vunpack.c.h.b16 %v2630
    %v2723 = vunpack.c.l.b16 %v2631
    %v2724 = vunpack.c.h.b16 %v2631
    %v2725 = vunpack.c.l.b16 %v2632
    %v2726 = vunpack.c.h.b16 %v2632
    %v2727 = vunpack.c.l.b16 %v2633
    %v2728 = vunpack.c.h.b16 %v2633
    %v2729 = vunpack.c.l.b16 %v2634
    %v2730 = vunpack.c.h.b16 %v2634
    %v2731 = vunpack.c.l.b16 %v2635
    %v2732 = vunpack.c.h.b16 %v2635
    %v2733 = vunpack.c.l.b16 %v2636
    %v2734 = vunpack.c.h.b16 %v2636
    %v2735 = vunpack.c.l.b16 %v2637
    %v2736 = vunpack.c.h.b16 %v2637
    %v2737 = vunpack.c.l.b16 %v2638
    %v2738 = vunpack.c.h.b16 %v2638
    %v2739 = vpack.c.b16 %v2693, %v2691
    %v2740 = vpack.c.b16 %v2694, %v2692
    %v2741 = vpack.c.b16 %v2697, %v2695
    %v2742 = vpack.c.b16 %v2698, %v2696
    %v2743 = vpack.c.b16 %v2701, %v2699
    %v2744 = vpack.c.b16 %v2702, %v2700
    %v2745 = vpack.c.b16 %v2705, %v2703
    %v2746 = vpack.c.b16 %v2706, %v2704
    %v2747 = vpack.c.b16 %v2709, %v2707
    %v2748 = vpack.c.b16 %v2710, %v2708
    %v2749 = vpack.c.b16 %v2713, %v2711
    %v2750 = vpack.c.b16 %v2714, %v2712
    %v2751 = vpack.c.b16 %v2717, %v2715
    %v2752 = vpack.c.b16 %v2718, %v2716
    %v2753 = vpack.c.b16 %v2721, %v2719
    %v2754 = vpack.c.b16 %v2722, %v2720
    %v2755 = vpack.c.b16 %v2725, %v2723
    %v2756 = vpack.c.b16 %v2726, %v2724
    %v2757 = vpack.c.b16 %v2729, %v2727
    %v2758 = vpack.c.b16 %v2730, %v2728
    %v2759 = vpack.c.b16 %v2733, %v2731
    %v2760 = vpack.c.b16 %v2734, %v2732
    %v2761 = vpack.c.b16 %v2737, %v2735
    %v2762 = vpack.c.b16 %v2738, %v2736
    %v2788 = vsel %vm1062, %v2656, 0
    %v2791 = vsel %vm1062, %v2658, 0
    %v2794 = vsel %vm1062, %v2660, 0
    %v2797 = vsel %vm1062, %v2662, 0
    %2799 = vmatprep.subr.bf16.mxu0 %v2740
    %2800 = vmatpush1.bf16.msra.mxu0 %v2739
    %2801 = vmatprep.subr.bf16.mxu0 %v2742
    %2802 = vmatpush1.bf16.msra.mxu0 %v2741
    %2803 = vmatprep.subr.bf16.mxu0 %v2744
    %2804 = vmatpush1.bf16.msra.mxu0 %v2743
    %2805 = vmatprep.subr.bf16.mxu0 %v2746
    %2806 = vmatpush1.bf16.msra.mxu0 %v2745
    %2807 = vmatprep.subr.bf16.mxu0 %v2748
    %2808 = vmatpush1.bf16.msra.mxu0 %v2747
    %2809 = vmatprep.subr.bf16.mxu0 %v2750
    %2810 = vmatpush1.bf16.msra.mxu0 %v2749
    %2811 = vmatprep.subr.bf16.mxu0 %v2752
    %2812 = vmatpush1.bf16.msra.mxu0 %v2751
    %2813 = vmatprep.subr.bf16.mxu0 %v2754
    %2814 = vmatpush1.bf16.msra.mxu0 %v2753
    %2815 = vmatprep.subr.bf16.mxu0 %v2756
    %2816 = vmatpush1.bf16.msra.mxu0 %v2755
    %2817 = vmatprep.subr.bf16.mxu0 %v2758
    %2818 = vmatpush1.bf16.msra.mxu0 %v2757
    %2819 = vmatprep.subr.bf16.mxu0 %v2760
    %2820 = vmatpush1.bf16.msra.mxu0 %v2759
    %2821 = vmatprep.subr.bf16.mxu0 %v2762
    %2822 = vmatpush1.bf16.msra.mxu0 %v2761
    %2823 = vmatprep.subr.bf16.mxu0 0
    %2824 = vmatpush1.bf16.msra.mxu0 0
    %2825 = vmatprep.subr.bf16.mxu0 0
    %2826 = vmatpush1.bf16.msra.mxu0 0
    %2827 = vmatprep.subr.bf16.mxu0 0
    %2828 = vmatpush1.bf16.msra.mxu0 0
    %2829 = vmatprep.subr.bf16.mxu0 0
    %2830 = vmatpush1.bf16.msra.mxu0 0
    %2831 = vmatprep.mubr.bf16.mxu0 %v2788
    %2832 = vmatmul.mubr.bf16.gmra.mrb[0].mxu0 %v2655
    %v2833 = vpop.f32.mrb[0].mxu0
    %v2834 = vadd.f32 0.0, %v2833
    %v2835 = vpop.f32.mrb[0].mxu0
    %v2836 = vadd.f32 0.0, %v2835
    %v2837 = vpop.f32.mrb[0].mxu0
    %v2838 = vadd.f32 0.0, %v2837
    %v2839 = vpop.f32.mrb[0].mxu0
    %v2840 = vadd.f32 0.0, %v2839
    %2841 = vmatprep.mubr.bf16.mxu0 %v2791
    %2842 = vmatmul.mubr.bf16.gmra.mrb[0].mxu0 %v2657
    %v2843 = vpop.f32.mrb[0].mxu0
    %v2844 = vadd.f32 0.0, %v2843
    %v2845 = vpop.f32.mrb[0].mxu0
    %v2846 = vadd.f32 0.0, %v2845
    %v2847 = vpop.f32.mrb[0].mxu0
    %v2848 = vadd.f32 0.0, %v2847
    %v2849 = vpop.f32.mrb[0].mxu0
    %v2850 = vadd.f32 0.0, %v2849
    %2851 = vmatprep.mubr.bf16.mxu0 %v2794
    %2852 = vmatmul.mubr.bf16.gmra.mrb[0].mxu0 %v2659
    %v2853 = vpop.f32.mrb[0].mxu0
    %v2854 = vadd.f32 0.0, %v2853
    %v2855 = vpop.f32.mrb[0].mxu0
    %v2856 = vadd.f32 0.0, %v2855
    %v2857 = vpop.f32.mrb[0].mxu0
    %v2858 = vadd.f32 0.0, %v2857
    %v2859 = vpop.f32.mrb[0].mxu0
    %v2860 = vadd.f32 0.0, %v2859
    %2861 = vmatprep.mubr.bf16.mxu0 %v2797
    %2862 = vmatmul.mubr.bf16.gmra.mrb[0].mxu0 %v2661
    %v2863 = vpop.f32.mrb[0].mxu0
    %v2864 = vadd.f32 0.0, %v2863
    %v2865 = vpop.f32.mrb[0].mxu0
    %v2866 = vadd.f32 0.0, %v2865
    %v2867 = vpop.f32.mrb[0].mxu0
    %v2868 = vadd.f32 0.0, %v2867
    %v2869 = vpop.f32.mrb[0].mxu0
    %v2870 = vadd.f32 0.0, %v2869
    %2871 = vdwg.mxu0
    %v2872 = vadd.f32 %v2563, %v2834
    %v2873 = vadd.f32 %v2564, %v2836
    %v2874 = vadd.f32 %v2565, %v2838
    %v2875 = vadd.f32 %v2566, %v2840
    %v2876 = vadd.f32 %v2567, %v2844
    %v2877 = vadd.f32 %v2568, %v2846
    %v2878 = vadd.f32 %v2569, %v2848
    %v2879 = vadd.f32 %v2570, %v2850
    %v2880 = vadd.f32 %v2571, %v2854
    %v2881 = vadd.f32 %v2572, %v2856
    %v2882 = vadd.f32 %v2573, %v2858
    %v2883 = vadd.f32 %v2574, %v2860
    %v2884 = vadd.f32 %v2575, %v2864
    %v2885 = vadd.f32 %v2576, %v2866
    %v2886 = vadd.f32 %v2577, %v2868
    %v2887 = vadd.f32 %v2578, %v2870
    %v2888 = vmax.f32 %v2872, %v2873
    %v2889 = vmax.f32 %v2874, %v2875
    %v2890 = vmax.f32 %v2876, %v2877
    %v2891 = vmax.f32 %v2878, %v2879
    %v2892 = vmax.f32 %v2880, %v2881
    %v2893 = vmax.f32 %v2882, %v2883
    %v2894 = vmax.f32 %v2884, %v2885
    %v2895 = vmax.f32 %v2886, %v2887
    %v2904 = vrot.slane %v2888, 1
    %v2905 = vrot.slane %v2889, 1
    %v2906 = vrot.slane %v2890, 1
    %v2907 = vrot.slane %v2891, 1
    %v2908 = vrot.slane %v2892, 1
    %v2909 = vrot.slane %v2893, 1
    %v2910 = vrot.slane %v2894, 1
    %v2911 = vrot.slane %v2895, 1
    %v2920 = vmax.f32 %v2888, %v2904
    %v2921 = vmax.f32 %v2889, %v2905
    %v2922 = vmax.f32 %v2890, %v2906
    %v2923 = vmax.f32 %v2891, %v2907
    %v2924 = vmax.f32 %v2892, %v2908
    %v2925 = vmax.f32 %v2893, %v2909
    %v2926 = vmax.f32 %v2894, %v2910
    %v2927 = vmax.f32 %v2895, %v2911
    %v2928 = vld [vmem:[%s4] sm:$0x1]
    %v2930 = vlaneseq
    %v2931 = vshrl.u32 %v2930, 7
    %v2932 = vsub.s32 0, %v2931
    %v2933 = vrot.slane %v2928, %v2932
    %v2935 = vadd.f32 %v2920, %v2933
    %v2936 = vadd.f32 %v2921, %v2933
    %v2937 = vadd.f32 %v2922, %v2933
    %v2938 = vadd.f32 %v2923, %v2933
    %v2939 = vadd.f32 %v2924, %v2933
    %v2940 = vadd.f32 %v2925, %v2933
    %v2941 = vadd.f32 %v2926, %v2933
    %v2942 = vadd.f32 %v2927, %v2933
    %v2943 = vmax.f32 %v2935, 0.0
    %v2944 = vmax.f32 %v2936, 0.0
    %v2945 = vmax.f32 %v2937, 0.0
    %v2946 = vmax.f32 %v2938, 0.0
    %v2947 = vmax.f32 %v2939, 0.0
    %v2948 = vmax.f32 %v2940, 0.0
    %v2949 = vmax.f32 %v2941, 0.0
    %v2950 = vmax.f32 %v2942, 0.0
    %v2951 = vpack.c.bf16 %v2943, %v2943
    %v2952 = vpack.c.bf16 %v2944, %v2944
    %v2953 = vpack.c.bf16 %v2945, %v2945
    %v2954 = vpack.c.bf16 %v2946, %v2946
    %v2955 = vpack.c.bf16 %v2947, %v2947
    %v2956 = vpack.c.bf16 %v2948, %v2948
    %v2957 = vpack.c.bf16 %v2949, %v2949
    %v2958 = vpack.c.bf16 %v2950, %v2950
    %v2959 = vld [vmem:[#allocation7] sm:$0xf]
    %v2960 = vld [vmem:[#allocation7 + $0x4] sm:$0xf]
    %v2961 = vld [vmem:[#allocation7 + $0x8] sm:$0xf]
    %v2962 = vld [vmem:[#allocation7 + $0xc] sm:$0xf]
    %v2963 = vld [vmem:[#allocation7 + $0x10] sm:$0xf]
    %v2964 = vld [vmem:[#allocation7 + $0x14] sm:$0xf]
    %v2965 = vld [vmem:[#allocation7 + $0x18] sm:$0xf]
    %v2966 = vld [vmem:[#allocation7 + $0x1c] sm:$0xf]
    %v2967 = vld [vmem:[#allocation7 + $0x20] sm:$0xf]
    %v2968 = vld [vmem:[#allocation7 + $0x24] sm:$0xf]
    %v2969 = vld [vmem:[#allocation7 + $0x28] sm:$0xf]
    %v2970 = vld [vmem:[#allocation7 + $0x2c] sm:$0xf]
    %v2971 = vld [vmem:[#allocation7 + $0x30] sm:$0xf]
    %v2972 = vld [vmem:[#allocation7 + $0x34] sm:$0xf]
    %v2973 = vld [vmem:[#allocation7 + $0x38] sm:$0xf]
    %v2974 = vld [vmem:[#allocation7 + $0x3c] sm:$0xf]
    %s2975 = scalar_lea.vmem [#allocation7], 64
    %v2976 = vld [vmem:[%s2975] sm:$0xf]
    %v2977 = vld [vmem:[%s2975 + $0x4] sm:$0xf]
    %v2978 = vld [vmem:[%s2975 + $0x8] sm:$0xf]
    %v2979 = vld [vmem:[%s2975 + $0xc] sm:$0xf]
    %v2980 = vld [vmem:[%s2975 + $0x10] sm:$0xf]
    %v2981 = vld [vmem:[%s2975 + $0x14] sm:$0xf]
    %v2982 = vld [vmem:[%s2975 + $0x18] sm:$0xf]
    %v2983 = vld [vmem:[%s2975 + $0x1c] sm:$0xf]
    %v2984 = vld [vmem:[%s2975 + $0x20] sm:$0xf]
    %v2985 = vld [vmem:[%s2975 + $0x24] sm:$0xf]
    %v2986 = vld [vmem:[%s2975 + $0x28] sm:$0xf]
    %v2987 = vld [vmem:[%s2975 + $0x2c] sm:$0xf]
    %v2988 = vld [vmem:[%s2975 + $0x30] sm:$0xf]
    %v2989 = vld [vmem:[%s2975 + $0x34] sm:$0xf]
    %v2990 = vld [vmem:[%s2975 + $0x38] sm:$0xf]
    %v2991 = vld [vmem:[%s2975 + $0x3c] sm:$0xf]
    %v3000 = vunpack.c.l.b16 %v2951
    %v3001 = vunpack.c.l.b16 %v2952
    %v3002 = vunpack.c.l.b16 %v2953
    %v3003 = vunpack.c.l.b16 %v2954
    %v3004 = vunpack.c.l.b16 %v2955
    %v3005 = vunpack.c.l.b16 %v2956
    %v3006 = vunpack.c.l.b16 %v2957
    %v3007 = vunpack.c.l.b16 %v2958
    %v3008 = vrot.slane %v3000, 2
    %v3009 = vrot.slane %v3001, 1
    %vm3010 = vcmask 1041409
    %v3011 = vsel %vm3010, %v3009, %v3008
    %vm3012 = vcmask 1042434
    %v3013 = vsel %vm3012, %v3002, %v3011
    %v3014 = vrot.slane %v3003, 7
    %vm3015 = vcmask 1043459
    %v3016 = vsel %vm3015, %v3014, %v3013
    %v3017 = vrot.slane %v3004, 6
    %vm3018 = vcmask 1044484
    %v3019 = vsel %vm3018, %v3017, %v3016
    %v3020 = vrot.slane %v3005, 5
    %vm3021 = vcmask 1045509
    %v3022 = vsel %vm3021, %v3020, %v3019
    %v3023 = vrot.slane %v3006, 4
    %vm3024 = vcmask 1046534
    %v3025 = vsel %vm3024, %v3023, %v3022
    %v3026 = vrot.slane %v3007, 3
    %vm3027 = vcmask 1047559
    %v3028 = vsel %vm3027, %v3026, %v3025
    %v3029 = vpack.c.b16 %v3028, %v3028
    %v3047 = vunpack.c.l.b16 %v2976
    %v3048 = vunpack.c.l.b16 %v2977
    %v3049 = vunpack.c.l.b16 %v2978
    %v3050 = vunpack.c.l.b16 %v2979
    %v3051 = vunpack.c.l.b16 %v2980
    %v3052 = vunpack.c.l.b16 %v2981
    %v3053 = vunpack.c.l.b16 %v2982
    %v3054 = vunpack.c.l.b16 %v2983
    %v3055 = vunpack.c.l.b16 %v2984
    %v3056 = vunpack.c.l.b16 %v2985
    %v3057 = vunpack.c.l.b16 %v2986
    %v3058 = vunpack.c.l.b16 %v2987
    %v3059 = vunpack.c.l.b16 %v2988
    %v3060 = vunpack.c.l.b16 %v2989
    %v3061 = vunpack.c.l.b16 %v2990
    %v3062 = vunpack.c.l.b16 %v2991
    %v3063 = vpack.c.b16 %v3048, %v3047
    %v3064 = vpack.c.b16 %v3050, %v3049
    %v3065 = vpack.c.b16 %v3052, %v3051
    %v3066 = vpack.c.b16 %v3054, %v3053
    %v3067 = vpack.c.b16 %v3056, %v3055
    %v3068 = vpack.c.b16 %v3058, %v3057
    %v3069 = vpack.c.b16 %v3060, %v3059
    %v3070 = vpack.c.b16 %v3062, %v3061
    %3079 = vmatprep.subr.bf16.mxu0 0
    %3080 = vmatpush1.bf16.msra.mxu0 %v3063
    %3081 = vmatprep.subr.bf16.mxu0 0
    %3082 = vmatpush1.bf16.msra.mxu0 %v3064
    %3083 = vmatprep.subr.bf16.mxu0 0
    %3084 = vmatpush1.bf16.msra.mxu0 %v3065
    %3085 = vmatprep.subr.bf16.mxu0 0
    %3086 = vmatpush1.bf16.msra.mxu0 %v3066
    %3087 = vmatprep.subr.bf16.mxu0 0
    %3088 = vmatpush1.bf16.msra.mxu0 %v3067
    %3089 = vmatprep.subr.bf16.mxu0 0
    %3090 = vmatpush1.bf16.msra.mxu0 %v3068
    %3091 = vmatprep.subr.bf16.mxu0 0
    %3092 = vmatpush1.bf16.msra.mxu0 %v3069
    %3093 = vmatprep.subr.bf16.mxu0 0
    %3094 = vmatpush1.bf16.msra.mxu0 %v3070
    %3095 = vmatprep.subr.bf16.mxu0 0
    %3096 = vmatpush1.bf16.msra.mxu0 0
    %3097 = vmatprep.subr.bf16.mxu0 0
    %3098 = vmatpush1.bf16.msra.mxu0 0
    %3099 = vmatprep.subr.bf16.mxu0 0
    %3100 = vmatpush1.bf16.msra.mxu0 0
    %3101 = vmatprep.subr.bf16.mxu0 0
    %3102 = vmatpush1.bf16.msra.mxu0 0
    %3103 = vmatprep.subr.bf16.mxu0 0
    %3104 = vmatpush1.bf16.msra.mxu0 0
    %3105 = vmatprep.subr.bf16.mxu0 0
    %3106 = vmatpush1.bf16.msra.mxu0 0
    %3107 = vmatprep.subr.bf16.mxu0 0
    %3108 = vmatpush1.bf16.msra.mxu0 0
    %3109 = vmatprep.subr.bf16.mxu0 0
    %3110 = vmatpush1.bf16.msra.mxu0 0
    %3111 = vmatprep.mubr.bf16.mxu0 0
    %3112 = vmatmul.mubr.bf16.gmra.mrb[0].mxu0 %v3029
    %v3113 = vpop.f32.mrb[0].mxu0
    %v3114 = vadd.f32 0.0, %v3113
    %v3115 = vpop.f32.mrb[0].mxu0
    %v3116 = vpop.f32.mrb[0].mxu0
    %v3117 = vpop.f32.mrb[0].mxu0
    %3118 = vdwg.mxu0
    %v3119 = vrot.slane %v3001, 7
    %v3120 = vsel %vm3010, %v3119, %v3000
    %v3121 = vrot.slane %v3002, 6
    %v3122 = vsel %vm3012, %v3121, %v3120
    %v3123 = vrot.slane %v3003, 5
    %v3124 = vsel %vm3015, %v3123, %v3122
    %v3125 = vrot.slane %v3004, 4
    %v3126 = vsel %vm3018, %v3125, %v3124
    %v3127 = vrot.slane %v3005, 3
    %v3128 = vsel %vm3021, %v3127, %v3126
    %v3129 = vrot.slane %v3006, 2
    %v3130 = vsel %vm3024, %v3129, %v3128
    %v3131 = vrot.slane %v3007, 1
    %v3132 = vsel %vm3027, %v3131, %v3130
    %v3133 = vpack.c.b16 %v3132, %v3132
    %v3151 = vunpack.c.l.b16 %v2959
    %v3152 = vunpack.c.l.b16 %v2960
    %v3153 = vunpack.c.l.b16 %v2961
    %v3154 = vunpack.c.l.b16 %v2962
    %v3155 = vunpack.c.l.b16 %v2963
    %v3156 = vunpack.c.l.b16 %v2964
    %v3157 = vunpack.c.l.b16 %v2965
    %v3158 = vunpack.c.l.b16 %v2966
    %v3159 = vunpack.c.l.b16 %v2967
    %v3160 = vunpack.c.l.b16 %v2968
    %v3161 = vunpack.c.l.b16 %v2969
    %v3162 = vunpack.c.l.b16 %v2970
    %v3163 = vunpack.c.l.b16 %v2971
    %v3164 = vunpack.c.l.b16 %v2972
    %v3165 = vunpack.c.l.b16 %v2973
    %v3166 = vunpack.c.l.b16 %v2974
    %v3167 = vpack.c.b16 %v3152, %v3151
    %v3168 = vpack.c.b16 %v3154, %v3153
    %v3169 = vpack.c.b16 %v3156, %v3155
    %v3170 = vpack.c.b16 %v3158, %v3157
    %v3171 = vpack.c.b16 %v3160, %v3159
    %v3172 = vpack.c.b16 %v3162, %v3161
    %v3173 = vpack.c.b16 %v3164, %v3163
    %v3174 = vpack.c.b16 %v3166, %v3165
    %3183 = vmatprep.subr.bf16.mxu0 0
    %3184 = vmatpush1.bf16.msra.mxu0 %v3167
    %3185 = vmatprep.subr.bf16.mxu0 0
    %3186 = vmatpush1.bf16.msra.mxu0 %v3168
    %3187 = vmatprep.subr.bf16.mxu0 0
    %3188 = vmatpush1.bf16.msra.mxu0 %v3169
    %3189 = vmatprep.subr.bf16.mxu0 0
    %3190 = vmatpush1.bf16.msra.mxu0 %v3170
    %3191 = vmatprep.subr.bf16.mxu0 0
    %3192 = vmatpush1.bf16.msra.mxu0 %v3171
    %3193 = vmatprep.subr.bf16.mxu0 0
    %3194 = vmatpush1.bf16.msra.mxu0 %v3172
    %3195 = vmatprep.subr.bf16.mxu0 0
    %3196 = vmatpush1.bf16.msra.mxu0 %v3173
    %3197 = vmatprep.subr.bf16.mxu0 0
    %3198 = vmatpush1.bf16.msra.mxu0 %v3174
    %3199 = vmatprep.subr.bf16.mxu0 0
    %3200 = vmatpush1.bf16.msra.mxu0 0
    %3201 = vmatprep.subr.bf16.mxu0 0
    %3202 = vmatpush1.bf16.msra.mxu0 0
    %3203 = vmatprep.subr.bf16.mxu0 0
    %3204 = vmatpush1.bf16.msra.mxu0 0
    %3205 = vmatprep.subr.bf16.mxu0 0
    %3206 = vmatpush1.bf16.msra.mxu0 0
    %3207 = vmatprep.subr.bf16.mxu0 0
    %3208 = vmatpush1.bf16.msra.mxu0 0
    %3209 = vmatprep.subr.bf16.mxu0 0
    %3210 = vmatpush1.bf16.msra.mxu0 0
    %3211 = vmatprep.subr.bf16.mxu0 0
    %3212 = vmatpush1.bf16.msra.mxu0 0
    %3213 = vmatprep.subr.bf16.mxu0 0
    %3214 = vmatpush1.bf16.msra.mxu0 0
    %3215 = vmatprep.mubr.bf16.mxu0 0
    %3216 = vmatmul.mubr.bf16.gmra.mrb[0].mxu0 %v3133
    %v3217 = vpop.f32.mrb[0].mxu0
    %v3218 = vadd.f32 %v3114, %v3217
    %v3219 = vpop.f32.mrb[0].mxu0
    %v3220 = vpop.f32.mrb[0].mxu0
    %v3221 = vpop.f32.mrb[0].mxu0
    %3222 = vdwg.mxu0
    %s3223 = scalar_lea.vmem [#allocation7], 128
    %v3224 = vld [vmem:[%s3223] sm:$0xf]
    %v3225 = vld [vmem:[%s3223 + $0x4] sm:$0xf]
    %v3226 = vld [vmem:[%s3223 + $0x8] sm:$0xf]
    %v3227 = vld [vmem:[%s3223 + $0xc] sm:$0xf]
    %v3228 = vld [vmem:[%s3223 + $0x10] sm:$0xf]
    %v3229 = vld [vmem:[%s3223 + $0x14] sm:$0xf]
    %v3230 = vld [vmem:[%s3223 + $0x18] sm:$0xf]
    %v3231 = vld [vmem:[%s3223 + $0x1c] sm:$0xf]
    %v3232 = vld [vmem:[%s3223 + $0x20] sm:$0xf]
    %v3233 = vld [vmem:[%s3223 + $0x24] sm:$0xf]
    %v3234 = vld [vmem:[%s3223 + $0x28] sm:$0xf]
    %v3235 = vld [vmem:[%s3223 + $0x2c] sm:$0xf]
    %v3236 = vld [vmem:[%s3223 + $0x30] sm:$0xf]
    %v3237 = vld [vmem:[%s3223 + $0x34] sm:$0xf]
    %v3238 = vld [vmem:[%s3223 + $0x38] sm:$0xf]
    %v3239 = vld [vmem:[%s3223 + $0x3c] sm:$0xf]
    %v3240 = vrot.slane %v3000, 4
    %v3241 = vrot.slane %v3001, 3
    %v3242 = vsel %vm3010, %v3241, %v3240
    %v3243 = vrot.slane %v3002, 2
    %v3244 = vsel %vm3012, %v3243, %v3242
    %v3245 = vrot.slane %v3003, 1
    %v3246 = vsel %vm3015, %v3245, %v3244
    %v3247 = vsel %vm3018, %v3004, %v3246
    %v3248 = vrot.slane %v3005, 7
    %v3249 = vsel %vm3021, %v3248, %v3247
    %v3250 = vrot.slane %v3006, 6
    %v3251 = vsel %vm3024, %v3250, %v3249
    %v3252 = vrot.slane %v3007, 5
    %v3253 = vsel %vm3027, %v3252, %v3251
    %v3254 = vpack.c.b16 %v3253, %v3253
    %v3272 = vunpack.c.l.b16 %v3224
    %v3273 = vunpack.c.l.b16 %v3225
    %v3274 = vunpack.c.l.b16 %v3226
    %v3275 = vunpack.c.l.b16 %v3227
    %v3276 = vunpack.c.l.b16 %v3228
    %v3277 = vunpack.c.l.b16 %v3229
    %v3278 = vunpack.c.l.b16 %v3230
    %v3279 = vunpack.c.l.b16 %v3231
    %v3280 = vunpack.c.l.b16 %v3232
    %v3281 = vunpack.c.l.b16 %v3233
    %v3282 = vunpack.c.l.b16 %v3234
    %v3283 = vunpack.c.l.b16 %v3235
    %v3284 = vunpack.c.l.b16 %v3236
    %v3285 = vunpack.c.l.b16 %v3237
    %v3286 = vunpack.c.l.b16 %v3238
    %v3287 = vunpack.c.l.b16 %v3239
    %v3288 = vpack.c.b16 %v3273, %v3272
    %v3289 = vpack.c.b16 %v3275, %v3274
    %v3290 = vpack.c.b16 %v3277, %v3276
    %v3291 = vpack.c.b16 %v3279, %v3278
    %v3292 = vpack.c.b16 %v3281, %v3280
    %v3293 = vpack.c.b16 %v3283, %v3282
    %v3294 = vpack.c.b16 %v3285, %v3284
    %v3295 = vpack.c.b16 %v3287, %v3286
    %3304 = vmatprep.subr.bf16.mxu0 0
    %3305 = vmatpush1.bf16.msra.mxu0 %v3288
    %3306 = vmatprep.subr.bf16.mxu0 0
    %3307 = vmatpush1.bf16.msra.mxu0 %v3289
    %3308 = vmatprep.subr.bf16.mxu0 0
    %3309 = vmatpush1.bf16.msra.mxu0 %v3290
    %3310 = vmatprep.subr.bf16.mxu0 0
    %3311 = vmatpush1.bf16.msra.mxu0 %v3291
    %3312 = vmatprep.subr.bf16.mxu0 0
    %3313 = vmatpush1.bf16.msra.mxu0 %v3292
    %3314 = vmatprep.subr.bf16.mxu0 0
    %3315 = vmatpush1.bf16.msra.mxu0 %v3293
    %3316 = vmatprep.subr.bf16.mxu0 0
    %3317 = vmatpush1.bf16.msra.mxu0 %v3294
    %3318 = vmatprep.subr.bf16.mxu0 0
    %3319 = vmatpush1.bf16.msra.mxu0 %v3295
    %3320 = vmatprep.subr.bf16.mxu0 0
    %3321 = vmatpush1.bf16.msra.mxu0 0
    %3322 = vmatprep.subr.bf16.mxu0 0
    %3323 = vmatpush1.bf16.msra.mxu0 0
    %3324 = vmatprep.subr.bf16.mxu0 0
    %3325 = vmatpush1.bf16.msra.mxu0 0
    %3326 = vmatprep.subr.bf16.mxu0 0
    %3327 = vmatpush1.bf16.msra.mxu0 0
    %3328 = vmatprep.subr.bf16.mxu0 0
    %3329 = vmatpush1.bf16.msra.mxu0 0
    %3330 = vmatprep.subr.bf16.mxu0 0
    %3331 = vmatpush1.bf16.msra.mxu0 0
    %3332 = vmatprep.subr.bf16.mxu0 0
    %3333 = vmatpush1.bf16.msra.mxu0 0
    %3334 = vmatprep.subr.bf16.mxu0 0
    %3335 = vmatpush1.bf16.msra.mxu0 0
    %3336 = vmatprep.mubr.bf16.mxu0 0
    %3337 = vmatmul.mubr.bf16.gmra.mrb[0].mxu0 %v3254
    %v3338 = vpop.f32.mrb[0].mxu0
    %v3339 = vadd.f32 0.0, %v3338
    %v3340 = vpop.f32.mrb[0].mxu0
    %v3341 = vpop.f32.mrb[0].mxu0
    %v3342 = vpop.f32.mrb[0].mxu0
    %3343 = vdwg.mxu0
    %v3344 = vadd.f32 %v3218, %v3339
    %s3345 = scalar_lea.vmem [#allocation7], 192
    %v3346 = vld [vmem:[%s3345] sm:$0xf]
    %v3347 = vld [vmem:[%s3345 + $0x4] sm:$0xf]
    %v3348 = vld [vmem:[%s3345 + $0x8] sm:$0xf]
    %v3349 = vld [vmem:[%s3345 + $0xc] sm:$0xf]
    %v3350 = vld [vmem:[%s3345 + $0x10] sm:$0xf]
    %v3351 = vld [vmem:[%s3345 + $0x14] sm:$0xf]
    %v3352 = vld [vmem:[%s3345 + $0x18] sm:$0xf]
    %v3353 = vld [vmem:[%s3345 + $0x1c] sm:$0xf]
    %v3354 = vld [vmem:[%s3345 + $0x20] sm:$0xf]
    %v3355 = vld [vmem:[%s3345 + $0x24] sm:$0xf]
    %v3356 = vld [vmem:[%s3345 + $0x28] sm:$0xf]
    %v3357 = vld [vmem:[%s3345 + $0x2c] sm:$0xf]
    %v3358 = vld [vmem:[%s3345 + $0x30] sm:$0xf]
    %v3359 = vld [vmem:[%s3345 + $0x34] sm:$0xf]
    %v3360 = vld [vmem:[%s3345 + $0x38] sm:$0xf]
    %v3361 = vld [vmem:[%s3345 + $0x3c] sm:$0xf]
    %v3362 = vrot.slane %v3000, 6
    %v3363 = vrot.slane %v3001, 5
    %v3364 = vsel %vm3010, %v3363, %v3362
    %v3365 = vrot.slane %v3002, 4
    %v3366 = vsel %vm3012, %v3365, %v3364
    %v3367 = vrot.slane %v3003, 3
    %v3368 = vsel %vm3015, %v3367, %v3366
    %v3369 = vrot.slane %v3004, 2
    %v3370 = vsel %vm3018, %v3369, %v3368
    %v3371 = vrot.slane %v3005, 1
    %v3372 = vsel %vm3021, %v3371, %v3370
    %v3373 = vsel %vm3024, %v3006, %v3372
    %v3374 = vrot.slane %v3007, 7
    %v3375 = vsel %vm3027, %v3374, %v3373
    %v3376 = vpack.c.b16 %v3375, %v3375
    %v3394 = vunpack.c.l.b16 %v3346
    %v3395 = vunpack.c.l.b16 %v3347
    %v3396 = vunpack.c.l.b16 %v3348
    %v3397 = vunpack.c.l.b16 %v3349
    %v3398 = vunpack.c.l.b16 %v3350
    %v3399 = vunpack.c.l.b16 %v3351
    %v3400 = vunpack.c.l.b16 %v3352
    %v3401 = vunpack.c.l.b16 %v3353
    %v3402 = vunpack.c.l.b16 %v3354
    %v3403 = vunpack.c.l.b16 %v3355
    %v3404 = vunpack.c.l.b16 %v3356
    %v3405 = vunpack.c.l.b16 %v3357
    %v3406 = vunpack.c.l.b16 %v3358
    %v3407 = vunpack.c.l.b16 %v3359
    %v3408 = vunpack.c.l.b16 %v3360
    %v3409 = vunpack.c.l.b16 %v3361
    %v3410 = vpack.c.b16 %v3395, %v3394
    %v3411 = vpack.c.b16 %v3397, %v3396
    %v3412 = vpack.c.b16 %v3399, %v3398
    %v3413 = vpack.c.b16 %v3401, %v3400
    %v3414 = vpack.c.b16 %v3403, %v3402
    %v3415 = vpack.c.b16 %v3405, %v3404
    %v3416 = vpack.c.b16 %v3407, %v3406
    %v3417 = vpack.c.b16 %v3409, %v3408
    %3426 = vmatprep.subr.bf16.mxu0 0
    %3427 = vmatpush1.bf16.msra.mxu0 %v3410
    %3428 = vmatprep.subr.bf16.mxu0 0
    %3429 = vmatpush1.bf16.msra.mxu0 %v3411
    %3430 = vmatprep.subr.bf16.mxu0 0
    %3431 = vmatpush1.bf16.msra.mxu0 %v3412
    %3432 = vmatprep.subr.bf16.mxu0 0
    %3433 = vmatpush1.bf16.msra.mxu0 %v3413
    %3434 = vmatprep.subr.bf16.mxu0 0
    %3435 = vmatpush1.bf16.msra.mxu0 %v3414
    %3436 = vmatprep.subr.bf16.mxu0 0
    %3437 = vmatpush1.bf16.msra.mxu0 %v3415
    %3438 = vmatprep.subr.bf16.mxu0 0
    %3439 = vmatpush1.bf16.msra.mxu0 %v3416
    %3440 = vmatprep.subr.bf16.mxu0 0
    %3441 = vmatpush1.bf16.msra.mxu0 %v3417
    %3442 = vmatprep.subr.bf16.mxu0 0
    %3443 = vmatpush1.bf16.msra.mxu0 0
    %3444 = vmatprep.subr.bf16.mxu0 0
    %3445 = vmatpush1.bf16.msra.mxu0 0
    %3446 = vmatprep.subr.bf16.mxu0 0
    %3447 = vmatpush1.bf16.msra.mxu0 0
    %3448 = vmatprep.subr.bf16.mxu0 0
    %3449 = vmatpush1.bf16.msra.mxu0 0
    %3450 = vmatprep.subr.bf16.mxu0 0
    %3451 = vmatpush1.bf16.msra.mxu0 0
    %3452 = vmatprep.subr.bf16.mxu0 0
    %3453 = vmatpush1.bf16.msra.mxu0 0
    %3454 = vmatprep.subr.bf16.mxu0 0
    %3455 = vmatpush1.bf16.msra.mxu0 0
    %3456 = vmatprep.subr.bf16.mxu0 0
    %3457 = vmatpush1.bf16.msra.mxu0 0
    %3458 = vmatprep.mubr.bf16.mxu0 0
    %3459 = vmatmul.mubr.bf16.gmra.mrb[0].mxu0 %v3376
    %v3460 = vpop.f32.mrb[0].mxu0
    %v3461 = vadd.f32 0.0, %v3460
    %v3462 = vpop.f32.mrb[0].mxu0
    %v3463 = vpop.f32.mrb[0].mxu0
    %v3464 = vpop.f32.mrb[0].mxu0
    %3465 = vdwg.mxu0
    %v3466 = vadd.f32 %v3344, %v3461
    %v3467 = vld [vmem:[%s6] sm:$0x1]
    %v3469 = vlaneseq
    %v3470 = vshrl.u32 %v3469, 7
    %v3471 = vsub.s32 0, %v3470
    %v3472 = vrot.slane %v3467, %v3471
    %v3474 = vadd.f32 %v3466, %v3472
    %3475 = vst [vmem:[#allocation8] sm:$0xff] %v3474
    // Predicated region
    $region42: #{tpu_custom_call.1} parent=1 // pred_check
      _
    $region43: #{tpu_custom_call.1} parent=1 // pred_check_branch
      %3477 = sbr.rel (0) target = $region45
    $region44: #{tpu_custom_call.1} parent=1 // pred_region
      %s3479 = ssub.s32 128, 128
      %3480 = vsyncadd [#allocation4], %s3479
      %s3482 = sshll.u32 [#allocation8], 4
      %s3483 = int_to_ptr.vmem [resolvable:$true] %s3482
      %3485 = dma.vmem_to_hbm [thread:$0]  %s3483, 128, %s7, [#allocation4]
    $region45: #{tpu_custom_call.1} parent=1 // pred_fallthru
      _
    // Predicated region
    $region46: #{tpu_custom_call.1} parent=1 // pred_check
      _
    $region47: #{tpu_custom_call.1} parent=1 // pred_check_branch
      %3487 = sbr.rel (0) target = $region49
    $region48: #{tpu_custom_call.1} parent=1 // pred_region
      %3488 = dma.done [#allocation4], 128
    $region49: #{tpu_custom_call.1} parent=1 // pred_fallthru
      _
    %3489 = vsyncpa [#allocation3], 1
    %3490 = vsyncpa [#allocation6], 1
    %3491 = vsyncpa [#allocation4], 1

</llo_original>
